<compile_context>
chip_gen: v6e
topology: v6e:2x2x1
jax: 0.10.0
libtpu: 0.0.40
codegen_flags: <defaults>
</compile_context>

<pallas_src>
import functools

import jax
import jax.numpy as jnp
from jax.experimental import pallas as pl
from jax.experimental.pallas import tpu as pltpu


def _round_up(x, m):
    return (x + m - 1) // m * m


# --------------------------------------------------------------------------- #
# Kernel
# --------------------------------------------------------------------------- #
def make_residual_net_kernel(n_blocks: int, n_layers: int, acc_row: int,
                             unroll_blocks: bool):
    """Builds a kernel with the per-block layer chain statically unrolled."""

    def kernel(s_ref, w_ref, out_ref):
        s = s_ref[...]                                    # (dim, TILE_B) f32

        def run_block(s, b):
            h = s
            # [Linear(inp,fc)+ReLU] then (n_fc-3) x [Linear(fc,fc)+ReLU];
            # biases are folded into the constant-1 column of each weight, so
            # the whole layer is a single bf16 MXU matmul + f32 ReLU.
            for l in range(n_layers - 1):
                h = jnp.dot(w_ref[b, l], h.astype(jnp.bfloat16),
                            preferred_element_type=jnp.float32)
                h = jnp.maximum(h, 0.0)                   # f32 VPU (v5e-safe)
            # Fused output1/output2: rows 0..inp-1 = x_bc, row `acc_row` = x_fc.
            tail = jnp.dot(w_ref[b, n_layers - 1], h.astype(jnp.bfloat16),
                           preferred_element_type=jnp.float32)
            return s - tail

        # Faithful reproduction of ResidualNeuralNet.forward: block 0 runs on
        # x, then blocks 0..n_blocks-2 run on the running residual.
        s = run_block(s, 0)
        if unroll_blocks:
            for i in range(n_blocks - 1):
                s = run_block(s, i)
        else:
            # Long chains: compact codegen; dynamic leading-axis ref indexing
            # is cheap and the chain is serial anyway.
            s = jax.lax.fori_loop(0, n_blocks - 1,
                                  lambda i, st: run_block(st, i), s)

        # Row `acc_row` holds -(sum of x_fc over all block invocations); this
        # is a lane-dense (1, TILE_B) unmasked store.
        out_ref[...] = (-s[acc_row:acc_row + 1, :]).astype(out_ref.dtype)

    return kernel


# --------------------------------------------------------------------------- #
# Wrapper
# --------------------------------------------------------------------------- #
@functools.partial(jax.jit, static_argnames=("tile_b", "single_buffer_weights"))
def _forward_impl(x, w_slab, *, tile_b: int, single_buffer_weights: bool):
    batch, inp_size = x.shape
    n_blocks, n_layers, dim, dim2 = w_slab.shape
    assert dim == dim2
    assert dim >= inp_size + 2, "slab must reserve accumulator + ones rows"
    assert tile_b % 128 == 0 and tile_b > 0, "tile_b must be a multiple of 128"
    # (inp_size as a multiple of 8 gives a sublane-dense initial state; it is
    #  not required for correctness.)

    acc_row, one_row = inp_size, inp_size + 1

    # --- batch tiling: big tiles, but keep >=2 grid steps for v7x's 2 TCs ----
    padded128 = _round_up(batch, 128)
    if padded128 >= 256:
        max_tile = max(128, (padded128 // 2) // 128 * 128)
    else:
        max_tile = 128
    tb = min(tile_b, max_tile)
    padded_batch = _round_up(batch, tb)
    grid = (padded_batch // tb,)

    # --- initial padded state, built once wrapper-side (no in-kernel concat) -
    s0 = jnp.zeros((dim, padded_batch), jnp.float32)
    s0 = s0.at[:inp_size, :batch].set(x.T.astype(jnp.float32))
    s0 = s0.at[one_row, :].set(1.0)          # constant-1 row drives the biases

    # --- specs ---------------------------------------------------------------
    w_shape = (n_blocks, n_layers, dim, dim)
    if single_buffer_weights:
        # Constant index_map -> the block never changes; one buffer suffices.
        w_spec = pl.BlockSpec(w_shape, lambda i: (0, 0, 0, 0),
                              pipeline_mode=pl.Buffered(1))
        w_bufs = 1
    else:
        w_spec = pl.BlockSpec(w_shape, lambda i: (0, 0, 0, 0))
        w_bufs = 2

    # --- VMEM budget from the actual (lane-padded) footprint -----------------
    w_bytes = n_blocks * n_layers * _round_up(dim, 8) * _round_up(dim, 128) * 2
    s_tile_bytes = _round_up(dim, 8) * tb * 4
    out_tile_bytes = 8 * tb * 4
    live_bytes = 4 * s_tile_bytes             # s, h, tail + bf16 casts (rough)
    vmem_need = (w_bufs * w_bytes + 2 * s_tile_bytes + 2 * out_tile_bytes
                 + live_bytes + (4 << 20))
    try:
        vmem_cap = int(pltpu.get_tpu_info().vmem_capacity_bytes)
    except Exception:
        vmem_cap = 64 << 20                    # v7x per-TC physical (smallest)
    vmem_limit = int(min(max(vmem_need, 16 << 20), int(vmem_cap * 0.85)))

    kernel = make_residual_net_kernel(
        n_blocks, n_layers, acc_row,
        unroll_blocks=(n_blocks * n_layers <= 32))

    # Advisory scheduling hint (matmul FLOPs dominate; HBM traffic tiny).
    flops = int(2 * n_blocks * n_layers * dim * dim * padded_batch)
    bytes_accessed = int(4 * (dim + 1) * padded_batch
                         + w_slab.size * w_slab.dtype.itemsize)

    out_t = pl.pallas_call(
        kernel,
        out_shape=jax.ShapeDtypeStruct((1, padded_batch), x.dtype),
        grid=grid,
        in_specs=[
            pl.BlockSpec((dim, tb), lambda i: (0, i)),   # batch-tiled state
            w_spec,                                      # resident weight slab
        ],
        out_specs=pl.BlockSpec((1, tb), lambda i: (0, i)),
        compiler_params=pltpu.CompilerParams(
            dimension_semantics=("parallel",),           # v7x: shard over 2 TCs
            vmem_limit_bytes=vmem_limit,
        ),
        cost_estimate=pl.CostEstimate(
            flops=flops, transcendentals=0, bytes_accessed=bytes_accessed),
    )(s0, w_slab)

    return out_t[:, :batch].T                             # (batch, 1)


def residual_net_forward(x, w_slab, *, tile_b: int = 512):
    """x: (batch, inp_size) -> (batch, 1), matching the PyTorch module."""
    try:
        return _forward_impl(x, w_slab, tile_b=tile_b, single_buffer_weights=True)
    except Exception:
        # pipeline_mode=pl.Buffered(1) not supported on this jax build; fall
        # back to the default double-buffered resident slab (slab is tiny).
        return _forward_impl(x, w_slab, tile_b=tile_b, single_buffer_weights=False)


# --------------------------------------------------------------------------- #
# Parameters (PyTorch layout) + packing into the single bias-folded slab
# --------------------------------------------------------------------------- #
def init_params(key, inp_size, n_fc, fc_size, n_blocks, dtype=jnp.float32):
    """PyTorch-style uniform(-1/sqrt(fan_in), 1/sqrt(fan_in)); weights (out, in)."""
    n_hidden_mid = n_fc - 3      # number of Linear(fc, fc) layers in `layers`
    assert n_hidden_mid >= 0

    keys = jax.random.split(key, 8)

    def u(k, shape, fan_in):
        bound = 1.0 / float(fan_in) ** 0.5
        return jax.random.uniform(k, shape, dtype, minval=-bound, maxval=bound)

    w0 = u(keys[0], (n_blocks, fc_size, inp_size), inp_size)
    b0 = u(keys[1], (n_blocks, fc_size), inp_size)
    wh = u(keys[2], (n_blocks, n_hidden_mid, fc_size, fc_size), fc_size)
    bh = u(keys[3], (n_blocks, n_hidden_mid, fc_size), fc_size)
    wbc = u(keys[4], (n_blocks, inp_size, fc_size), fc_size)   # output1
    bbc = u(keys[5], (n_blocks, inp_size), fc_size)
    wfc = u(keys[6], (n_blocks, 1, fc_size), fc_size)          # output2
    bfc = u(keys[7], (n_blocks, 1), fc_size)
    return (w0, b0, wh, bh, wbc, bbc, wfc, bfc)


def pack_params(params, inp_size, fc_size, dtype=jnp.bfloat16):
    """Pack the 8 PyTorch-layout arrays into one augmented, bias-folded slab.

    Shape: (n_blocks, n_layers, dim, dim), dim = round_up(max(fc+1, inp+2), 8).
    NOTE: at production sizes prefer fc (hence dim) a multiple of 128 so the
    resident weight tiles are lane-dense in VMEM (dim < 128 lane-pads to 128).
    """
    w0, b0, wh, bh, wbc, bbc, wfc, bfc = params
    n_blocks = w0.shape[0]
    n_hidden_mid = wh.shape[1]
    n_layers = n_hidden_mid + 2
    acc_row = inp_size          # state row accumulating -(sum x_fc)
    one_s = inp_size + 1        # constant-1 row of the state
    one_h = fc_size             # constant-1 row of the hidden activations
    dim = _round_up(max(fc_size + 1, inp_size + 2), 8)

    w = jnp.zeros((n_blocks, n_layers, dim, dim), jnp.float32)
    # Layer 0: Linear(inp, fc); bias folded via the state's ones column.
    # Column `acc_row` stays zero so the accumulator never feeds compute.
    w = w.at[:, 0, :fc_size, :inp_size].set(w0)
    w = w.at[:, 0, :fc_size, one_s].set(b0)
    w = w.at[:, 0, one_h, one_s].set(1.0)       # propagate ones row into h
    # Hidden Linear(fc, fc) layers; bias via the hidden ones column.
    for j in range(n_hidden_mid):
        l = 1 + j
        w = w.at[:, l, :fc_size, :fc_size].set(wh[:, j])
        w = w.at[:, l, :fc_size, one_h].set(bh[:, j])
        w = w.at[:, l, one_h, one_h].set(1.0)   # ones row self-propagates
    # Fused tail: output1 -> rows 0..inp-1, output2 -> row `acc_row`.
    # Row `one_s` stays zero so the state's ones row survives `s -= tail`.
    lt = n_layers - 1
    w = w.at[:, lt, :inp_size, :fc_size].set(wbc)
    w = w.at[:, lt, :inp_size, one_h].set(bbc)
    w = w.at[:, lt, acc_row, :fc_size].set(wfc[:, 0, :])
    w = w.at[:, lt, acc_row, one_h].set(bfc[:, 0])
    return w.astype(dtype)


# --------------------------------------------------------------------------- #
# Pure-JAX reference mirroring the PyTorch forward (for verification)
# --------------------------------------------------------------------------- #
def ref_forward(x, params):
    w0, b0, wh, bh, wbc, bbc, wfc, bfc = params
    n_blocks = w0.shape[0]
    n_hidden_mid = wh.shape[1]

    def block(cur, b):
        h = jnp.maximum(cur @ w0[b].T + b0[b], 0.0)
        for j in range(n_hidden_mid):
            h = jnp.maximum(h @ wh[b, j].T + bh[b, j], 0.0)
        x_bc = h @ wbc[b].T + bbc[b]
        x_fc = h @ wfc[b].T + bfc[b]
        return x_bc, x_fc

    x_bc, x_fc = block(x, 0)
    cur = x - x_bc
    out = x_fc
    for i in range(n_blocks - 1):
        x_bc, x_fc = block(cur, i)
        cur = cur - x_bc
        out = out + x_fc
    return out


if __name__ == "__main__":
    # Small, forward-consistent shapes; batch chosen so the default 512-lane
    # tile is exercised with a 2-step grid (pipeline + both v7x TensorCores).
    batch, inp_size, n_fc, fc_size, n_blocks = 1024, 16, 4, 32, 3

    key = jax.random.PRNGKey(0)
    kx, kp = jax.random.split(key)
    x = jax.random.normal(kx, (batch, inp_size), dtype=jnp.float32)
    params = init_params(kp, inp_size, n_fc, fc_size, n_blocks)
    w_slab = pack_params(params, inp_size, fc_size)

    out = jax.block_until_ready(residual_net_forward(x, w_slab))
    ref = jax.block_until_ready(ref_forward(x, params))

    assert out.shape == (batch, 1), out.shape
    # bf16 MXU operands (f32 accumulation) -> tolerance looser than pure f32.
    max_err = float(jnp.max(jnp.abs(out - ref)))
    assert jnp.allclose(out, ref, atol=5e-2, rtol=5e-2), max_err
    print("KERNEL_OK")
</pallas_src>

<mosaic_0001>
module attributes {stable_mosaic.version = 11 : i64} {
  func.func @kernel(%arg0: i32, %arg1: memref<40x512xf32, #tpu.memory_space<vmem>>, %arg2: memref<3x3x40x40xbf16, #tpu.memory_space<vmem>>, %arg3: memref<1x512xf32, #tpu.memory_space<vmem>>) attributes {dimension_semantics = [#tpu.dimension_semantics<parallel>], iteration_bounds = array<i64: 2>, scalar_prefetch = 0 : i64, scratch_operands = 0 : i64, tpu.core_type = #tpu.core_type<tc>, window_params = [{transform_indices = @transform_0, window_bounds = array<i64: 40, 512>}, {pipeline_mode = #tpu.pipeline_mode<synchronous>, transform_indices = @transform_1, window_bounds = array<i64: 3, 3, 40, 40>}, {transform_indices = @transform_2, window_bounds = array<i64: 1, 512>}]} {
    %c0 = arith.constant 0 : index
    %c0_0 = arith.constant 0 : index
    %0 = vector.load %arg1[%c0, %c0_0] : memref<40x512xf32, #tpu.memory_space<vmem>>, vector<40x512xf32>
    %c0_1 = arith.constant 0 : index
    %c0_2 = arith.constant 0 : index
    %c0_3 = arith.constant 0 : index
    %c0_4 = arith.constant 0 : index
    %1 = vector.load %arg2[%c0_1, %c0_2, %c0_3, %c0_4] : memref<3x3x40x40xbf16, #tpu.memory_space<vmem>>, vector<1x1x40x40xbf16>
    %2 = vector.shape_cast %1 : vector<1x1x40x40xbf16> to vector<40x40xbf16>
    %3 = arith.truncf %0 : vector<40x512xf32> to vector<40x512xbf16>
    %cst = arith.constant dense<0.000000e+00> : vector<40x512xf32>
    %4 = tpu.matmul %2, %3, %cst {dimension_numbers = #tpu.dot_dimension_numbers<[1], [0], [0], [1], [0, 0, 1, 1], [], []>} : vector<40x40xbf16>, vector<40x512xbf16>, vector<40x512xf32> -> vector<40x512xf32>
    %cst_5 = arith.constant 0.000000e+00 : f32
    %5 = vector.broadcast %cst_5 : f32 to vector<40x512xf32>
    %6 = arith.maximumf %4, %5 : vector<40x512xf32>
    %c0_6 = arith.constant 0 : index
    %c1 = arith.constant 1 : index
    %c0_7 = arith.constant 0 : index
    %c0_8 = arith.constant 0 : index
    %7 = vector.load %arg2[%c0_6, %c1, %c0_7, %c0_8] : memref<3x3x40x40xbf16, #tpu.memory_space<vmem>>, vector<1x1x40x40xbf16>
    %8 = vector.shape_cast %7 : vector<1x1x40x40xbf16> to vector<40x40xbf16>
    %9 = arith.truncf %6 : vector<40x512xf32> to vector<40x512xbf16>
    %cst_9 = arith.constant dense<0.000000e+00> : vector<40x512xf32>
    %10 = tpu.matmul %8, %9, %cst_9 {dimension_numbers = #tpu.dot_dimension_numbers<[1], [0], [0], [1], [0, 0, 1, 1], [], []>} : vector<40x40xbf16>, vector<40x512xbf16>, vector<40x512xf32> -> vector<40x512xf32>
    %cst_10 = arith.constant 0.000000e+00 : f32
    %11 = vector.broadcast %cst_10 : f32 to vector<40x512xf32>
    %12 = arith.maximumf %10, %11 : vector<40x512xf32>
    %c0_11 = arith.constant 0 : index
    %c2 = arith.constant 2 : index
    %c0_12 = arith.constant 0 : index
    %c0_13 = arith.constant 0 : index
    %13 = vector.load %arg2[%c0_11, %c2, %c0_12, %c0_13] : memref<3x3x40x40xbf16, #tpu.memory_space<vmem>>, vector<1x1x40x40xbf16>
    %14 = vector.shape_cast %13 : vector<1x1x40x40xbf16> to vector<40x40xbf16>
    %15 = arith.truncf %12 : vector<40x512xf32> to vector<40x512xbf16>
    %cst_14 = arith.constant dense<0.000000e+00> : vector<40x512xf32>
    %16 = tpu.matmul %14, %15, %cst_14 {dimension_numbers = #tpu.dot_dimension_numbers<[1], [0], [0], [1], [0, 0, 1, 1], [], []>} : vector<40x40xbf16>, vector<40x512xbf16>, vector<40x512xf32> -> vector<40x512xf32>
    %17 = arith.subf %0, %16 : vector<40x512xf32>
    %c0_15 = arith.constant 0 : index
    %c0_16 = arith.constant 0 : index
    %c0_17 = arith.constant 0 : index
    %c0_18 = arith.constant 0 : index
    %18 = vector.load %arg2[%c0_15, %c0_16, %c0_17, %c0_18] : memref<3x3x40x40xbf16, #tpu.memory_space<vmem>>, vector<1x1x40x40xbf16>
    %19 = vector.shape_cast %18 : vector<1x1x40x40xbf16> to vector<40x40xbf16>
    %20 = arith.truncf %17 : vector<40x512xf32> to vector<40x512xbf16>
    %cst_19 = arith.constant dense<0.000000e+00> : vector<40x512xf32>
    %21 = tpu.matmul %19, %20, %cst_19 {dimension_numbers = #tpu.dot_dimension_numbers<[1], [0], [0], [1], [0, 0, 1, 1], [], []>} : vector<40x40xbf16>, vector<40x512xbf16>, vector<40x512xf32> -> vector<40x512xf32>
    %cst_20 = arith.constant 0.000000e+00 : f32
    %22 = vector.broadcast %cst_20 : f32 to vector<40x512xf32>
    %23 = arith.maximumf %21, %22 : vector<40x512xf32>
    %c0_21 = arith.constant 0 : index
    %c1_22 = arith.constant 1 : index
    %c0_23 = arith.constant 0 : index
    %c0_24 = arith.constant 0 : index
    %24 = vector.load %arg2[%c0_21, %c1_22, %c0_23, %c0_24] : memref<3x3x40x40xbf16, #tpu.memory_space<vmem>>, vector<1x1x40x40xbf16>
    %25 = vector.shape_cast %24 : vector<1x1x40x40xbf16> to vector<40x40xbf16>
    %26 = arith.truncf %23 : vector<40x512xf32> to vector<40x512xbf16>
    %cst_25 = arith.constant dense<0.000000e+00> : vector<40x512xf32>
    %27 = tpu.matmul %25, %26, %cst_25 {dimension_numbers = #tpu.dot_dimension_numbers<[1], [0], [0], [1], [0, 0, 1, 1], [], []>} : vector<40x40xbf16>, vector<40x512xbf16>, vector<40x512xf32> -> vector<40x512xf32>
    %cst_26 = arith.constant 0.000000e+00 : f32
    %28 = vector.broadcast %cst_26 : f32 to vector<40x512xf32>
    %29 = arith.maximumf %27, %28 : vector<40x512xf32>
    %c0_27 = arith.constant 0 : index
    %c2_28 = arith.constant 2 : index
    %c0_29 = arith.constant 0 : index
    %c0_30 = arith.constant 0 : index
    %30 = vector.load %arg2[%c0_27, %c2_28, %c0_29, %c0_30] : memref<3x3x40x40xbf16, #tpu.memory_space<vmem>>, vector<1x1x40x40xbf16>
    %31 = vector.shape_cast %30 : vector<1x1x40x40xbf16> to vector<40x40xbf16>
    %32 = arith.truncf %29 : vector<40x512xf32> to vector<40x512xbf16>
    %cst_31 = arith.constant dense<0.000000e+00> : vector<40x512xf32>
    %33 = tpu.matmul %31, %32, %cst_31 {dimension_numbers = #tpu.dot_dimension_numbers<[1], [0], [0], [1], [0, 0, 1, 1], [], []>} : vector<40x40xbf16>, vector<40x512xbf16>, vector<40x512xf32> -> vector<40x512xf32>
    %34 = arith.subf %17, %33 : vector<40x512xf32>
    %c1_32 = arith.constant 1 : index
    %c0_33 = arith.constant 0 : index
    %c0_34 = arith.constant 0 : index
    %c0_35 = arith.constant 0 : index
    %35 = vector.load %arg2[%c1_32, %c0_33, %c0_34, %c0_35] : memref<3x3x40x40xbf16, #tpu.memory_space<vmem>>, vector<1x1x40x40xbf16>
    %36 = vector.shape_cast %35 : vector<1x1x40x40xbf16> to vector<40x40xbf16>
    %37 = arith.truncf %34 : vector<40x512xf32> to vector<40x512xbf16>
    %cst_36 = arith.constant dense<0.000000e+00> : vector<40x512xf32>
    %38 = tpu.matmul %36, %37, %cst_36 {dimension_numbers = #tpu.dot_dimension_numbers<[1], [0], [0], [1], [0, 0, 1, 1], [], []>} : vector<40x40xbf16>, vector<40x512xbf16>, vector<40x512xf32> -> vector<40x512xf32>
    %cst_37 = arith.constant 0.000000e+00 : f32
    %39 = vector.broadcast %cst_37 : f32 to vector<40x512xf32>
    %40 = arith.maximumf %38, %39 : vector<40x512xf32>
    %c1_38 = arith.constant 1 : index
    %c1_39 = arith.constant 1 : index
    %c0_40 = arith.constant 0 : index
    %c0_41 = arith.constant 0 : index
    %41 = vector.load %arg2[%c1_38, %c1_39, %c0_40, %c0_41] : memref<3x3x40x40xbf16, #tpu.memory_space<vmem>>, vector<1x1x40x40xbf16>
    %42 = vector.shape_cast %41 : vector<1x1x40x40xbf16> to vector<40x40xbf16>
    %43 = arith.truncf %40 : vector<40x512xf32> to vector<40x512xbf16>
    %cst_42 = arith.constant dense<0.000000e+00> : vector<40x512xf32>
    %44 = tpu.matmul %42, %43, %cst_42 {dimension_numbers = #tpu.dot_dimension_numbers<[1], [0], [0], [1], [0, 0, 1, 1], [], []>} : vector<40x40xbf16>, vector<40x512xbf16>, vector<40x512xf32> -> vector<40x512xf32>
    %cst_43 = arith.constant 0.000000e+00 : f32
    %45 = vector.broadcast %cst_43 : f32 to vector<40x512xf32>
    %46 = arith.maximumf %44, %45 : vector<40x512xf32>
    %c1_44 = arith.constant 1 : index
    %c2_45 = arith.constant 2 : index
    %c0_46 = arith.constant 0 : index
    %c0_47 = arith.constant 0 : index
    %47 = vector.load %arg2[%c1_44, %c2_45, %c0_46, %c0_47] : memref<3x3x40x40xbf16, #tpu.memory_space<vmem>>, vector<1x1x40x40xbf16>
    %48 = vector.shape_cast %47 : vector<1x1x40x40xbf16> to vector<40x40xbf16>
    %49 = arith.truncf %46 : vector<40x512xf32> to vector<40x512xbf16>
    %cst_48 = arith.constant dense<0.000000e+00> : vector<40x512xf32>
    %50 = tpu.matmul %48, %49, %cst_48 {dimension_numbers = #tpu.dot_dimension_numbers<[1], [0], [0], [1], [0, 0, 1, 1], [], []>} : vector<40x40xbf16>, vector<40x512xbf16>, vector<40x512xf32> -> vector<40x512xf32>
    %51 = arith.subf %34, %50 : vector<40x512xf32>
    %52 = vector.extract_strided_slice %51 {offsets = [16, 0], sizes = [1, 512], strides = [1, 1]} : vector<40x512xf32> to vector<1x512xf32>
    %cst_49 = arith.constant 0.000000e+00 : f32
    %53 = vector.broadcast %cst_49 : f32 to vector<1x512xf32>
    %54 = arith.subf %53, %52 : vector<1x512xf32>
    %c0_50 = arith.constant 0 : index
    %c0_51 = arith.constant 0 : index
    %55 = vector.load %arg3[%c0_50, %c0_51] : memref<1x512xf32, #tpu.memory_space<vmem>>, vector<1x512xf32>
    tpu.vector_store %arg3[%c0_50, %c0_51], %54 {strides = array<i32>} : memref<1x512xf32, #tpu.memory_space<vmem>>, vector<1x512xf32>,
    return
  }
  func.func @transform_0(%arg0: i32) -> (i32, i32) {
    %c0_i32 = arith.constant 0 : i32
    %c0_i32_0 = arith.constant 0 : i32
    return %c0_i32, %arg0 : i32, i32
  }
  func.func @transform_1(%arg0: i32) -> (i32, i32, i32, i32) {
    %c0_i32 = arith.constant 0 : i32
    %c0_i32_0 = arith.constant 0 : i32
    %c0_i32_1 = arith.constant 0 : i32
    %c0_i32_2 = arith.constant 0 : i32
    %c0_i32_3 = arith.constant 0 : i32
    return %c0_i32, %c0_i32_0, %c0_i32_1, %c0_i32_2 : i32, i32, i32, i32
  }
  func.func @transform_2(%arg0: i32) -> (i32, i32) {
    %c0_i32 = arith.constant 0 : i32
    %c0_i32_0 = arith.constant 0 : i32
    return %c0_i32, %arg0 : i32, i32
  }
}

module attributes {stable_mosaic.version = 11 : i64} {
  func.func @kernel(%arg0: i32, %arg1: memref<40x512xf32, #tpu.memory_space<vmem>>, %arg2: memref<3x3x40x40xbf16, #tpu.memory_space<vmem>>, %arg3: memref<1x512xf32, #tpu.memory_space<vmem>>) attributes {dimension_semantics = [#tpu.dimension_semantics<parallel>], iteration_bounds = array<i64: 2>, scalar_prefetch = 0 : i64, scratch_operands = 0 : i64, tpu.core_type = #tpu.core_type<tc>, window_params = [{transform_indices = @transform_0, window_bounds = array<i64: 40, 512>}, {pipeline_mode = #tpu.pipeline_mode<synchronous>, transform_indices = @transform_1, window_bounds = array<i64: 3, 3, 40, 40>}, {transform_indices = @transform_2, window_bounds = array<i64: 1, 512>}]} {
    %c0 = arith.constant 0 : index
    %c0_0 = arith.constant 0 : index
    %0 = vector.load %arg1[%c0, %c0_0] : memref<40x512xf32, #tpu.memory_space<vmem>>, vector<40x512xf32>
    %c0_1 = arith.constant 0 : index
    %c0_2 = arith.constant 0 : index
    %c0_3 = arith.constant 0 : index
    %c0_4 = arith.constant 0 : index
    %1 = vector.load %arg2[%c0_1, %c0_2, %c0_3, %c0_4] : memref<3x3x40x40xbf16, #tpu.memory_space<vmem>>, vector<1x1x40x40xbf16>
    %2 = vector.shape_cast %1 : vector<1x1x40x40xbf16> to vector<40x40xbf16>
    %3 = arith.truncf %0 : vector<40x512xf32> to vector<40x512xbf16>
    %cst = arith.constant dense<0.000000e+00> : vector<40x512xf32>
    %4 = tpu.matmul %2, %3, %cst {dimension_numbers = #tpu.dot_dimension_numbers<[1], [0], [0], [1], [0, 0, 1, 1], [], []>} : vector<40x40xbf16>, vector<40x512xbf16>, vector<40x512xf32> -> vector<40x512xf32>
    %cst_5 = arith.constant 0.000000e+00 : f32
    %5 = vector.broadcast %cst_5 : f32 to vector<40x512xf32>
    %6 = arith.maximumf %4, %5 : vector<40x512xf32>
    %c0_6 = arith.constant 0 : index
    %c1 = arith.constant 1 : index
    %c0_7 = arith.constant 0 : index
    %c0_8 = arith.constant 0 : index
    %7 = vector.load %arg2[%c0_6, %c1, %c0_7, %c0_8] : memref<3x3x40x40xbf16, #tpu.memory_space<vmem>>, vector<1x1x40x40xbf16>
    %8 = vector.shape_cast %7 : vector<1x1x40x40xbf16> to vector<40x40xbf16>
    %9 = arith.truncf %6 : vector<40x512xf32> to vector<40x512xbf16>
    %cst_9 = arith.constant dense<0.000000e+00> : vector<40x512xf32>
    %10 = tpu.matmul %8, %9, %cst_9 {dimension_numbers = #tpu.dot_dimension_numbers<[1], [0], [0], [1], [0, 0, 1, 1], [], []>} : vector<40x40xbf16>, vector<40x512xbf16>, vector<40x512xf32> -> vector<40x512xf32>
    %cst_10 = arith.constant 0.000000e+00 : f32
    %11 = vector.broadcast %cst_10 : f32 to vector<40x512xf32>
    %12 = arith.maximumf %10, %11 : vector<40x512xf32>
    %c0_11 = arith.constant 0 : index
    %c2 = arith.constant 2 : index
    %c0_12 = arith.constant 0 : index
    %c0_13 = arith.constant 0 : index
    %13 = vector.load %arg2[%c0_11, %c2, %c0_12, %c0_13] : memref<3x3x40x40xbf16, #tpu.memory_space<vmem>>, vector<1x1x40x40xbf16>
    %14 = vector.shape_cast %13 : vector<1x1x40x40xbf16> to vector<40x40xbf16>
    %15 = arith.truncf %12 : vector<40x512xf32> to vector<40x512xbf16>
    %cst_14 = arith.constant dense<0.000000e+00> : vector<40x512xf32>
    %16 = tpu.matmul %14, %15, %cst_14 {dimension_numbers = #tpu.dot_dimension_numbers<[1], [0], [0], [1], [0, 0, 1, 1], [], []>} : vector<40x40xbf16>, vector<40x512xbf16>, vector<40x512xf32> -> vector<40x512xf32>
    %17 = arith.subf %0, %16 : vector<40x512xf32>
    %c0_15 = arith.constant 0 : index
    %c0_16 = arith.constant 0 : index
    %c0_17 = arith.constant 0 : index
    %c0_18 = arith.constant 0 : index
    %18 = vector.load %arg2[%c0_15, %c0_16, %c0_17, %c0_18] : memref<3x3x40x40xbf16, #tpu.memory_space<vmem>>, vector<1x1x40x40xbf16>
    %19 = vector.shape_cast %18 : vector<1x1x40x40xbf16> to vector<40x40xbf16>
    %20 = arith.truncf %17 : vector<40x512xf32> to vector<40x512xbf16>
    %cst_19 = arith.constant dense<0.000000e+00> : vector<40x512xf32>
    %21 = tpu.matmul %19, %20, %cst_19 {dimension_numbers = #tpu.dot_dimension_numbers<[1], [0], [0], [1], [0, 0, 1, 1], [], []>} : vector<40x40xbf16>, vector<40x512xbf16>, vector<40x512xf32> -> vector<40x512xf32>
    %cst_20 = arith.constant 0.000000e+00 : f32
    %22 = vector.broadcast %cst_20 : f32 to vector<40x512xf32>
    %23 = arith.maximumf %21, %22 : vector<40x512xf32>
    %c0_21 = arith.constant 0 : index
    %c1_22 = arith.constant 1 : index
    %c0_23 = arith.constant 0 : index
    %c0_24 = arith.constant 0 : index
    %24 = vector.load %arg2[%c0_21, %c1_22, %c0_23, %c0_24] : memref<3x3x40x40xbf16, #tpu.memory_space<vmem>>, vector<1x1x40x40xbf16>
    %25 = vector.shape_cast %24 : vector<1x1x40x40xbf16> to vector<40x40xbf16>
    %26 = arith.truncf %23 : vector<40x512xf32> to vector<40x512xbf16>
    %cst_25 = arith.constant dense<0.000000e+00> : vector<40x512xf32>
    %27 = tpu.matmul %25, %26, %cst_25 {dimension_numbers = #tpu.dot_dimension_numbers<[1], [0], [0], [1], [0, 0, 1, 1], [], []>} : vector<40x40xbf16>, vector<40x512xbf16>, vector<40x512xf32> -> vector<40x512xf32>
    %cst_26 = arith.constant 0.000000e+00 : f32
    %28 = vector.broadcast %cst_26 : f32 to vector<40x512xf32>
    %29 = arith.maximumf %27, %28 : vector<40x512xf32>
    %c0_27 = arith.constant 0 : index
    %c2_28 = arith.constant 2 : index
    %c0_29 = arith.constant 0 : index
    %c0_30 = arith.constant 0 : index
    %30 = vector.load %arg2[%c0_27, %c2_28, %c0_29, %c0_30] : memref<3x3x40x40xbf16, #tpu.memory_space<vmem>>, vector<1x1x40x40xbf16>
    %31 = vector.shape_cast %30 : vector<1x1x40x40xbf16> to vector<40x40xbf16>
    %32 = arith.truncf %29 : vector<40x512xf32> to vector<40x512xbf16>
    %cst_31 = arith.constant dense<0.000000e+00> : vector<40x512xf32>
    %33 = tpu.matmul %31, %32, %cst_31 {dimension_numbers = #tpu.dot_dimension_numbers<[1], [0], [0], [1], [0, 0, 1, 1], [], []>} : vector<40x40xbf16>, vector<40x512xbf16>, vector<40x512xf32> -> vector<40x512xf32>
    %34 = arith.subf %17, %33 : vector<40x512xf32>
    %c1_32 = arith.constant 1 : index
    %c0_33 = arith.constant 0 : index
    %c0_34 = arith.constant 0 : index
    %c0_35 = arith.constant 0 : index
    %35 = vector.load %arg2[%c1_32, %c0_33, %c0_34, %c0_35] : memref<3x3x40x40xbf16, #tpu.memory_space<vmem>>, vector<1x1x40x40xbf16>
    %36 = vector.shape_cast %35 : vector<1x1x40x40xbf16> to vector<40x40xbf16>
    %37 = arith.truncf %34 : vector<40x512xf32> to vector<40x512xbf16>
    %cst_36 = arith.constant dense<0.000000e+00> : vector<40x512xf32>
    %38 = tpu.matmul %36, %37, %cst_36 {dimension_numbers = #tpu.dot_dimension_numbers<[1], [0], [0], [1], [0, 0, 1, 1], [], []>} : vector<40x40xbf16>, vector<40x512xbf16>, vector<40x512xf32> -> vector<40x512xf32>
    %cst_37 = arith.constant 0.000000e+00 : f32
    %39 = vector.broadcast %cst_37 : f32 to vector<40x512xf32>
    %40 = arith.maximumf %38, %39 : vector<40x512xf32>
    %c1_38 = arith.constant 1 : index
    %c1_39 = arith.constant 1 : index
    %c0_40 = arith.constant 0 : index
    %c0_41 = arith.constant 0 : index
    %41 = vector.load %arg2[%c1_38, %c1_39, %c0_40, %c0_41] : memref<3x3x40x40xbf16, #tpu.memory_space<vmem>>, vector<1x1x40x40xbf16>
    %42 = vector.shape_cast %41 : vector<1x1x40x40xbf16> to vector<40x40xbf16>
    %43 = arith.truncf %40 : vector<40x512xf32> to vector<40x512xbf16>
    %cst_42 = arith.constant dense<0.000000e+00> : vector<40x512xf32>
    %44 = tpu.matmul %42, %43, %cst_42 {dimension_numbers = #tpu.dot_dimension_numbers<[1], [0], [0], [1], [0, 0, 1, 1], [], []>} : vector<40x40xbf16>, vector<40x512xbf16>, vector<40x512xf32> -> vector<40x512xf32>
    %cst_43 = arith.constant 0.000000e+00 : f32
    %45 = vector.broadcast %cst_43 : f32 to vector<40x512xf32>
    %46 = arith.maximumf %44, %45 : vector<40x512xf32>
    %c1_44 = arith.constant 1 : index
    %c2_45 = arith.constant 2 : index
    %c0_46 = arith.constant 0 : index
    %c0_47 = arith.constant 0 : index
    %47 = vector.load %arg2[%c1_44, %c2_45, %c0_46, %c0_47] : memref<3x3x40x40xbf16, #tpu.memory_space<vmem>>, vector<1x1x40x40xbf16>
    %48 = vector.shape_cast %47 : vector<1x1x40x40xbf16> to vector<40x40xbf16>
    %49 = arith.truncf %46 : vector<40x512xf32> to vector<40x512xbf16>
    %cst_48 = arith.constant dense<0.000000e+00> : vector<40x512xf32>
    %50 = tpu.matmul %48, %49, %cst_48 {dimension_numbers = #tpu.dot_dimension_numbers<[1], [0], [0], [1], [0, 0, 1, 1], [], []>} : vector<40x40xbf16>, vector<40x512xbf16>, vector<40x512xf32> -> vector<40x512xf32>
    %51 = arith.subf %34, %50 : vector<40x512xf32>
    %52 = vector.extract_strided_slice %51 {offsets = [16, 0], sizes = [1, 512], strides = [1, 1]} : vector<40x512xf32> to vector<1x512xf32>
    %cst_49 = arith.constant 0.000000e+00 : f32
    %53 = vector.broadcast %cst_49 : f32 to vector<1x512xf32>
    %54 = arith.subf %53, %52 : vector<1x512xf32>
    %c0_50 = arith.constant 0 : index
    %c0_51 = arith.constant 0 : index
    %55 = vector.load %arg3[%c0_50, %c0_51] : memref<1x512xf32, #tpu.memory_space<vmem>>, vector<1x512xf32>
    tpu.vector_store %arg3[%c0_50, %c0_51], %54 {strides = array<i32>} : memref<1x512xf32, #tpu.memory_space<vmem>>, vector<1x512xf32>,
    return
  }
  func.func @transform_0(%arg0: i32) -> (i32, i32) {
    %c0_i32 = arith.constant 0 : i32
    %c0_i32_0 = arith.constant 0 : i32
    return %c0_i32, %arg0 : i32, i32
  }
  func.func @transform_1(%arg0: i32) -> (i32, i32, i32, i32) {
    %c0_i32 = arith.constant 0 : i32
    %c0_i32_0 = arith.constant 0 : i32
    %c0_i32_1 = arith.constant 0 : i32
    %c0_i32_2 = arith.constant 0 : i32
    %c0_i32_3 = arith.constant 0 : i32
    return %c0_i32, %c0_i32_0, %c0_i32_1, %c0_i32_2 : i32, i32, i32, i32
  }
  func.func @transform_2(%arg0: i32) -> (i32, i32) {
    %c0_i32 = arith.constant 0 : i32
    %c0_i32_0 = arith.constant 0 : i32
    return %c0_i32, %arg0 : i32, i32
  }
}

</mosaic_0001>

<llo_original>
// kernel: _forward_impl.1
$region0: #{_forward_impl.1}
  #allocation0 [shape = 'u32[]', space=smem, size = 0x4, offset = 0x4, fixed_abs, tag = 'smem constant byte address 0x4 - core index']
  #allocation1 [shape = 'u32[144,128]{1,0:T(1,128)}', space=vmem, size = 0x12000, scoped, tag = 'internal scratch']
  %s0 = inlined_call_operand.vmem [shape: f32[40,1024], index: 0, kind: input, shape index: {}]
  %s1 = inlined_call_operand.vmem [shape: bf16[3,3,40,40], index: 1, kind: input, shape index: {}]
  %s2 = inlined_call_operand.hbm [shape: f32[1,1024], index: 2, kind: output, shape index: {}]
  %s3 = sld [smem:[#allocation0]]
  $region64: #{_forward_impl.1} parent=0
    _
  %s5 = ssub.s32 1, %s3
  %s6 = scalar_select 0, %s5, %s3
  $region1: #{_forward_impl.1} parent=0
    #allocation2 [shape = 'u8[163840]{0}', space=vmem, size = 0x28000, scoped, tag = 'input window, operand 0']
    #allocation3 [shape = 'u8[4096]{0}', space=vmem, size = 0x1000, scoped, tag = 'output window, operand 0']
    #allocation4 [shape = 's32[2]{0}', space=sflag, size = 0x8, scoped, tag = 'scoped memory for _forward_impl.1']
    %7 = vsyncpa [#allocation4], 0
    %s8 = scalar_lea.sflag [#allocation4], 1
    %9 = vsyncpa %s8, 0
    loop: start=0, step=1, limit=4
    $region2: #{_forward_impl.1} parent=1 // loop_pre_header
      _
    $region3: #{_forward_impl.1} parent=1 // loop_header
      %s11 = sphi 0, %s15
      %p12 = scmp.ge.s32.totalorder %s11, 4
      %s21 = sphi 0, %s23
      %s24 = sphi 0, %s21
      %s25 = sphi 0, %s24
      %s41 = sphi 0, %s25
      %s45 = sphi 0, %s45
      %s47 = sphi 0, %s45
      %s48 = sphi 0, %s47
      %s62 = sphi 0, %s48
      %s68 = sphi 0, %s70
      %s71 = sphi 0, %s68
      %s72 = sphi 0, %s71
      %s88 = sphi 0, %s72
    $region4: #{_forward_impl.1} parent=1 // loop_header_branch
      %14 = sbr.rel (%p12) target = $region8
    $region5: #{_forward_impl.1} parent=1 // loop_body
      %s16 = ssub.s32 %s11, 1
      %s17 = ssub.s32 %s11, 2
      %s18 = sadd.s32 %s11, 1
      %s19 = ssub.s32 %s11, %s18
      %p20 = scmp.eq.s32.totalorder %s19, 0
      %s22 = sadd.s32 %s21, 1
      %s23 = scalar_select %p20, %s21, %s22
      %p26 = pneg %p20
      %p27 = scmp.eq.s32.totalorder %s11, 1
      %p28 = por %p26, %p27
      %p29 = scmp.ne.s32.totalorder %s21, %s24
      %p30 = scmp.eq.s32.totalorder %s11, 0
      %p31 = por %p29, %p30
      %p32 = scmp.ne.s32.totalorder %s21, %s24
      %p33 = scmp.eq.s32.totalorder %s16, 1
      %p34 = por %p32, %p33
      %p35 = scmp.ne.s32.totalorder %s24, %s25
      %p36 = scmp.eq.s32.totalorder %s16, 0
      %p37 = por %p35, %p36
      %p38 = scmp.ne.s32.totalorder %s24, %s25
      %p39 = scmp.eq.s32.totalorder %s17, 1
      %p40 = por %p38, %p39
      %p42 = scmp.ne.s32.totalorder %s25, %s41
      %p43 = scmp.eq.s32.totalorder %s17, 0
      %p44 = por %p42, %p43
      %s46 = sadd.s32 %s45, 1
      %p49 = scmp.eq.s32.totalorder %s11, 1
      %p50 = scmp.ne.s32.totalorder %s45, %s47
      %p51 = scmp.eq.s32.totalorder %s11, 0
      %p52 = por %p50, %p51
      %p53 = scmp.ne.s32.totalorder %s45, %s47
      %p54 = scmp.eq.s32.totalorder %s16, 1
      %p55 = por %p53, %p54
      %p56 = scmp.ne.s32.totalorder %s47, %s48
      %p57 = scmp.eq.s32.totalorder %s16, 0
      %p58 = por %p56, %p57
      %p59 = scmp.ne.s32.totalorder %s47, %s48
      %p60 = scmp.eq.s32.totalorder %s17, 1
      %p61 = por %p59, %p60
      %p63 = scmp.ne.s32.totalorder %s48, %s62
      %p64 = scmp.eq.s32.totalorder %s17, 0
      %p65 = por %p63, %p64
      %s66 = ssub.s32 %s11, %s18
      %p67 = scmp.eq.s32.totalorder %s66, 0
      %s69 = sadd.s32 %s68, 1
      %s70 = scalar_select %p67, %s68, %s69
      %p73 = pneg %p67
      %p74 = scmp.eq.s32.totalorder %s11, 1
      %p75 = por %p73, %p74
      %p76 = scmp.ne.s32.totalorder %s68, %s71
      %p77 = scmp.eq.s32.totalorder %s11, 0
      %p78 = por %p76, %p77
      %p79 = scmp.ne.s32.totalorder %s68, %s71
      %p80 = scmp.eq.s32.totalorder %s16, 1
      %p81 = por %p79, %p80
      %p82 = scmp.ne.s32.totalorder %s71, %s72
      %p83 = scmp.eq.s32.totalorder %s16, 0
      %p84 = por %p82, %p83
      %p85 = scmp.ne.s32.totalorder %s71, %s72
      %p86 = scmp.eq.s32.totalorder %s17, 1
      %p87 = por %p85, %p86
      %p89 = scmp.ne.s32.totalorder %s72, %s88
      %p90 = scmp.eq.s32.totalorder %s17, 0
      %p91 = por %p89, %p90
      %p92 = scmp.le.s32.totalorder 1, %s11
      %p93 = scmp.lt.s32.totalorder %s11, 3
      %p94 = pnand %p92, %p93
      %p95 = pneg %p94
      // Predicated region
      $region9: #{_forward_impl.1} parent=5 // pred_check
        _
      $region10: #{_forward_impl.1} parent=5 // pred_check_branch
        %97 = sbr.rel (%p94) target = $region12
      $region11: #{_forward_impl.1} parent=5 // pred_region
        %s98 = ssub.s32 %s11, 1
        // Predicated region
        $region13: #{_forward_impl.1} parent=11 // pred_check
          %p99 = pneg %p58
        $region14: #{_forward_impl.1} parent=11 // pred_check_branch
          %101 = sbr.rel (%p99) target = $region16
        $region15: #{_forward_impl.1} parent=11 // pred_region
          _
        $region16: #{_forward_impl.1} parent=11 // pred_fallthru
          _
      $region12: #{_forward_impl.1} parent=5 // pred_fallthru
        _
      %p102 = scmp.lt.s32.totalorder %s11, 2
      // Predicated region
      $region17: #{_forward_impl.1} parent=5 // pred_check
        %p103 = pneg %p102
      $region18: #{_forward_impl.1} parent=5 // pred_check_branch
        %105 = sbr.rel (%p103) target = $region20
      $region19: #{_forward_impl.1} parent=5 // pred_region
        // Predicated region
        $region21: #{_forward_impl.1} parent=19 // pred_check
          %p106 = pneg %p31
        $region22: #{_forward_impl.1} parent=19 // pred_check_branch
          %108 = sbr.rel (%p106) target = $region24
        $region23: #{_forward_impl.1} parent=19 // pred_region
          %s109 = sand.u32 %s21, 1
          %s110 = sand.u32 %s21, 1
          %s111 = smul.addr %s110, 160
          %s112 = scalar_lea.vmem [#allocation2], %s111
          %s113 = smul.u32 4, %s11
          %s114 = smul.addr %s113, 8
          %s115 = scalar_lea.vmem %s0, %s114
          // Predicated region
          $region25: #{_forward_impl.1} parent=23 // pred_check
            _
          $region26: #{_forward_impl.1} parent=23 // pred_check_branch
            %117 = sbr.rel (0) target = $region28
          $region27: #{_forward_impl.1} parent=23 // pred_region
            // Predicated region
            $region29: #{_forward_impl.1} parent=27 // pred_check
              _
            $region30: #{_forward_impl.1} parent=27 // pred_check_branch
              %119 = sbr.rel (0) target = $region32
            $region31: #{_forward_impl.1} parent=27 // pred_region
              loop: start=0, step=1, limit=1
              $region33: #{_forward_impl.1} parent=31 // loop_pre_header
                _
              $region34: #{_forward_impl.1} parent=31 // loop_header
                %s121 = sphi 0, %s125
                %p122 = scmp.ge.s32.totalorder %s121, 1
                %s126 = sphi %s115, %s115
                %s127 = sphi %s112, %s112
              $region35: #{_forward_impl.1} parent=31 // loop_header_branch
                %124 = sbr.rel (%p122) target = $region39
              $region36: #{_forward_impl.1} parent=31 // loop_body
                %v128 = vld [vmem:[%s126] sm:$0xff]
                %129 = vst [vmem:[%s127] sm:$0xff] %v128
                %v130 = vld [vmem:[%s126 + $0x8] sm:$0xff]
                %131 = vst [vmem:[%s127 + $0x8] sm:$0xff] %v130
                %v132 = vld [vmem:[%s126 + $0x10] sm:$0xff]
                %133 = vst [vmem:[%s127 + $0x10] sm:$0xff] %v132
                %v134 = vld [vmem:[%s126 + $0x18] sm:$0xff]
                %135 = vst [vmem:[%s127 + $0x18] sm:$0xff] %v134
                %v136 = vld [vmem:[%s126 + $0x40] sm:$0xff]
                %137 = vst [vmem:[%s127 + $0x20] sm:$0xff] %v136
                %v138 = vld [vmem:[%s126 + $0x48] sm:$0xff]
                %139 = vst [vmem:[%s127 + $0x28] sm:$0xff] %v138
                %v140 = vld [vmem:[%s126 + $0x50] sm:$0xff]
                %141 = vst [vmem:[%s127 + $0x30] sm:$0xff] %v140
                %v142 = vld [vmem:[%s126 + $0x58] sm:$0xff]
                %143 = vst [vmem:[%s127 + $0x38] sm:$0xff] %v142
                %v144 = vld [vmem:[%s126 + $0x80] sm:$0xff]
                %145 = vst [vmem:[%s127 + $0x40] sm:$0xff] %v144
                %v146 = vld [vmem:[%s126 + $0x88] sm:$0xff]
                %147 = vst [vmem:[%s127 + $0x48] sm:$0xff] %v146
                %v148 = vld [vmem:[%s126 + $0x90] sm:$0xff]
                %149 = vst [vmem:[%s127 + $0x50] sm:$0xff] %v148
                %v150 = vld [vmem:[%s126 + $0x98] sm:$0xff]
                %151 = vst [vmem:[%s127 + $0x58] sm:$0xff] %v150
                %v152 = vld [vmem:[%s126 + $0xc0] sm:$0xff]
                %153 = vst [vmem:[%s127 + $0x60] sm:$0xff] %v152
                %v154 = vld [vmem:[%s126 + $0xc8] sm:$0xff]
                %155 = vst [vmem:[%s127 + $0x68] sm:$0xff] %v154
                %v156 = vld [vmem:[%s126 + $0xd0] sm:$0xff]
                %157 = vst [vmem:[%s127 + $0x70] sm:$0xff] %v156
                %v158 = vld [vmem:[%s126 + $0xd8] sm:$0xff]
                %159 = vst [vmem:[%s127 + $0x78] sm:$0xff] %v158
                %v160 = vld [vmem:[%s126 + $0x100] sm:$0xff]
                %161 = vst [vmem:[%s127 + $0x80] sm:$0xff] %v160
                %v162 = vld [vmem:[%s126 + $0x108] sm:$0xff]
                %163 = vst [vmem:[%s127 + $0x88] sm:$0xff] %v162
                %v164 = vld [vmem:[%s126 + $0x110] sm:$0xff]
                %165 = vst [vmem:[%s127 + $0x90] sm:$0xff] %v164
                %v166 = vld [vmem:[%s126 + $0x118] sm:$0xff]
                %167 = vst [vmem:[%s127 + $0x98] sm:$0xff] %v166
              $region37: #{_forward_impl.1} parent=31 // loop_footer
                %s125 = sadd.s32 1, %s121
              $region38: #{_forward_impl.1} parent=31 // loop_footer_branch
                %120 = sbr.rel target = $region34
              $region39: #{_forward_impl.1} parent=31 // loop_exit
                _
            $region32: #{_forward_impl.1} parent=27 // pred_fallthru
              _
            // Predicated region
            $region40: #{_forward_impl.1} parent=27 // pred_check
              _
            $region41: #{_forward_impl.1} parent=27 // pred_check_branch
              %169 = sbr.rel target = $region43
            $region42: #{_forward_impl.1} parent=27 // pred_region
              _
            $region43: #{_forward_impl.1} parent=27 // pred_fallthru
              _
          $region28: #{_forward_impl.1} parent=23 // pred_fallthru
            _
          %170 = vnop
        $region24: #{_forward_impl.1} parent=19 // pred_fallthru
          _
      $region20: #{_forward_impl.1} parent=5 // pred_fallthru
        _
      %p171 = scmp.le.s32.totalorder 1, %s11
      %p172 = scmp.lt.s32.totalorder %s11, 3
      %p173 = pnand %p171, %p172
      %p174 = pneg %p173
      // Predicated region
      $region44: #{_forward_impl.1} parent=5 // pred_check
        _
      $region45: #{_forward_impl.1} parent=5 // pred_check_branch
        %176 = sbr.rel (%p173) target = $region47
      $region46: #{_forward_impl.1} parent=5 // pred_region
        %s177 = ssub.s32 %s11, 1
        %s178 = sand.u32 %s24, 1
        %s179 = sand.u32 %s24, 1
        %s180 = smul.addr %s179, 160
        %s181 = scalar_lea.vmem [#allocation2], %s180
        // Predicated region
        $region48: #{_forward_impl.1} parent=46 // pred_check
          %p182 = pneg %p37
        $region49: #{_forward_impl.1} parent=46 // pred_check_branch
          %184 = sbr.rel (%p182) target = $region51
        $region50: #{_forward_impl.1} parent=46 // pred_region
          _
        $region51: #{_forward_impl.1} parent=46 // pred_fallthru
          _
        %s185 = sand.u32 %s24, 1
        %s186 = sand.u32 %s24, 1
        %s187 = smul.addr %s186, 160
        %s188 = scalar_lea.vmem [#allocation2], %s187
        %p189 = pneg %p37
        %p190 = pneg %p34
        %p191 = pneg %p58
        %p192 = pneg %p55
        %p193 = pneg %p84
        %p194 = pneg %p81
        %s195 = sand.u32 %s71, 1
        %s196 = scalar_lea.sflag [#allocation4], %s195
        %s197 = sand.u32 %s71, 1
        %s198 = smul.addr %s197, 4
        %s199 = scalar_lea.vmem [#allocation3], %s198
        %s200 = smul.u32 4, %s16
        %s201 = smul.u32 4, %s16
        %v203 = vld [vmem:[%s181] sm:$0xff]
        %v204 = vld [vmem:[%s181 + $0x8] sm:$0xff]
        %v205 = vld [vmem:[%s181 + $0x10] sm:$0xff]
        %v206 = vld [vmem:[%s181 + $0x18] sm:$0xff]
        %v207 = vld [vmem:[%s181 + $0x20] sm:$0xff]
        %v208 = vld [vmem:[%s181 + $0x28] sm:$0xff]
        %v209 = vld [vmem:[%s181 + $0x30] sm:$0xff]
        %v210 = vld [vmem:[%s181 + $0x38] sm:$0xff]
        %v211 = vld [vmem:[%s181 + $0x40] sm:$0xff]
        %v212 = vld [vmem:[%s181 + $0x48] sm:$0xff]
        %v213 = vld [vmem:[%s181 + $0x50] sm:$0xff]
        %v214 = vld [vmem:[%s181 + $0x58] sm:$0xff]
        %v215 = vld [vmem:[%s181 + $0x60] sm:$0xff]
        %v216 = vld [vmem:[%s181 + $0x68] sm:$0xff]
        %v217 = vld [vmem:[%s181 + $0x70] sm:$0xff]
        %v218 = vld [vmem:[%s181 + $0x78] sm:$0xff]
        %v219 = vld [vmem:[%s181 + $0x80] sm:$0xff]
        %v220 = vld [vmem:[%s181 + $0x88] sm:$0xff]
        %v221 = vld [vmem:[%s181 + $0x90] sm:$0xff]
        %v222 = vld [vmem:[%s181 + $0x98] sm:$0xff]
        %v223 = vld [vmem:[%s1] sm:$0xf]
        %v224 = vld [vmem:[%s1 + $0x4] sm:$0xf]
        %v225 = vld [vmem:[%s1 + $0x8] sm:$0xf]
        %v226 = vld [vmem:[%s1 + $0xc] sm:$0xf]
        %v227 = vld [vmem:[%s1 + $0x10] sm:$0xf]
        %v228 = vpack.c.bf16 %v207, %v203
        %v229 = vpack.c.bf16 %v208, %v204
        %v230 = vpack.c.bf16 %v209, %v205
        %v231 = vpack.c.bf16 %v210, %v206
        %v232 = vpack.c.bf16 %v215, %v211
        %v233 = vpack.c.bf16 %v216, %v212
        %v234 = vpack.c.bf16 %v217, %v213
        %v235 = vpack.c.bf16 %v218, %v214
        %v236 = vpack.c.bf16 %v219, %v219
        %v237 = vpack.c.bf16 %v220, %v220
        %v238 = vpack.c.bf16 %v221, %v221
        %v239 = vpack.c.bf16 %v222, %v222
        %v245 = vunpack.c.l.b16 %v223
        %v246 = vunpack.c.l.b16 %v224
        %v247 = vunpack.c.l.b16 %v225
        %v248 = vunpack.c.l.b16 %v226
        %v249 = vunpack.c.l.b16 %v227
        %v250 = vpack.c.b16 %v246, %v245
        %v251 = vpack.c.b16 %v248, %v247
        %v252 = vpack.c.b16 %v249, %v249
        %vm253 = vcmask 326656
        %v255 = vsel %vm253, %v250, 0
        %v258 = vsel %vm253, %v251, 0
        %v261 = vsel %vm253, %v252, 0
        %vm263 = vcmask 1043456
        %v265 = vsel %vm263, %v236, 0
        %v268 = vsel %vm263, %v237, 0
        %v271 = vsel %vm263, %v238, 0
        %v274 = vsel %vm263, %v239, 0
        %276 = vmatprep.subr.bf16.mxu0 0
        %277 = vmatpush1.bf16.msra.mxu0 0
        %278 = vmatprep.subr.bf16.mxu0 0
        %279 = vmatpush1.bf16.msra.mxu0 0
        %280 = vmatprep.subr.bf16.mxu0 0
        %281 = vmatpush1.bf16.msra.mxu0 0
        %282 = vmatprep.subr.bf16.mxu0 0
        %283 = vmatpush1.bf16.msra.mxu0 0
        %284 = vmatprep.subr.bf16.mxu0 0
        %285 = vmatpush1.bf16.msra.mxu0 0
        %286 = vmatprep.subr.bf16.mxu0 %v268
        %287 = vmatpush1.bf16.msra.mxu0 %v265
        %288 = vmatprep.subr.bf16.mxu0 %v233
        %289 = vmatpush1.bf16.msra.mxu0 %v232
        %290 = vmatprep.subr.bf16.mxu0 %v229
        %291 = vmatpush1.bf16.msra.mxu0 %v228
        %292 = vmatprep.subr.bf16.mxu0 0
        %293 = vmatpush2.bf16.msra.mxu0 0
        %294 = vmatprep.subr.bf16.mxu0 0
        %295 = vmatpush2.bf16.msra.mxu0 0
        %296 = vmatprep.subr.bf16.mxu0 0
        %297 = vmatpush2.bf16.msra.mxu0 0
        %298 = vmatprep.subr.bf16.mxu0 0
        %299 = vmatpush2.bf16.msra.mxu0 0
        %300 = vmatprep.subr.bf16.mxu0 0
        %301 = vmatpush2.bf16.msra.mxu0 0
        %302 = vmatprep.subr.bf16.mxu0 0
        %303 = vmatpush2.bf16.msra.mxu0 0
        %304 = vmatprep.subr.bf16.mxu0 0
        %305 = vmatpush2.bf16.msra.mxu0 0
        %306 = vmatprep.subr.bf16.mxu0 0
        %307 = vmatpush2.bf16.msra.mxu0 0
        %308 = vmatprep.mubr.bf16.mxu0 0
        %309 = vmatmul.mubr.bf16.gmra.mxu0 %v255
        %v310 = vpop.f32.mrf.mxu0
        %v311 = vadd.f32 0.0, %v310
        %v312 = vpop.f32.mrf.mxu0
        %v313 = vadd.f32 0.0, %v312
        %v314 = vpop.f32.mrf.mxu0
        %v315 = vadd.f32 0.0, %v314
        %v316 = vpop.f32.mrf.mxu0
        %v317 = vadd.f32 0.0, %v316
        %318 = vmatprep.mubr.bf16.mxu0 0
        %319 = vmatmul.mubr.bf16.gmra.mxu0 %v258
        %v320 = vpop.f32.mrf.mxu0
        %v321 = vadd.f32 0.0, %v320
        %v322 = vpop.f32.mrf.mxu0
        %v323 = vadd.f32 0.0, %v322
        %v324 = vpop.f32.mrf.mxu0
        %v325 = vadd.f32 0.0, %v324
        %v326 = vpop.f32.mrf.mxu0
        %v327 = vadd.f32 0.0, %v326
        %328 = vmatprep.mubr.bf16.mxu0 0
        %329 = vmatmul.mubr.bf16.gmra.mxu0 %v261
        %v330 = vpop.f32.mrf.mxu0
        %v331 = vadd.f32 0.0, %v330
        %v332 = vpop.f32.mrf.mxu0
        %v333 = vadd.f32 0.0, %v332
        %v334 = vpop.f32.mrf.mxu0
        %v335 = vpop.f32.mrf.mxu0
        %336 = vdwg.mxu0
        %337 = vmatprep.subr.bf16.mxu0 0
        %338 = vmatpush1.bf16.msra.mxu0 0
        %339 = vmatprep.subr.bf16.mxu0 0
        %340 = vmatpush1.bf16.msra.mxu0 0
        %341 = vmatprep.subr.bf16.mxu0 0
        %342 = vmatpush1.bf16.msra.mxu0 0
        %343 = vmatprep.subr.bf16.mxu0 0
        %344 = vmatpush1.bf16.msra.mxu0 0
        %345 = vmatprep.subr.bf16.mxu0 0
        %346 = vmatpush1.bf16.msra.mxu0 0
        %347 = vmatprep.subr.bf16.mxu0 %v274
        %348 = vmatpush1.bf16.msra.mxu0 %v271
        %349 = vmatprep.subr.bf16.mxu0 %v235
        %350 = vmatpush1.bf16.msra.mxu0 %v234
        %351 = vmatprep.subr.bf16.mxu0 %v231
        %352 = vmatpush1.bf16.msra.mxu0 %v230
        %353 = vmatprep.subr.bf16.mxu0 0
        %354 = vmatpush2.bf16.msra.mxu0 0
        %355 = vmatprep.subr.bf16.mxu0 0
        %356 = vmatpush2.bf16.msra.mxu0 0
        %357 = vmatprep.subr.bf16.mxu0 0
        %358 = vmatpush2.bf16.msra.mxu0 0
        %359 = vmatprep.subr.bf16.mxu0 0
        %360 = vmatpush2.bf16.msra.mxu0 0
        %361 = vmatprep.subr.bf16.mxu0 0
        %362 = vmatpush2.bf16.msra.mxu0 0
        %363 = vmatprep.subr.bf16.mxu0 0
        %364 = vmatpush2.bf16.msra.mxu0 0
        %365 = vmatprep.subr.bf16.mxu0 0
        %366 = vmatpush2.bf16.msra.mxu0 0
        %367 = vmatprep.subr.bf16.mxu0 0
        %368 = vmatpush2.bf16.msra.mxu0 0
        %369 = vmatprep.mubr.bf16.mxu0 0
        %370 = vmatmul.mubr.bf16.gmra.mxu0 %v255
        %v371 = vpop.f32.mrf.mxu0
        %v372 = vadd.f32 0.0, %v371
        %v373 = vpop.f32.mrf.mxu0
        %v374 = vadd.f32 0.0, %v373
        %v375 = vpop.f32.mrf.mxu0
        %v376 = vadd.f32 0.0, %v375
        %v377 = vpop.f32.mrf.mxu0
        %v378 = vadd.f32 0.0, %v377
        %379 = vmatprep.mubr.bf16.mxu0 0
        %380 = vmatmul.mubr.bf16.gmra.mxu0 %v258
        %v381 = vpop.f32.mrf.mxu0
        %v382 = vadd.f32 0.0, %v381
        %v383 = vpop.f32.mrf.mxu0
        %v384 = vadd.f32 0.0, %v383
        %v385 = vpop.f32.mrf.mxu0
        %v386 = vadd.f32 0.0, %v385
        %v387 = vpop.f32.mrf.mxu0
        %v388 = vadd.f32 0.0, %v387
        %389 = vmatprep.mubr.bf16.mxu0 0
        %390 = vmatmul.mubr.bf16.gmra.mxu0 %v261
        %v391 = vpop.f32.mrf.mxu0
        %v392 = vadd.f32 0.0, %v391
        %v393 = vpop.f32.mrf.mxu0
        %v394 = vadd.f32 0.0, %v393
        %v395 = vpop.f32.mrf.mxu0
        %v396 = vpop.f32.mrf.mxu0
        %397 = vdwg.mxu0
        %v398 = vmax.f32 %v311, 0.0
        %v399 = vmax.f32 %v313, 0.0
        %v400 = vmax.f32 %v372, 0.0
        %v401 = vmax.f32 %v374, 0.0
        %v402 = vmax.f32 %v315, 0.0
        %v403 = vmax.f32 %v317, 0.0
        %v404 = vmax.f32 %v376, 0.0
        %v405 = vmax.f32 %v378, 0.0
        %v406 = vmax.f32 %v321, 0.0
        %v407 = vmax.f32 %v323, 0.0
        %v408 = vmax.f32 %v382, 0.0
        %v409 = vmax.f32 %v384, 0.0
        %v410 = vmax.f32 %v325, 0.0
        %v411 = vmax.f32 %v327, 0.0
        %v412 = vmax.f32 %v386, 0.0
        %v413 = vmax.f32 %v388, 0.0
        %v414 = vmax.f32 %v331, 0.0
        %v415 = vmax.f32 %v333, 0.0
        %v416 = vmax.f32 %v392, 0.0
        %v417 = vmax.f32 %v394, 0.0
        %s418 = scalar_lea.vmem %s1, 20
        %v419 = vld [vmem:[%s418] sm:$0xf]
        %v420 = vld [vmem:[%s418 + $0x4] sm:$0xf]
        %v421 = vld [vmem:[%s418 + $0x8] sm:$0xf]
        %v422 = vld [vmem:[%s418 + $0xc] sm:$0xf]
        %v423 = vld [vmem:[%s418 + $0x10] sm:$0xf]
        %v424 = vpack.c.bf16 %v402, %v398
        %v425 = vpack.c.bf16 %v403, %v399
        %v426 = vpack.c.bf16 %v404, %v400
        %v427 = vpack.c.bf16 %v405, %v401
        %v428 = vpack.c.bf16 %v410, %v406
        %v429 = vpack.c.bf16 %v411, %v407
        %v430 = vpack.c.bf16 %v412, %v408
        %v431 = vpack.c.bf16 %v413, %v409
        %v432 = vpack.c.bf16 %v414, %v414
        %v433 = vpack.c.bf16 %v415, %v415
        %v434 = vpack.c.bf16 %v416, %v416
        %v435 = vpack.c.bf16 %v417, %v417
        %v441 = vunpack.c.l.b16 %v419
        %v442 = vunpack.c.l.b16 %v420
        %v443 = vunpack.c.l.b16 %v421
        %v444 = vunpack.c.l.b16 %v422
        %v445 = vunpack.c.l.b16 %v423
        %v446 = vpack.c.b16 %v442, %v441
        %v447 = vpack.c.b16 %v444, %v443
        %v448 = vpack.c.b16 %v445, %v445
        %v450 = vsel %vm253, %v446, 0
        %v453 = vsel %vm253, %v447, 0
        %v456 = vsel %vm253, %v448, 0
        %v459 = vsel %vm263, %v432, 0
        %v462 = vsel %vm263, %v433, 0
        %v465 = vsel %vm263, %v434, 0
        %v468 = vsel %vm263, %v435, 0
        %470 = vmatprep.subr.bf16.mxu0 0
        %471 = vmatpush1.bf16.msra.mxu0 0
        %472 = vmatprep.subr.bf16.mxu0 0
        %473 = vmatpush1.bf16.msra.mxu0 0
        %474 = vmatprep.subr.bf16.mxu0 0
        %475 = vmatpush1.bf16.msra.mxu0 0
        %476 = vmatprep.subr.bf16.mxu0 0
        %477 = vmatpush1.bf16.msra.mxu0 0
        %478 = vmatprep.subr.bf16.mxu0 0
        %479 = vmatpush1.bf16.msra.mxu0 0
        %480 = vmatprep.subr.bf16.mxu0 %v462
        %481 = vmatpush1.bf16.msra.mxu0 %v459
        %482 = vmatprep.subr.bf16.mxu0 %v429
        %483 = vmatpush1.bf16.msra.mxu0 %v428
        %484 = vmatprep.subr.bf16.mxu0 %v425
        %485 = vmatpush1.bf16.msra.mxu0 %v424
        %486 = vmatprep.subr.bf16.mxu0 0
        %487 = vmatpush2.bf16.msra.mxu0 0
        %488 = vmatprep.subr.bf16.mxu0 0
        %489 = vmatpush2.bf16.msra.mxu0 0
        %490 = vmatprep.subr.bf16.mxu0 0
        %491 = vmatpush2.bf16.msra.mxu0 0
        %492 = vmatprep.subr.bf16.mxu0 0
        %493 = vmatpush2.bf16.msra.mxu0 0
        %494 = vmatprep.subr.bf16.mxu0 0
        %495 = vmatpush2.bf16.msra.mxu0 0
        %496 = vmatprep.subr.bf16.mxu0 0
        %497 = vmatpush2.bf16.msra.mxu0 0
        %498 = vmatprep.subr.bf16.mxu0 0
        %499 = vmatpush2.bf16.msra.mxu0 0
        %500 = vmatprep.subr.bf16.mxu0 0
        %501 = vmatpush2.bf16.msra.mxu0 0
        %502 = vmatprep.mubr.bf16.mxu0 0
        %503 = vmatmul.mubr.bf16.gmra.mxu0 %v450
        %v504 = vpop.f32.mrf.mxu0
        %v505 = vadd.f32 0.0, %v504
        %v506 = vpop.f32.mrf.mxu0
        %v507 = vadd.f32 0.0, %v506
        %v508 = vpop.f32.mrf.mxu0
        %v509 = vadd.f32 0.0, %v508
        %v510 = vpop.f32.mrf.mxu0
        %v511 = vadd.f32 0.0, %v510
        %512 = vmatprep.mubr.bf16.mxu0 0
        %513 = vmatmul.mubr.bf16.gmra.mxu0 %v453
        %v514 = vpop.f32.mrf.mxu0
        %v515 = vadd.f32 0.0, %v514
        %v516 = vpop.f32.mrf.mxu0
        %v517 = vadd.f32 0.0, %v516
        %v518 = vpop.f32.mrf.mxu0
        %v519 = vadd.f32 0.0, %v518
        %v520 = vpop.f32.mrf.mxu0
        %v521 = vadd.f32 0.0, %v520
        %522 = vmatprep.mubr.bf16.mxu0 0
        %523 = vmatmul.mubr.bf16.gmra.mxu0 %v456
        %v524 = vpop.f32.mrf.mxu0
        %v525 = vadd.f32 0.0, %v524
        %v526 = vpop.f32.mrf.mxu0
        %v527 = vadd.f32 0.0, %v526
        %v528 = vpop.f32.mrf.mxu0
        %v529 = vpop.f32.mrf.mxu0
        %530 = vdwg.mxu0
        %531 = vmatprep.subr.bf16.mxu0 0
        %532 = vmatpush1.bf16.msra.mxu0 0
        %533 = vmatprep.subr.bf16.mxu0 0
        %534 = vmatpush1.bf16.msra.mxu0 0
        %535 = vmatprep.subr.bf16.mxu0 0
        %536 = vmatpush1.bf16.msra.mxu0 0
        %537 = vmatprep.subr.bf16.mxu0 0
        %538 = vmatpush1.bf16.msra.mxu0 0
        %539 = vmatprep.subr.bf16.mxu0 0
        %540 = vmatpush1.bf16.msra.mxu0 0
        %541 = vmatprep.subr.bf16.mxu0 %v468
        %542 = vmatpush1.bf16.msra.mxu0 %v465
        %543 = vmatprep.subr.bf16.mxu0 %v431
        %544 = vmatpush1.bf16.msra.mxu0 %v430
        %545 = vmatprep.subr.bf16.mxu0 %v427
        %546 = vmatpush1.bf16.msra.mxu0 %v426
        %547 = vmatprep.subr.bf16.mxu0 0
        %548 = vmatpush2.bf16.msra.mxu0 0
        %549 = vmatprep.subr.bf16.mxu0 0
        %550 = vmatpush2.bf16.msra.mxu0 0
        %551 = vmatprep.subr.bf16.mxu0 0
        %552 = vmatpush2.bf16.msra.mxu0 0
        %553 = vmatprep.subr.bf16.mxu0 0
        %554 = vmatpush2.bf16.msra.mxu0 0
        %555 = vmatprep.subr.bf16.mxu0 0
        %556 = vmatpush2.bf16.msra.mxu0 0
        %557 = vmatprep.subr.bf16.mxu0 0
        %558 = vmatpush2.bf16.msra.mxu0 0
        %559 = vmatprep.subr.bf16.mxu0 0
        %560 = vmatpush2.bf16.msra.mxu0 0
        %561 = vmatprep.subr.bf16.mxu0 0
        %562 = vmatpush2.bf16.msra.mxu0 0
        %563 = vmatprep.mubr.bf16.mxu0 0
        %564 = vmatmul.mubr.bf16.gmra.mxu0 %v450
        %v565 = vpop.f32.mrf.mxu0
        %v566 = vadd.f32 0.0, %v565
        %v567 = vpop.f32.mrf.mxu0
        %v568 = vadd.f32 0.0, %v567
        %v569 = vpop.f32.mrf.mxu0
        %v570 = vadd.f32 0.0, %v569
        %v571 = vpop.f32.mrf.mxu0
        %v572 = vadd.f32 0.0, %v571
        %573 = vmatprep.mubr.bf16.mxu0 0
        %574 = vmatmul.mubr.bf16.gmra.mxu0 %v453
        %v575 = vpop.f32.mrf.mxu0
        %v576 = vadd.f32 0.0, %v575
        %v577 = vpop.f32.mrf.mxu0
        %v578 = vadd.f32 0.0, %v577
        %v579 = vpop.f32.mrf.mxu0
        %v580 = vadd.f32 0.0, %v579
        %v581 = vpop.f32.mrf.mxu0
        %v582 = vadd.f32 0.0, %v581
        %583 = vmatprep.mubr.bf16.mxu0 0
        %584 = vmatmul.mubr.bf16.gmra.mxu0 %v456
        %v585 = vpop.f32.mrf.mxu0
        %v586 = vadd.f32 0.0, %v585
        %v587 = vpop.f32.mrf.mxu0
        %v588 = vadd.f32 0.0, %v587
        %v589 = vpop.f32.mrf.mxu0
        %v590 = vpop.f32.mrf.mxu0
        %591 = vdwg.mxu0
        %v592 = vmax.f32 %v505, 0.0
        %v593 = vmax.f32 %v507, 0.0
        %v594 = vmax.f32 %v566, 0.0
        %v595 = vmax.f32 %v568, 0.0
        %v596 = vmax.f32 %v509, 0.0
        %v597 = vmax.f32 %v511, 0.0
        %v598 = vmax.f32 %v570, 0.0
        %v599 = vmax.f32 %v572, 0.0
        %v600 = vmax.f32 %v515, 0.0
        %v601 = vmax.f32 %v517, 0.0
        %v602 = vmax.f32 %v576, 0.0
        %v603 = vmax.f32 %v578, 0.0
        %v604 = vmax.f32 %v519, 0.0
        %v605 = vmax.f32 %v521, 0.0
        %v606 = vmax.f32 %v580, 0.0
        %v607 = vmax.f32 %v582, 0.0
        %v608 = vmax.f32 %v525, 0.0
        %v609 = vmax.f32 %v527, 0.0
        %v610 = vmax.f32 %v586, 0.0
        %v611 = vmax.f32 %v588, 0.0
        %s612 = scalar_lea.vmem %s1, 40
        %v613 = vld [vmem:[%s612] sm:$0xf]
        %v614 = vld [vmem:[%s612 + $0x4] sm:$0xf]
        %v615 = vld [vmem:[%s612 + $0x8] sm:$0xf]
        %v616 = vld [vmem:[%s612 + $0xc] sm:$0xf]
        %v617 = vld [vmem:[%s612 + $0x10] sm:$0xf]
        %v618 = vpack.c.bf16 %v596, %v592
        %v619 = vpack.c.bf16 %v597, %v593
        %v620 = vpack.c.bf16 %v598, %v594
        %v621 = vpack.c.bf16 %v599, %v595
        %v622 = vpack.c.bf16 %v604, %v600
        %v623 = vpack.c.bf16 %v605, %v601
        %v624 = vpack.c.bf16 %v606, %v602
        %v625 = vpack.c.bf16 %v607, %v603
        %v626 = vpack.c.bf16 %v608, %v608
        %v627 = vpack.c.bf16 %v609, %v609
        %v628 = vpack.c.bf16 %v610, %v610
        %v629 = vpack.c.bf16 %v611, %v611
        %v635 = vunpack.c.l.b16 %v613
        %v636 = vunpack.c.l.b16 %v614
        %v637 = vunpack.c.l.b16 %v615
        %v638 = vunpack.c.l.b16 %v616
        %v639 = vunpack.c.l.b16 %v617
        %v640 = vpack.c.b16 %v636, %v635
        %v641 = vpack.c.b16 %v638, %v637
        %v642 = vpack.c.b16 %v639, %v639
        %v644 = vsel %vm253, %v640, 0
        %v647 = vsel %vm253, %v641, 0
        %v650 = vsel %vm253, %v642, 0
        %v653 = vsel %vm263, %v626, 0
        %v656 = vsel %vm263, %v627, 0
        %v659 = vsel %vm263, %v628, 0
        %v662 = vsel %vm263, %v629, 0
        %664 = vmatprep.subr.bf16.mxu0 0
        %665 = vmatpush1.bf16.msra.mxu0 0
        %666 = vmatprep.subr.bf16.mxu0 0
        %667 = vmatpush1.bf16.msra.mxu0 0
        %668 = vmatprep.subr.bf16.mxu0 0
        %669 = vmatpush1.bf16.msra.mxu0 0
        %670 = vmatprep.subr.bf16.mxu0 0
        %671 = vmatpush1.bf16.msra.mxu0 0
        %672 = vmatprep.subr.bf16.mxu0 0
        %673 = vmatpush1.bf16.msra.mxu0 0
        %674 = vmatprep.subr.bf16.mxu0 %v656
        %675 = vmatpush1.bf16.msra.mxu0 %v653
        %676 = vmatprep.subr.bf16.mxu0 %v623
        %677 = vmatpush1.bf16.msra.mxu0 %v622
        %678 = vmatprep.subr.bf16.mxu0 %v619
        %679 = vmatpush1.bf16.msra.mxu0 %v618
        %680 = vmatprep.subr.bf16.mxu0 0
        %681 = vmatpush2.bf16.msra.mxu0 0
        %682 = vmatprep.subr.bf16.mxu0 0
        %683 = vmatpush2.bf16.msra.mxu0 0
        %684 = vmatprep.subr.bf16.mxu0 0
        %685 = vmatpush2.bf16.msra.mxu0 0
        %686 = vmatprep.subr.bf16.mxu0 0
        %687 = vmatpush2.bf16.msra.mxu0 0
        %688 = vmatprep.subr.bf16.mxu0 0
        %689 = vmatpush2.bf16.msra.mxu0 0
        %690 = vmatprep.subr.bf16.mxu0 0
        %691 = vmatpush2.bf16.msra.mxu0 0
        %692 = vmatprep.subr.bf16.mxu0 0
        %693 = vmatpush2.bf16.msra.mxu0 0
        %694 = vmatprep.subr.bf16.mxu0 0
        %695 = vmatpush2.bf16.msra.mxu0 0
        %696 = vmatprep.mubr.bf16.mxu0 0
        %697 = vmatmul.mubr.bf16.gmra.mxu0 %v644
        %v698 = vpop.f32.mrf.mxu0
        %v699 = vadd.f32 0.0, %v698
        %v700 = vpop.f32.mrf.mxu0
        %v701 = vadd.f32 0.0, %v700
        %v702 = vpop.f32.mrf.mxu0
        %v703 = vadd.f32 0.0, %v702
        %v704 = vpop.f32.mrf.mxu0
        %v705 = vadd.f32 0.0, %v704
        %706 = vmatprep.mubr.bf16.mxu0 0
        %707 = vmatmul.mubr.bf16.gmra.mxu0 %v647
        %v708 = vpop.f32.mrf.mxu0
        %v709 = vadd.f32 0.0, %v708
        %v710 = vpop.f32.mrf.mxu0
        %v711 = vadd.f32 0.0, %v710
        %v712 = vpop.f32.mrf.mxu0
        %v713 = vadd.f32 0.0, %v712
        %v714 = vpop.f32.mrf.mxu0
        %v715 = vadd.f32 0.0, %v714
        %716 = vmatprep.mubr.bf16.mxu0 0
        %717 = vmatmul.mubr.bf16.gmra.mxu0 %v650
        %v718 = vpop.f32.mrf.mxu0
        %v719 = vadd.f32 0.0, %v718
        %v720 = vpop.f32.mrf.mxu0
        %v721 = vadd.f32 0.0, %v720
        %v722 = vpop.f32.mrf.mxu0
        %v723 = vpop.f32.mrf.mxu0
        %724 = vdwg.mxu0
        %725 = vmatprep.subr.bf16.mxu0 0
        %726 = vmatpush1.bf16.msra.mxu0 0
        %727 = vmatprep.subr.bf16.mxu0 0
        %728 = vmatpush1.bf16.msra.mxu0 0
        %729 = vmatprep.subr.bf16.mxu0 0
        %730 = vmatpush1.bf16.msra.mxu0 0
        %731 = vmatprep.subr.bf16.mxu0 0
        %732 = vmatpush1.bf16.msra.mxu0 0
        %733 = vmatprep.subr.bf16.mxu0 0
        %734 = vmatpush1.bf16.msra.mxu0 0
        %735 = vmatprep.subr.bf16.mxu0 %v662
        %736 = vmatpush1.bf16.msra.mxu0 %v659
        %737 = vmatprep.subr.bf16.mxu0 %v625
        %738 = vmatpush1.bf16.msra.mxu0 %v624
        %739 = vmatprep.subr.bf16.mxu0 %v621
        %740 = vmatpush1.bf16.msra.mxu0 %v620
        %741 = vmatprep.subr.bf16.mxu0 0
        %742 = vmatpush2.bf16.msra.mxu0 0
        %743 = vmatprep.subr.bf16.mxu0 0
        %744 = vmatpush2.bf16.msra.mxu0 0
        %745 = vmatprep.subr.bf16.mxu0 0
        %746 = vmatpush2.bf16.msra.mxu0 0
        %747 = vmatprep.subr.bf16.mxu0 0
        %748 = vmatpush2.bf16.msra.mxu0 0
        %749 = vmatprep.subr.bf16.mxu0 0
        %750 = vmatpush2.bf16.msra.mxu0 0
        %751 = vmatprep.subr.bf16.mxu0 0
        %752 = vmatpush2.bf16.msra.mxu0 0
        %753 = vmatprep.subr.bf16.mxu0 0
        %754 = vmatpush2.bf16.msra.mxu0 0
        %755 = vmatprep.subr.bf16.mxu0 0
        %756 = vmatpush2.bf16.msra.mxu0 0
        %757 = vmatprep.mubr.bf16.mxu0 0
        %758 = vmatmul.mubr.bf16.gmra.mxu0 %v644
        %v759 = vpop.f32.mrf.mxu0
        %v760 = vadd.f32 0.0, %v759
        %v761 = vpop.f32.mrf.mxu0
        %v762 = vadd.f32 0.0, %v761
        %v763 = vpop.f32.mrf.mxu0
        %v764 = vadd.f32 0.0, %v763
        %v765 = vpop.f32.mrf.mxu0
        %v766 = vadd.f32 0.0, %v765
        %767 = vmatprep.mubr.bf16.mxu0 0
        %768 = vmatmul.mubr.bf16.gmra.mxu0 %v647
        %v769 = vpop.f32.mrf.mxu0
        %v770 = vadd.f32 0.0, %v769
        %v771 = vpop.f32.mrf.mxu0
        %v772 = vadd.f32 0.0, %v771
        %v773 = vpop.f32.mrf.mxu0
        %v774 = vadd.f32 0.0, %v773
        %v775 = vpop.f32.mrf.mxu0
        %v776 = vadd.f32 0.0, %v775
        %777 = vmatprep.mubr.bf16.mxu0 0
        %778 = vmatmul.mubr.bf16.gmra.mxu0 %v650
        %v779 = vpop.f32.mrf.mxu0
        %v780 = vadd.f32 0.0, %v779
        %v781 = vpop.f32.mrf.mxu0
        %v782 = vadd.f32 0.0, %v781
        %v783 = vpop.f32.mrf.mxu0
        %v784 = vpop.f32.mrf.mxu0
        %785 = vdwg.mxu0
        %v786 = vsub.f32 %v203, %v699
        %v787 = vsub.f32 %v204, %v701
        %v788 = vsub.f32 %v205, %v760
        %v789 = vsub.f32 %v206, %v762
        %v790 = vsub.f32 %v207, %v703
        %v791 = vsub.f32 %v208, %v705
        %v792 = vsub.f32 %v209, %v764
        %v793 = vsub.f32 %v210, %v766
        %v794 = vsub.f32 %v211, %v709
        %v795 = vsub.f32 %v212, %v711
        %v796 = vsub.f32 %v213, %v770
        %v797 = vsub.f32 %v214, %v772
        %v798 = vsub.f32 %v215, %v713
        %v799 = vsub.f32 %v216, %v715
        %v800 = vsub.f32 %v217, %v774
        %v801 = vsub.f32 %v218, %v776
        %v802 = vsub.f32 %v219, %v719
        %v803 = vsub.f32 %v220, %v721
        %v804 = vsub.f32 %v221, %v780
        %v805 = vsub.f32 %v222, %v782
        %v806 = vpack.c.bf16 %v790, %v786
        %v807 = vpack.c.bf16 %v791, %v787
        %v808 = vpack.c.bf16 %v792, %v788
        %v809 = vpack.c.bf16 %v793, %v789
        %v810 = vpack.c.bf16 %v798, %v794
        %v811 = vpack.c.bf16 %v799, %v795
        %v812 = vpack.c.bf16 %v800, %v796
        %v813 = vpack.c.bf16 %v801, %v797
        %v814 = vpack.c.bf16 %v802, %v802
        %v815 = vpack.c.bf16 %v803, %v803
        %v816 = vpack.c.bf16 %v804, %v804
        %v817 = vpack.c.bf16 %v805, %v805
        %v819 = vsel %vm263, %v814, 0
        %v822 = vsel %vm263, %v815, 0
        %v825 = vsel %vm263, %v816, 0
        %v828 = vsel %vm263, %v817, 0
        %830 = vmatprep.subr.bf16.mxu0 0
        %831 = vmatpush1.bf16.msra.mxu0 0
        %832 = vmatprep.subr.bf16.mxu0 0
        %833 = vmatpush1.bf16.msra.mxu0 0
        %834 = vmatprep.subr.bf16.mxu0 0
        %835 = vmatpush1.bf16.msra.mxu0 0
        %836 = vmatprep.subr.bf16.mxu0 0
        %837 = vmatpush1.bf16.msra.mxu0 0
        %838 = vmatprep.subr.bf16.mxu0 0
        %839 = vmatpush1.bf16.msra.mxu0 0
        %840 = vmatprep.subr.bf16.mxu0 %v822
        %841 = vmatpush1.bf16.msra.mxu0 %v819
        %842 = vmatprep.subr.bf16.mxu0 %v811
        %843 = vmatpush1.bf16.msra.mxu0 %v810
        %844 = vmatprep.subr.bf16.mxu0 %v807
        %845 = vmatpush1.bf16.msra.mxu0 %v806
        %846 = vmatprep.subr.bf16.mxu0 0
        %847 = vmatpush2.bf16.msra.mxu0 0
        %848 = vmatprep.subr.bf16.mxu0 0
        %849 = vmatpush2.bf16.msra.mxu0 0
        %850 = vmatprep.subr.bf16.mxu0 0
        %851 = vmatpush2.bf16.msra.mxu0 0
        %852 = vmatprep.subr.bf16.mxu0 0
        %853 = vmatpush2.bf16.msra.mxu0 0
        %854 = vmatprep.subr.bf16.mxu0 0
        %855 = vmatpush2.bf16.msra.mxu0 0
        %856 = vmatprep.subr.bf16.mxu0 0
        %857 = vmatpush2.bf16.msra.mxu0 0
        %858 = vmatprep.subr.bf16.mxu0 0
        %859 = vmatpush2.bf16.msra.mxu0 0
        %860 = vmatprep.subr.bf16.mxu0 0
        %861 = vmatpush2.bf16.msra.mxu0 0
        %862 = vmatprep.mubr.bf16.mxu0 0
        %863 = vmatmul.mubr.bf16.gmra.mxu0 %v255
        %v864 = vpop.f32.mrf.mxu0
        %v865 = vadd.f32 0.0, %v864
        %v866 = vpop.f32.mrf.mxu0
        %v867 = vadd.f32 0.0, %v866
        %v868 = vpop.f32.mrf.mxu0
        %v869 = vadd.f32 0.0, %v868
        %v870 = vpop.f32.mrf.mxu0
        %v871 = vadd.f32 0.0, %v870
        %872 = vmatprep.mubr.bf16.mxu0 0
        %873 = vmatmul.mubr.bf16.gmra.mxu0 %v258
        %v874 = vpop.f32.mrf.mxu0
        %v875 = vadd.f32 0.0, %v874
        %v876 = vpop.f32.mrf.mxu0
        %v877 = vadd.f32 0.0, %v876
        %v878 = vpop.f32.mrf.mxu0
        %v879 = vadd.f32 0.0, %v878
        %v880 = vpop.f32.mrf.mxu0
        %v881 = vadd.f32 0.0, %v880
        %882 = vmatprep.mubr.bf16.mxu0 0
        %883 = vmatmul.mubr.bf16.gmra.mxu0 %v261
        %v884 = vpop.f32.mrf.mxu0
        %v885 = vadd.f32 0.0, %v884
        %v886 = vpop.f32.mrf.mxu0
        %v887 = vadd.f32 0.0, %v886
        %v888 = vpop.f32.mrf.mxu0
        %v889 = vpop.f32.mrf.mxu0
        %890 = vdwg.mxu0
        %891 = vmatprep.subr.bf16.mxu0 0
        %892 = vmatpush1.bf16.msra.mxu0 0
        %893 = vmatprep.subr.bf16.mxu0 0
        %894 = vmatpush1.bf16.msra.mxu0 0
        %895 = vmatprep.subr.bf16.mxu0 0
        %896 = vmatpush1.bf16.msra.mxu0 0
        %897 = vmatprep.subr.bf16.mxu0 0
        %898 = vmatpush1.bf16.msra.mxu0 0
        %899 = vmatprep.subr.bf16.mxu0 0
        %900 = vmatpush1.bf16.msra.mxu0 0
        %901 = vmatprep.subr.bf16.mxu0 %v828
        %902 = vmatpush1.bf16.msra.mxu0 %v825
        %903 = vmatprep.subr.bf16.mxu0 %v813
        %904 = vmatpush1.bf16.msra.mxu0 %v812
        %905 = vmatprep.subr.bf16.mxu0 %v809
        %906 = vmatpush1.bf16.msra.mxu0 %v808
        %907 = vmatprep.subr.bf16.mxu0 0
        %908 = vmatpush2.bf16.msra.mxu0 0
        %909 = vmatprep.subr.bf16.mxu0 0
        %910 = vmatpush2.bf16.msra.mxu0 0
        %911 = vmatprep.subr.bf16.mxu0 0
        %912 = vmatpush2.bf16.msra.mxu0 0
        %913 = vmatprep.subr.bf16.mxu0 0
        %914 = vmatpush2.bf16.msra.mxu0 0
        %915 = vmatprep.subr.bf16.mxu0 0
        %916 = vmatpush2.bf16.msra.mxu0 0
        %917 = vmatprep.subr.bf16.mxu0 0
        %918 = vmatpush2.bf16.msra.mxu0 0
        %919 = vmatprep.subr.bf16.mxu0 0
        %920 = vmatpush2.bf16.msra.mxu0 0
        %921 = vmatprep.subr.bf16.mxu0 0
        %922 = vmatpush2.bf16.msra.mxu0 0
        %923 = vmatprep.mubr.bf16.mxu0 0
        %924 = vmatmul.mubr.bf16.gmra.mxu0 %v255
        %v925 = vpop.f32.mrf.mxu0
        %v926 = vadd.f32 0.0, %v925
        %v927 = vpop.f32.mrf.mxu0
        %v928 = vadd.f32 0.0, %v927
        %v929 = vpop.f32.mrf.mxu0
        %v930 = vadd.f32 0.0, %v929
        %v931 = vpop.f32.mrf.mxu0
        %v932 = vadd.f32 0.0, %v931
        %933 = vmatprep.mubr.bf16.mxu0 0
        %934 = vmatmul.mubr.bf16.gmra.mxu0 %v258
        %v935 = vpop.f32.mrf.mxu0
        %v936 = vadd.f32 0.0, %v935
        %v937 = vpop.f32.mrf.mxu0
        %v938 = vadd.f32 0.0, %v937
        %v939 = vpop.f32.mrf.mxu0
        %v940 = vadd.f32 0.0, %v939
        %v941 = vpop.f32.mrf.mxu0
        %v942 = vadd.f32 0.0, %v941
        %943 = vmatprep.mubr.bf16.mxu0 0
        %944 = vmatmul.mubr.bf16.gmra.mxu0 %v261
        %v945 = vpop.f32.mrf.mxu0
        %v946 = vadd.f32 0.0, %v945
        %v947 = vpop.f32.mrf.mxu0
        %v948 = vadd.f32 0.0, %v947
        %v949 = vpop.f32.mrf.mxu0
        %v950 = vpop.f32.mrf.mxu0
        %951 = vdwg.mxu0
        %v952 = vmax.f32 %v865, 0.0
        %v953 = vmax.f32 %v867, 0.0
        %v954 = vmax.f32 %v926, 0.0
        %v955 = vmax.f32 %v928, 0.0
        %v956 = vmax.f32 %v869, 0.0
        %v957 = vmax.f32 %v871, 0.0
        %v958 = vmax.f32 %v930, 0.0
        %v959 = vmax.f32 %v932, 0.0
        %v960 = vmax.f32 %v875, 0.0
        %v961 = vmax.f32 %v877, 0.0
        %v962 = vmax.f32 %v936, 0.0
        %v963 = vmax.f32 %v938, 0.0
        %v964 = vmax.f32 %v879, 0.0
        %v965 = vmax.f32 %v881, 0.0
        %v966 = vmax.f32 %v940, 0.0
        %v967 = vmax.f32 %v942, 0.0
        %v968 = vmax.f32 %v885, 0.0
        %v969 = vmax.f32 %v887, 0.0
        %v970 = vmax.f32 %v946, 0.0
        %v971 = vmax.f32 %v948, 0.0
        %v972 = vpack.c.bf16 %v956, %v952
        %v973 = vpack.c.bf16 %v957, %v953
        %v974 = vpack.c.bf16 %v958, %v954
        %v975 = vpack.c.bf16 %v959, %v955
        %v976 = vpack.c.bf16 %v964, %v960
        %v977 = vpack.c.bf16 %v965, %v961
        %v978 = vpack.c.bf16 %v966, %v962
        %v979 = vpack.c.bf16 %v967, %v963
        %v980 = vpack.c.bf16 %v968, %v968
        %v981 = vpack.c.bf16 %v969, %v969
        %v982 = vpack.c.bf16 %v970, %v970
        %v983 = vpack.c.bf16 %v971, %v971
        %v985 = vsel %vm263, %v980, 0
        %v988 = vsel %vm263, %v981, 0
        %v991 = vsel %vm263, %v982, 0
        %v994 = vsel %vm263, %v983, 0
        %996 = vmatprep.subr.bf16.mxu0 0
        %997 = vmatpush1.bf16.msra.mxu0 0
        %998 = vmatprep.subr.bf16.mxu0 0
        %999 = vmatpush1.bf16.msra.mxu0 0
        %1000 = vmatprep.subr.bf16.mxu0 0
        %1001 = vmatpush1.bf16.msra.mxu0 0
        %1002 = vmatprep.subr.bf16.mxu0 0
        %1003 = vmatpush1.bf16.msra.mxu0 0
        %1004 = vmatprep.subr.bf16.mxu0 0
        %1005 = vmatpush1.bf16.msra.mxu0 0
        %1006 = vmatprep.subr.bf16.mxu0 %v988
        %1007 = vmatpush1.bf16.msra.mxu0 %v985
        %1008 = vmatprep.subr.bf16.mxu0 %v977
        %1009 = vmatpush1.bf16.msra.mxu0 %v976
        %1010 = vmatprep.subr.bf16.mxu0 %v973
        %1011 = vmatpush1.bf16.msra.mxu0 %v972
        %1012 = vmatprep.subr.bf16.mxu0 0
        %1013 = vmatpush2.bf16.msra.mxu0 0
        %1014 = vmatprep.subr.bf16.mxu0 0
        %1015 = vmatpush2.bf16.msra.mxu0 0
        %1016 = vmatprep.subr.bf16.mxu0 0
        %1017 = vmatpush2.bf16.msra.mxu0 0
        %1018 = vmatprep.subr.bf16.mxu0 0
        %1019 = vmatpush2.bf16.msra.mxu0 0
        %1020 = vmatprep.subr.bf16.mxu0 0
        %1021 = vmatpush2.bf16.msra.mxu0 0
        %1022 = vmatprep.subr.bf16.mxu0 0
        %1023 = vmatpush2.bf16.msra.mxu0 0
        %1024 = vmatprep.subr.bf16.mxu0 0
        %1025 = vmatpush2.bf16.msra.mxu0 0
        %1026 = vmatprep.subr.bf16.mxu0 0
        %1027 = vmatpush2.bf16.msra.mxu0 0
        %1028 = vmatprep.mubr.bf16.mxu0 0
        %1029 = vmatmul.mubr.bf16.gmra.mxu0 %v450
        %v1030 = vpop.f32.mrf.mxu0
        %v1031 = vadd.f32 0.0, %v1030
        %v1032 = vpop.f32.mrf.mxu0
        %v1033 = vadd.f32 0.0, %v1032
        %v1034 = vpop.f32.mrf.mxu0
        %v1035 = vadd.f32 0.0, %v1034
        %v1036 = vpop.f32.mrf.mxu0
        %v1037 = vadd.f32 0.0, %v1036
        %1038 = vmatprep.mubr.bf16.mxu0 0
        %1039 = vmatmul.mubr.bf16.gmra.mxu0 %v453
        %v1040 = vpop.f32.mrf.mxu0
        %v1041 = vadd.f32 0.0, %v1040
        %v1042 = vpop.f32.mrf.mxu0
        %v1043 = vadd.f32 0.0, %v1042
        %v1044 = vpop.f32.mrf.mxu0
        %v1045 = vadd.f32 0.0, %v1044
        %v1046 = vpop.f32.mrf.mxu0
        %v1047 = vadd.f32 0.0, %v1046
        %1048 = vmatprep.mubr.bf16.mxu0 0
        %1049 = vmatmul.mubr.bf16.gmra.mxu0 %v456
        %v1050 = vpop.f32.mrf.mxu0
        %v1051 = vadd.f32 0.0, %v1050
        %v1052 = vpop.f32.mrf.mxu0
        %v1053 = vadd.f32 0.0, %v1052
        %v1054 = vpop.f32.mrf.mxu0
        %v1055 = vpop.f32.mrf.mxu0
        %1056 = vdwg.mxu0
        %1057 = vmatprep.subr.bf16.mxu0 0
        %1058 = vmatpush1.bf16.msra.mxu0 0
        %1059 = vmatprep.subr.bf16.mxu0 0
        %1060 = vmatpush1.bf16.msra.mxu0 0
        %1061 = vmatprep.subr.bf16.mxu0 0
        %1062 = vmatpush1.bf16.msra.mxu0 0
        %1063 = vmatprep.subr.bf16.mxu0 0
        %1064 = vmatpush1.bf16.msra.mxu0 0
        %1065 = vmatprep.subr.bf16.mxu0 0
        %1066 = vmatpush1.bf16.msra.mxu0 0
        %1067 = vmatprep.subr.bf16.mxu0 %v994
        %1068 = vmatpush1.bf16.msra.mxu0 %v991
        %1069 = vmatprep.subr.bf16.mxu0 %v979
        %1070 = vmatpush1.bf16.msra.mxu0 %v978
        %1071 = vmatprep.subr.bf16.mxu0 %v975
        %1072 = vmatpush1.bf16.msra.mxu0 %v974
        %1073 = vmatprep.subr.bf16.mxu0 0
        %1074 = vmatpush2.bf16.msra.mxu0 0
        %1075 = vmatprep.subr.bf16.mxu0 0
        %1076 = vmatpush2.bf16.msra.mxu0 0
        %1077 = vmatprep.subr.bf16.mxu0 0
        %1078 = vmatpush2.bf16.msra.mxu0 0
        %1079 = vmatprep.subr.bf16.mxu0 0
        %1080 = vmatpush2.bf16.msra.mxu0 0
        %1081 = vmatprep.subr.bf16.mxu0 0
        %1082 = vmatpush2.bf16.msra.mxu0 0
        %1083 = vmatprep.subr.bf16.mxu0 0
        %1084 = vmatpush2.bf16.msra.mxu0 0
        %1085 = vmatprep.subr.bf16.mxu0 0
        %1086 = vmatpush2.bf16.msra.mxu0 0
        %1087 = vmatprep.subr.bf16.mxu0 0
        %1088 = vmatpush2.bf16.msra.mxu0 0
        %1089 = vmatprep.mubr.bf16.mxu0 0
        %1090 = vmatmul.mubr.bf16.gmra.mxu0 %v450
        %v1091 = vpop.f32.mrf.mxu0
        %v1092 = vadd.f32 0.0, %v1091
        %v1093 = vpop.f32.mrf.mxu0
        %v1094 = vadd.f32 0.0, %v1093
        %v1095 = vpop.f32.mrf.mxu0
        %v1096 = vadd.f32 0.0, %v1095
        %v1097 = vpop.f32.mrf.mxu0
        %v1098 = vadd.f32 0.0, %v1097
        %1099 = vmatprep.mubr.bf16.mxu0 0
        %1100 = vmatmul.mubr.bf16.gmra.mxu0 %v453
        %v1101 = vpop.f32.mrf.mxu0
        %v1102 = vadd.f32 0.0, %v1101
        %v1103 = vpop.f32.mrf.mxu0
        %v1104 = vadd.f32 0.0, %v1103
        %v1105 = vpop.f32.mrf.mxu0
        %v1106 = vadd.f32 0.0, %v1105
        %v1107 = vpop.f32.mrf.mxu0
        %v1108 = vadd.f32 0.0, %v1107
        %1109 = vmatprep.mubr.bf16.mxu0 0
        %1110 = vmatmul.mubr.bf16.gmra.mxu0 %v456
        %v1111 = vpop.f32.mrf.mxu0
        %v1112 = vadd.f32 0.0, %v1111
        %v1113 = vpop.f32.mrf.mxu0
        %v1114 = vadd.f32 0.0, %v1113
        %v1115 = vpop.f32.mrf.mxu0
        %v1116 = vpop.f32.mrf.mxu0
        %1117 = vdwg.mxu0
        %v1118 = vmax.f32 %v1031, 0.0
        %v1119 = vmax.f32 %v1033, 0.0
        %v1120 = vmax.f32 %v1092, 0.0
        %v1121 = vmax.f32 %v1094, 0.0
        %v1122 = vmax.f32 %v1035, 0.0
        %v1123 = vmax.f32 %v1037, 0.0
        %v1124 = vmax.f32 %v1096, 0.0
        %v1125 = vmax.f32 %v1098, 0.0
        %v1126 = vmax.f32 %v1041, 0.0
        %v1127 = vmax.f32 %v1043, 0.0
        %v1128 = vmax.f32 %v1102, 0.0
        %v1129 = vmax.f32 %v1104, 0.0
        %v1130 = vmax.f32 %v1045, 0.0
        %v1131 = vmax.f32 %v1047, 0.0
        %v1132 = vmax.f32 %v1106, 0.0
        %v1133 = vmax.f32 %v1108, 0.0
        %v1134 = vmax.f32 %v1051, 0.0
        %v1135 = vmax.f32 %v1053, 0.0
        %v1136 = vmax.f32 %v1112, 0.0
        %v1137 = vmax.f32 %v1114, 0.0
        %v1138 = vpack.c.bf16 %v1122, %v1118
        %v1139 = vpack.c.bf16 %v1123, %v1119
        %v1140 = vpack.c.bf16 %v1124, %v1120
        %v1141 = vpack.c.bf16 %v1125, %v1121
        %v1142 = vpack.c.bf16 %v1130, %v1126
        %v1143 = vpack.c.bf16 %v1131, %v1127
        %v1144 = vpack.c.bf16 %v1132, %v1128
        %v1145 = vpack.c.bf16 %v1133, %v1129
        %v1146 = vpack.c.bf16 %v1134, %v1134
        %v1147 = vpack.c.bf16 %v1135, %v1135
        %v1148 = vpack.c.bf16 %v1136, %v1136
        %v1149 = vpack.c.bf16 %v1137, %v1137
        %v1151 = vsel %vm263, %v1146, 0
        %v1154 = vsel %vm263, %v1147, 0
        %v1157 = vsel %vm263, %v1148, 0
        %v1160 = vsel %vm263, %v1149, 0
        %1162 = vmatprep.subr.bf16.mxu0 0
        %1163 = vmatpush1.bf16.msra.mxu0 0
        %1164 = vmatprep.subr.bf16.mxu0 0
        %1165 = vmatpush1.bf16.msra.mxu0 0
        %1166 = vmatprep.subr.bf16.mxu0 0
        %1167 = vmatpush1.bf16.msra.mxu0 0
        %1168 = vmatprep.subr.bf16.mxu0 0
        %1169 = vmatpush1.bf16.msra.mxu0 0
        %1170 = vmatprep.subr.bf16.mxu0 0
        %1171 = vmatpush1.bf16.msra.mxu0 0
        %1172 = vmatprep.subr.bf16.mxu0 %v1154
        %1173 = vmatpush1.bf16.msra.mxu0 %v1151
        %1174 = vmatprep.subr.bf16.mxu0 %v1143
        %1175 = vmatpush1.bf16.msra.mxu0 %v1142
        %1176 = vmatprep.subr.bf16.mxu0 %v1139
        %1177 = vmatpush1.bf16.msra.mxu0 %v1138
        %1178 = vmatprep.subr.bf16.mxu0 0
        %1179 = vmatpush2.bf16.msra.mxu0 0
        %1180 = vmatprep.subr.bf16.mxu0 0
        %1181 = vmatpush2.bf16.msra.mxu0 0
        %1182 = vmatprep.subr.bf16.mxu0 0
        %1183 = vmatpush2.bf16.msra.mxu0 0
        %1184 = vmatprep.subr.bf16.mxu0 0
        %1185 = vmatpush2.bf16.msra.mxu0 0
        %1186 = vmatprep.subr.bf16.mxu0 0
        %1187 = vmatpush2.bf16.msra.mxu0 0
        %1188 = vmatprep.subr.bf16.mxu0 0
        %1189 = vmatpush2.bf16.msra.mxu0 0
        %1190 = vmatprep.subr.bf16.mxu0 0
        %1191 = vmatpush2.bf16.msra.mxu0 0
        %1192 = vmatprep.subr.bf16.mxu0 0
        %1193 = vmatpush2.bf16.msra.mxu0 0
        %1194 = vmatprep.mubr.bf16.mxu0 0
        %1195 = vmatmul.mubr.bf16.gmra.mxu0 %v644
        %v1196 = vpop.f32.mrf.mxu0
        %v1197 = vadd.f32 0.0, %v1196
        %v1198 = vpop.f32.mrf.mxu0
        %v1199 = vadd.f32 0.0, %v1198
        %v1200 = vpop.f32.mrf.mxu0
        %v1201 = vadd.f32 0.0, %v1200
        %v1202 = vpop.f32.mrf.mxu0
        %v1203 = vadd.f32 0.0, %v1202
        %1204 = vmatprep.mubr.bf16.mxu0 0
        %1205 = vmatmul.mubr.bf16.gmra.mxu0 %v647
        %v1206 = vpop.f32.mrf.mxu0
        %v1207 = vadd.f32 0.0, %v1206
        %v1208 = vpop.f32.mrf.mxu0
        %v1209 = vadd.f32 0.0, %v1208
        %v1210 = vpop.f32.mrf.mxu0
        %v1211 = vadd.f32 0.0, %v1210
        %v1212 = vpop.f32.mrf.mxu0
        %v1213 = vadd.f32 0.0, %v1212
        %1214 = vmatprep.mubr.bf16.mxu0 0
        %1215 = vmatmul.mubr.bf16.gmra.mxu0 %v650
        %v1216 = vpop.f32.mrf.mxu0
        %v1217 = vadd.f32 0.0, %v1216
        %v1218 = vpop.f32.mrf.mxu0
        %v1219 = vadd.f32 0.0, %v1218
        %v1220 = vpop.f32.mrf.mxu0
        %v1221 = vpop.f32.mrf.mxu0
        %1222 = vdwg.mxu0
        %1223 = vmatprep.subr.bf16.mxu0 0
        %1224 = vmatpush1.bf16.msra.mxu0 0
        %1225 = vmatprep.subr.bf16.mxu0 0
        %1226 = vmatpush1.bf16.msra.mxu0 0
        %1227 = vmatprep.subr.bf16.mxu0 0
        %1228 = vmatpush1.bf16.msra.mxu0 0
        %1229 = vmatprep.subr.bf16.mxu0 0
        %1230 = vmatpush1.bf16.msra.mxu0 0
        %1231 = vmatprep.subr.bf16.mxu0 0
        %1232 = vmatpush1.bf16.msra.mxu0 0
        %1233 = vmatprep.subr.bf16.mxu0 %v1160
        %1234 = vmatpush1.bf16.msra.mxu0 %v1157
        %1235 = vmatprep.subr.bf16.mxu0 %v1145
        %1236 = vmatpush1.bf16.msra.mxu0 %v1144
        %1237 = vmatprep.subr.bf16.mxu0 %v1141
        %1238 = vmatpush1.bf16.msra.mxu0 %v1140
        %1239 = vmatprep.subr.bf16.mxu0 0
        %1240 = vmatpush2.bf16.msra.mxu0 0
        %1241 = vmatprep.subr.bf16.mxu0 0
        %1242 = vmatpush2.bf16.msra.mxu0 0
        %1243 = vmatprep.subr.bf16.mxu0 0
        %1244 = vmatpush2.bf16.msra.mxu0 0
        %1245 = vmatprep.subr.bf16.mxu0 0
        %1246 = vmatpush2.bf16.msra.mxu0 0
        %1247 = vmatprep.subr.bf16.mxu0 0
        %1248 = vmatpush2.bf16.msra.mxu0 0
        %1249 = vmatprep.subr.bf16.mxu0 0
        %1250 = vmatpush2.bf16.msra.mxu0 0
        %1251 = vmatprep.subr.bf16.mxu0 0
        %1252 = vmatpush2.bf16.msra.mxu0 0
        %1253 = vmatprep.subr.bf16.mxu0 0
        %1254 = vmatpush2.bf16.msra.mxu0 0
        %1255 = vmatprep.mubr.bf16.mxu0 0
        %1256 = vmatmul.mubr.bf16.gmra.mxu0 %v644
        %v1257 = vpop.f32.mrf.mxu0
        %v1258 = vadd.f32 0.0, %v1257
        %v1259 = vpop.f32.mrf.mxu0
        %v1260 = vadd.f32 0.0, %v1259
        %v1261 = vpop.f32.mrf.mxu0
        %v1262 = vadd.f32 0.0, %v1261
        %v1263 = vpop.f32.mrf.mxu0
        %v1264 = vadd.f32 0.0, %v1263
        %1265 = vmatprep.mubr.bf16.mxu0 0
        %1266 = vmatmul.mubr.bf16.gmra.mxu0 %v647
        %v1267 = vpop.f32.mrf.mxu0
        %v1268 = vadd.f32 0.0, %v1267
        %v1269 = vpop.f32.mrf.mxu0
        %v1270 = vadd.f32 0.0, %v1269
        %v1271 = vpop.f32.mrf.mxu0
        %v1272 = vadd.f32 0.0, %v1271
        %v1273 = vpop.f32.mrf.mxu0
        %v1274 = vadd.f32 0.0, %v1273
        %1275 = vmatprep.mubr.bf16.mxu0 0
        %1276 = vmatmul.mubr.bf16.gmra.mxu0 %v650
        %v1277 = vpop.f32.mrf.mxu0
        %v1278 = vadd.f32 0.0, %v1277
        %v1279 = vpop.f32.mrf.mxu0
        %v1280 = vadd.f32 0.0, %v1279
        %v1281 = vpop.f32.mrf.mxu0
        %v1282 = vpop.f32.mrf.mxu0
        %1283 = vdwg.mxu0
        %v1284 = vsub.f32 %v786, %v1197
        %v1285 = vsub.f32 %v787, %v1199
        %v1286 = vsub.f32 %v788, %v1258
        %v1287 = vsub.f32 %v789, %v1260
        %v1288 = vsub.f32 %v790, %v1201
        %v1289 = vsub.f32 %v791, %v1203
        %v1290 = vsub.f32 %v792, %v1262
        %v1291 = vsub.f32 %v793, %v1264
        %v1292 = vsub.f32 %v794, %v1207
        %v1293 = vsub.f32 %v795, %v1209
        %v1294 = vsub.f32 %v796, %v1268
        %v1295 = vsub.f32 %v797, %v1270
        %v1296 = vsub.f32 %v798, %v1211
        %v1297 = vsub.f32 %v799, %v1213
        %v1298 = vsub.f32 %v800, %v1272
        %v1299 = vsub.f32 %v801, %v1274
        %v1300 = vsub.f32 %v802, %v1217
        %v1301 = vsub.f32 %v803, %v1219
        %v1302 = vsub.f32 %v804, %v1278
        %v1303 = vsub.f32 %v805, %v1280
        %s1304 = scalar_lea.vmem %s1, 60
        %v1305 = vld [vmem:[%s1304] sm:$0xf]
        %v1306 = vld [vmem:[%s1304 + $0x4] sm:$0xf]
        %v1307 = vld [vmem:[%s1304 + $0x8] sm:$0xf]
        %v1308 = vld [vmem:[%s1304 + $0xc] sm:$0xf]
        %v1309 = vld [vmem:[%s1304 + $0x10] sm:$0xf]
        %v1310 = vpack.c.bf16 %v1288, %v1284
        %v1311 = vpack.c.bf16 %v1289, %v1285
        %v1312 = vpack.c.bf16 %v1290, %v1286
        %v1313 = vpack.c.bf16 %v1291, %v1287
        %v1314 = vpack.c.bf16 %v1296, %v1292
        %v1315 = vpack.c.bf16 %v1297, %v1293
        %v1316 = vpack.c.bf16 %v1298, %v1294
        %v1317 = vpack.c.bf16 %v1299, %v1295
        %v1318 = vpack.c.bf16 %v1300, %v1300
        %v1319 = vpack.c.bf16 %v1301, %v1301
        %v1320 = vpack.c.bf16 %v1302, %v1302
        %v1321 = vpack.c.bf16 %v1303, %v1303
        %v1327 = vunpack.c.l.b16 %v1305
        %v1328 = vunpack.c.l.b16 %v1306
        %v1329 = vunpack.c.l.b16 %v1307
        %v1330 = vunpack.c.l.b16 %v1308
        %v1331 = vunpack.c.l.b16 %v1309
        %v1332 = vpack.c.b16 %v1328, %v1327
        %v1333 = vpack.c.b16 %v1330, %v1329
        %v1334 = vpack.c.b16 %v1331, %v1331
        %v1336 = vsel %vm253, %v1332, 0
        %v1339 = vsel %vm253, %v1333, 0
        %v1342 = vsel %vm253, %v1334, 0
        %v1345 = vsel %vm263, %v1318, 0
        %v1348 = vsel %vm263, %v1319, 0
        %v1351 = vsel %vm263, %v1320, 0
        %v1354 = vsel %vm263, %v1321, 0
        %1356 = vmatprep.subr.bf16.mxu0 0
        %1357 = vmatpush1.bf16.msra.mxu0 0
        %1358 = vmatprep.subr.bf16.mxu0 0
        %1359 = vmatpush1.bf16.msra.mxu0 0
        %1360 = vmatprep.subr.bf16.mxu0 0
        %1361 = vmatpush1.bf16.msra.mxu0 0
        %1362 = vmatprep.subr.bf16.mxu0 0
        %1363 = vmatpush1.bf16.msra.mxu0 0
        %1364 = vmatprep.subr.bf16.mxu0 0
        %1365 = vmatpush1.bf16.msra.mxu0 0
        %1366 = vmatprep.subr.bf16.mxu0 %v1348
        %1367 = vmatpush1.bf16.msra.mxu0 %v1345
        %1368 = vmatprep.subr.bf16.mxu0 %v1315
        %1369 = vmatpush1.bf16.msra.mxu0 %v1314
        %1370 = vmatprep.subr.bf16.mxu0 %v1311
        %1371 = vmatpush1.bf16.msra.mxu0 %v1310
        %1372 = vmatprep.subr.bf16.mxu0 0
        %1373 = vmatpush2.bf16.msra.mxu0 0
        %1374 = vmatprep.subr.bf16.mxu0 0
        %1375 = vmatpush2.bf16.msra.mxu0 0
        %1376 = vmatprep.subr.bf16.mxu0 0
        %1377 = vmatpush2.bf16.msra.mxu0 0
        %1378 = vmatprep.subr.bf16.mxu0 0
        %1379 = vmatpush2.bf16.msra.mxu0 0
        %1380 = vmatprep.subr.bf16.mxu0 0
        %1381 = vmatpush2.bf16.msra.mxu0 0
        %1382 = vmatprep.subr.bf16.mxu0 0
        %1383 = vmatpush2.bf16.msra.mxu0 0
        %1384 = vmatprep.subr.bf16.mxu0 0
        %1385 = vmatpush2.bf16.msra.mxu0 0
        %1386 = vmatprep.subr.bf16.mxu0 0
        %1387 = vmatpush2.bf16.msra.mxu0 0
        %1388 = vmatprep.mubr.bf16.mxu0 0
        %1389 = vmatmul.mubr.bf16.gmra.mxu0 %v1336
        %v1390 = vpop.f32.mrf.mxu0
        %v1391 = vadd.f32 0.0, %v1390
        %v1392 = vpop.f32.mrf.mxu0
        %v1393 = vadd.f32 0.0, %v1392
        %v1394 = vpop.f32.mrf.mxu0
        %v1395 = vadd.f32 0.0, %v1394
        %v1396 = vpop.f32.mrf.mxu0
        %v1397 = vadd.f32 0.0, %v1396
        %1398 = vmatprep.mubr.bf16.mxu0 0
        %1399 = vmatmul.mubr.bf16.gmra.mxu0 %v1339
        %v1400 = vpop.f32.mrf.mxu0
        %v1401 = vadd.f32 0.0, %v1400
        %v1402 = vpop.f32.mrf.mxu0
        %v1403 = vadd.f32 0.0, %v1402
        %v1404 = vpop.f32.mrf.mxu0
        %v1405 = vadd.f32 0.0, %v1404
        %v1406 = vpop.f32.mrf.mxu0
        %v1407 = vadd.f32 0.0, %v1406
        %1408 = vmatprep.mubr.bf16.mxu0 0
        %1409 = vmatmul.mubr.bf16.gmra.mxu0 %v1342
        %v1410 = vpop.f32.mrf.mxu0
        %v1411 = vadd.f32 0.0, %v1410
        %v1412 = vpop.f32.mrf.mxu0
        %v1413 = vadd.f32 0.0, %v1412
        %v1414 = vpop.f32.mrf.mxu0
        %v1415 = vpop.f32.mrf.mxu0
        %1416 = vdwg.mxu0
        %1417 = vmatprep.subr.bf16.mxu0 0
        %1418 = vmatpush1.bf16.msra.mxu0 0
        %1419 = vmatprep.subr.bf16.mxu0 0
        %1420 = vmatpush1.bf16.msra.mxu0 0
        %1421 = vmatprep.subr.bf16.mxu0 0
        %1422 = vmatpush1.bf16.msra.mxu0 0
        %1423 = vmatprep.subr.bf16.mxu0 0
        %1424 = vmatpush1.bf16.msra.mxu0 0
        %1425 = vmatprep.subr.bf16.mxu0 0
        %1426 = vmatpush1.bf16.msra.mxu0 0
        %1427 = vmatprep.subr.bf16.mxu0 %v1354
        %1428 = vmatpush1.bf16.msra.mxu0 %v1351
        %1429 = vmatprep.subr.bf16.mxu0 %v1317
        %1430 = vmatpush1.bf16.msra.mxu0 %v1316
        %1431 = vmatprep.subr.bf16.mxu0 %v1313
        %1432 = vmatpush1.bf16.msra.mxu0 %v1312
        %1433 = vmatprep.subr.bf16.mxu0 0
        %1434 = vmatpush2.bf16.msra.mxu0 0
        %1435 = vmatprep.subr.bf16.mxu0 0
        %1436 = vmatpush2.bf16.msra.mxu0 0
        %1437 = vmatprep.subr.bf16.mxu0 0
        %1438 = vmatpush2.bf16.msra.mxu0 0
        %1439 = vmatprep.subr.bf16.mxu0 0
        %1440 = vmatpush2.bf16.msra.mxu0 0
        %1441 = vmatprep.subr.bf16.mxu0 0
        %1442 = vmatpush2.bf16.msra.mxu0 0
        %1443 = vmatprep.subr.bf16.mxu0 0
        %1444 = vmatpush2.bf16.msra.mxu0 0
        %1445 = vmatprep.subr.bf16.mxu0 0
        %1446 = vmatpush2.bf16.msra.mxu0 0
        %1447 = vmatprep.subr.bf16.mxu0 0
        %1448 = vmatpush2.bf16.msra.mxu0 0
        %1449 = vmatprep.mubr.bf16.mxu0 0
        %1450 = vmatmul.mubr.bf16.gmra.mxu0 %v1336
        %v1451 = vpop.f32.mrf.mxu0
        %v1452 = vadd.f32 0.0, %v1451
        %v1453 = vpop.f32.mrf.mxu0
        %v1454 = vadd.f32 0.0, %v1453
        %v1455 = vpop.f32.mrf.mxu0
        %v1456 = vadd.f32 0.0, %v1455
        %v1457 = vpop.f32.mrf.mxu0
        %v1458 = vadd.f32 0.0, %v1457
        %1459 = vmatprep.mubr.bf16.mxu0 0
        %1460 = vmatmul.mubr.bf16.gmra.mxu0 %v1339
        %v1461 = vpop.f32.mrf.mxu0
        %v1462 = vadd.f32 0.0, %v1461
        %v1463 = vpop.f32.mrf.mxu0
        %v1464 = vadd.f32 0.0, %v1463
        %v1465 = vpop.f32.mrf.mxu0
        %v1466 = vadd.f32 0.0, %v1465
        %v1467 = vpop.f32.mrf.mxu0
        %v1468 = vadd.f32 0.0, %v1467
        %1469 = vmatprep.mubr.bf16.mxu0 0
        %1470 = vmatmul.mubr.bf16.gmra.mxu0 %v1342
        %v1471 = vpop.f32.mrf.mxu0
        %v1472 = vadd.f32 0.0, %v1471
        %v1473 = vpop.f32.mrf.mxu0
        %v1474 = vadd.f32 0.0, %v1473
        %v1475 = vpop.f32.mrf.mxu0
        %v1476 = vpop.f32.mrf.mxu0
        %1477 = vdwg.mxu0
        %v1478 = vmax.f32 %v1391, 0.0
        %v1479 = vmax.f32 %v1393, 0.0
        %v1480 = vmax.f32 %v1452, 0.0
        %v1481 = vmax.f32 %v1454, 0.0
        %v1482 = vmax.f32 %v1395, 0.0
        %v1483 = vmax.f32 %v1397, 0.0
        %v1484 = vmax.f32 %v1456, 0.0
        %v1485 = vmax.f32 %v1458, 0.0
        %v1486 = vmax.f32 %v1401, 0.0
        %v1487 = vmax.f32 %v1403, 0.0
        %v1488 = vmax.f32 %v1462, 0.0
        %v1489 = vmax.f32 %v1464, 0.0
        %v1490 = vmax.f32 %v1405, 0.0
        %v1491 = vmax.f32 %v1407, 0.0
        %v1492 = vmax.f32 %v1466, 0.0
        %v1493 = vmax.f32 %v1468, 0.0
        %v1494 = vmax.f32 %v1411, 0.0
        %v1495 = vmax.f32 %v1413, 0.0
        %v1496 = vmax.f32 %v1472, 0.0
        %v1497 = vmax.f32 %v1474, 0.0
        %s1498 = scalar_lea.vmem %s1, 80
        %v1499 = vld [vmem:[%s1498] sm:$0xf]
        %v1500 = vld [vmem:[%s1498 + $0x4] sm:$0xf]
        %v1501 = vld [vmem:[%s1498 + $0x8] sm:$0xf]
        %v1502 = vld [vmem:[%s1498 + $0xc] sm:$0xf]
        %v1503 = vld [vmem:[%s1498 + $0x10] sm:$0xf]
        %v1504 = vpack.c.bf16 %v1482, %v1478
        %v1505 = vpack.c.bf16 %v1483, %v1479
        %v1506 = vpack.c.bf16 %v1484, %v1480
        %v1507 = vpack.c.bf16 %v1485, %v1481
        %v1508 = vpack.c.bf16 %v1490, %v1486
        %v1509 = vpack.c.bf16 %v1491, %v1487
        %v1510 = vpack.c.bf16 %v1492, %v1488
        %v1511 = vpack.c.bf16 %v1493, %v1489
        %v1512 = vpack.c.bf16 %v1494, %v1494
        %v1513 = vpack.c.bf16 %v1495, %v1495
        %v1514 = vpack.c.bf16 %v1496, %v1496
        %v1515 = vpack.c.bf16 %v1497, %v1497
        %v1521 = vunpack.c.l.b16 %v1499
        %v1522 = vunpack.c.l.b16 %v1500
        %v1523 = vunpack.c.l.b16 %v1501
        %v1524 = vunpack.c.l.b16 %v1502
        %v1525 = vunpack.c.l.b16 %v1503
        %v1526 = vpack.c.b16 %v1522, %v1521
        %v1527 = vpack.c.b16 %v1524, %v1523
        %v1528 = vpack.c.b16 %v1525, %v1525
        %v1530 = vsel %vm253, %v1526, 0
        %v1533 = vsel %vm253, %v1527, 0
        %v1536 = vsel %vm253, %v1528, 0
        %v1539 = vsel %vm263, %v1512, 0
        %v1542 = vsel %vm263, %v1513, 0
        %v1545 = vsel %vm263, %v1514, 0
        %v1548 = vsel %vm263, %v1515, 0
        %1550 = vmatprep.subr.bf16.mxu0 0
        %1551 = vmatpush1.bf16.msra.mxu0 0
        %1552 = vmatprep.subr.bf16.mxu0 0
        %1553 = vmatpush1.bf16.msra.mxu0 0
        %1554 = vmatprep.subr.bf16.mxu0 0
        %1555 = vmatpush1.bf16.msra.mxu0 0
        %1556 = vmatprep.subr.bf16.mxu0 0
        %1557 = vmatpush1.bf16.msra.mxu0 0
        %1558 = vmatprep.subr.bf16.mxu0 0
        %1559 = vmatpush1.bf16.msra.mxu0 0
        %1560 = vmatprep.subr.bf16.mxu0 %v1542
        %1561 = vmatpush1.bf16.msra.mxu0 %v1539
        %1562 = vmatprep.subr.bf16.mxu0 %v1509
        %1563 = vmatpush1.bf16.msra.mxu0 %v1508
        %1564 = vmatprep.subr.bf16.mxu0 %v1505
        %1565 = vmatpush1.bf16.msra.mxu0 %v1504
        %1566 = vmatprep.subr.bf16.mxu0 0
        %1567 = vmatpush2.bf16.msra.mxu0 0
        %1568 = vmatprep.subr.bf16.mxu0 0
        %1569 = vmatpush2.bf16.msra.mxu0 0
        %1570 = vmatprep.subr.bf16.mxu0 0
        %1571 = vmatpush2.bf16.msra.mxu0 0
        %1572 = vmatprep.subr.bf16.mxu0 0
        %1573 = vmatpush2.bf16.msra.mxu0 0
        %1574 = vmatprep.subr.bf16.mxu0 0
        %1575 = vmatpush2.bf16.msra.mxu0 0
        %1576 = vmatprep.subr.bf16.mxu0 0
        %1577 = vmatpush2.bf16.msra.mxu0 0
        %1578 = vmatprep.subr.bf16.mxu0 0
        %1579 = vmatpush2.bf16.msra.mxu0 0
        %1580 = vmatprep.subr.bf16.mxu0 0
        %1581 = vmatpush2.bf16.msra.mxu0 0
        %1582 = vmatprep.mubr.bf16.mxu0 0
        %1583 = vmatmul.mubr.bf16.gmra.mxu0 %v1530
        %v1584 = vpop.f32.mrf.mxu0
        %v1585 = vadd.f32 0.0, %v1584
        %v1586 = vpop.f32.mrf.mxu0
        %v1587 = vadd.f32 0.0, %v1586
        %v1588 = vpop.f32.mrf.mxu0
        %v1589 = vadd.f32 0.0, %v1588
        %v1590 = vpop.f32.mrf.mxu0
        %v1591 = vadd.f32 0.0, %v1590
        %1592 = vmatprep.mubr.bf16.mxu0 0
        %1593 = vmatmul.mubr.bf16.gmra.mxu0 %v1533
        %v1594 = vpop.f32.mrf.mxu0
        %v1595 = vadd.f32 0.0, %v1594
        %v1596 = vpop.f32.mrf.mxu0
        %v1597 = vadd.f32 0.0, %v1596
        %v1598 = vpop.f32.mrf.mxu0
        %v1599 = vadd.f32 0.0, %v1598
        %v1600 = vpop.f32.mrf.mxu0
        %v1601 = vadd.f32 0.0, %v1600
        %1602 = vmatprep.mubr.bf16.mxu0 0
        %1603 = vmatmul.mubr.bf16.gmra.mxu0 %v1536
        %v1604 = vpop.f32.mrf.mxu0
        %v1605 = vadd.f32 0.0, %v1604
        %v1606 = vpop.f32.mrf.mxu0
        %v1607 = vadd.f32 0.0, %v1606
        %v1608 = vpop.f32.mrf.mxu0
        %v1609 = vpop.f32.mrf.mxu0
        %1610 = vdwg.mxu0
        %1611 = vmatprep.subr.bf16.mxu0 0
        %1612 = vmatpush1.bf16.msra.mxu0 0
        %1613 = vmatprep.subr.bf16.mxu0 0
        %1614 = vmatpush1.bf16.msra.mxu0 0
        %1615 = vmatprep.subr.bf16.mxu0 0
        %1616 = vmatpush1.bf16.msra.mxu0 0
        %1617 = vmatprep.subr.bf16.mxu0 0
        %1618 = vmatpush1.bf16.msra.mxu0 0
        %1619 = vmatprep.subr.bf16.mxu0 0
        %1620 = vmatpush1.bf16.msra.mxu0 0
        %1621 = vmatprep.subr.bf16.mxu0 %v1548
        %1622 = vmatpush1.bf16.msra.mxu0 %v1545
        %1623 = vmatprep.subr.bf16.mxu0 %v1511
        %1624 = vmatpush1.bf16.msra.mxu0 %v1510
        %1625 = vmatprep.subr.bf16.mxu0 %v1507
        %1626 = vmatpush1.bf16.msra.mxu0 %v1506
        %1627 = vmatprep.subr.bf16.mxu0 0
        %1628 = vmatpush2.bf16.msra.mxu0 0
        %1629 = vmatprep.subr.bf16.mxu0 0
        %1630 = vmatpush2.bf16.msra.mxu0 0
        %1631 = vmatprep.subr.bf16.mxu0 0
        %1632 = vmatpush2.bf16.msra.mxu0 0
        %1633 = vmatprep.subr.bf16.mxu0 0
        %1634 = vmatpush2.bf16.msra.mxu0 0
        %1635 = vmatprep.subr.bf16.mxu0 0
        %1636 = vmatpush2.bf16.msra.mxu0 0
        %1637 = vmatprep.subr.bf16.mxu0 0
        %1638 = vmatpush2.bf16.msra.mxu0 0
        %1639 = vmatprep.subr.bf16.mxu0 0
        %1640 = vmatpush2.bf16.msra.mxu0 0
        %1641 = vmatprep.subr.bf16.mxu0 0
        %1642 = vmatpush2.bf16.msra.mxu0 0
        %1643 = vmatprep.mubr.bf16.mxu0 0
        %1644 = vmatmul.mubr.bf16.gmra.mxu0 %v1530
        %v1645 = vpop.f32.mrf.mxu0
        %v1646 = vadd.f32 0.0, %v1645
        %v1647 = vpop.f32.mrf.mxu0
        %v1648 = vadd.f32 0.0, %v1647
        %v1649 = vpop.f32.mrf.mxu0
        %v1650 = vadd.f32 0.0, %v1649
        %v1651 = vpop.f32.mrf.mxu0
        %v1652 = vadd.f32 0.0, %v1651
        %1653 = vmatprep.mubr.bf16.mxu0 0
        %1654 = vmatmul.mubr.bf16.gmra.mxu0 %v1533
        %v1655 = vpop.f32.mrf.mxu0
        %v1656 = vadd.f32 0.0, %v1655
        %v1657 = vpop.f32.mrf.mxu0
        %v1658 = vadd.f32 0.0, %v1657
        %v1659 = vpop.f32.mrf.mxu0
        %v1660 = vadd.f32 0.0, %v1659
        %v1661 = vpop.f32.mrf.mxu0
        %v1662 = vadd.f32 0.0, %v1661
        %1663 = vmatprep.mubr.bf16.mxu0 0
        %1664 = vmatmul.mubr.bf16.gmra.mxu0 %v1536
        %v1665 = vpop.f32.mrf.mxu0
        %v1666 = vadd.f32 0.0, %v1665
        %v1667 = vpop.f32.mrf.mxu0
        %v1668 = vadd.f32 0.0, %v1667
        %v1669 = vpop.f32.mrf.mxu0
        %v1670 = vpop.f32.mrf.mxu0
        %1671 = vdwg.mxu0
        %v1672 = vmax.f32 %v1585, 0.0
        %v1673 = vmax.f32 %v1587, 0.0
        %v1674 = vmax.f32 %v1646, 0.0
        %v1675 = vmax.f32 %v1648, 0.0
        %v1676 = vmax.f32 %v1589, 0.0
        %v1677 = vmax.f32 %v1591, 0.0
        %v1678 = vmax.f32 %v1650, 0.0
        %v1679 = vmax.f32 %v1652, 0.0
        %v1680 = vmax.f32 %v1595, 0.0
        %v1681 = vmax.f32 %v1597, 0.0
        %v1682 = vmax.f32 %v1656, 0.0
        %v1683 = vmax.f32 %v1658, 0.0
        %v1684 = vmax.f32 %v1599, 0.0
        %v1685 = vmax.f32 %v1601, 0.0
        %v1686 = vmax.f32 %v1660, 0.0
        %v1687 = vmax.f32 %v1662, 0.0
        %v1688 = vmax.f32 %v1605, 0.0
        %v1689 = vmax.f32 %v1607, 0.0
        %v1690 = vmax.f32 %v1666, 0.0
        %v1691 = vmax.f32 %v1668, 0.0
        %s1692 = scalar_lea.vmem %s1, 100
        %v1693 = vld [vmem:[%s1692] sm:$0xf]
        %v1694 = vld [vmem:[%s1692 + $0x4] sm:$0xf]
        %v1695 = vld [vmem:[%s1692 + $0x8] sm:$0xf]
        %v1696 = vld [vmem:[%s1692 + $0xc] sm:$0xf]
        %v1697 = vld [vmem:[%s1692 + $0x10] sm:$0xf]
        %v1698 = vpack.c.bf16 %v1676, %v1672
        %v1699 = vpack.c.bf16 %v1677, %v1673
        %v1700 = vpack.c.bf16 %v1678, %v1674
        %v1701 = vpack.c.bf16 %v1679, %v1675
        %v1702 = vpack.c.bf16 %v1684, %v1680
        %v1703 = vpack.c.bf16 %v1685, %v1681
        %v1704 = vpack.c.bf16 %v1686, %v1682
        %v1705 = vpack.c.bf16 %v1687, %v1683
        %v1706 = vpack.c.bf16 %v1688, %v1688
        %v1707 = vpack.c.bf16 %v1689, %v1689
        %v1708 = vpack.c.bf16 %v1690, %v1690
        %v1709 = vpack.c.bf16 %v1691, %v1691
        %v1715 = vunpack.c.l.b16 %v1693
        %v1716 = vunpack.c.l.b16 %v1694
        %v1717 = vunpack.c.l.b16 %v1695
        %v1718 = vunpack.c.l.b16 %v1696
        %v1719 = vunpack.c.l.b16 %v1697
        %v1720 = vpack.c.b16 %v1716, %v1715
        %v1721 = vpack.c.b16 %v1718, %v1717
        %v1722 = vpack.c.b16 %v1719, %v1719
        %v1724 = vsel %vm253, %v1720, 0
        %v1727 = vsel %vm253, %v1721, 0
        %v1730 = vsel %vm253, %v1722, 0
        %v1733 = vsel %vm263, %v1706, 0
        %v1736 = vsel %vm263, %v1707, 0
        %v1739 = vsel %vm263, %v1708, 0
        %v1742 = vsel %vm263, %v1709, 0
        %1744 = vmatprep.subr.bf16.mxu0 0
        %1745 = vmatpush1.bf16.msra.mxu0 0
        %1746 = vmatprep.subr.bf16.mxu0 0
        %1747 = vmatpush1.bf16.msra.mxu0 0
        %1748 = vmatprep.subr.bf16.mxu0 0
        %1749 = vmatpush1.bf16.msra.mxu0 0
        %1750 = vmatprep.subr.bf16.mxu0 0
        %1751 = vmatpush1.bf16.msra.mxu0 0
        %1752 = vmatprep.subr.bf16.mxu0 0
        %1753 = vmatpush1.bf16.msra.mxu0 0
        %1754 = vmatprep.subr.bf16.mxu0 %v1736
        %1755 = vmatpush1.bf16.msra.mxu0 %v1733
        %1756 = vmatprep.subr.bf16.mxu0 %v1703
        %1757 = vmatpush1.bf16.msra.mxu0 %v1702
        %1758 = vmatprep.subr.bf16.mxu0 %v1699
        %1759 = vmatpush1.bf16.msra.mxu0 %v1698
        %1760 = vmatprep.subr.bf16.mxu0 0
        %1761 = vmatpush2.bf16.msra.mxu0 0
        %1762 = vmatprep.subr.bf16.mxu0 0
        %1763 = vmatpush2.bf16.msra.mxu0 0
        %1764 = vmatprep.subr.bf16.mxu0 0
        %1765 = vmatpush2.bf16.msra.mxu0 0
        %1766 = vmatprep.subr.bf16.mxu0 0
        %1767 = vmatpush2.bf16.msra.mxu0 0
        %1768 = vmatprep.subr.bf16.mxu0 0
        %1769 = vmatpush2.bf16.msra.mxu0 0
        %1770 = vmatprep.subr.bf16.mxu0 0
        %1771 = vmatpush2.bf16.msra.mxu0 0
        %1772 = vmatprep.subr.bf16.mxu0 0
        %1773 = vmatpush2.bf16.msra.mxu0 0
        %1774 = vmatprep.subr.bf16.mxu0 0
        %1775 = vmatpush2.bf16.msra.mxu0 0
        %1776 = vmatprep.mubr.bf16.mxu0 0
        %1777 = vmatmul.mubr.bf16.gmra.mxu0 %v1724
        %v1778 = vpop.f32.mrf.mxu0
        %v1779 = vpop.f32.mrf.mxu0
        %v1780 = vpop.f32.mrf.mxu0
        %v1781 = vpop.f32.mrf.mxu0
        %1782 = vmatprep.mubr.bf16.mxu0 0
        %1783 = vmatmul.mubr.bf16.gmra.mxu0 %v1727
        %v1784 = vpop.f32.mrf.mxu0
        %v1785 = vadd.f32 0.0, %v1784
        %v1786 = vpop.f32.mrf.mxu0
        %v1787 = vadd.f32 0.0, %v1786
        %v1788 = vpop.f32.mrf.mxu0
        %v1789 = vpop.f32.mrf.mxu0
        %1790 = vmatprep.mubr.bf16.mxu0 0
        %1791 = vmatmul.mubr.bf16.gmra.mxu0 %v1730
        %v1792 = vpop.f32.mrf.mxu0
        %v1793 = vpop.f32.mrf.mxu0
        %v1794 = vpop.f32.mrf.mxu0
        %v1795 = vpop.f32.mrf.mxu0
        %1796 = vdwg.mxu0
        %1797 = vmatprep.subr.bf16.mxu0 0
        %1798 = vmatpush1.bf16.msra.mxu0 0
        %1799 = vmatprep.subr.bf16.mxu0 0
        %1800 = vmatpush1.bf16.msra.mxu0 0
        %1801 = vmatprep.subr.bf16.mxu0 0
        %1802 = vmatpush1.bf16.msra.mxu0 0
        %1803 = vmatprep.subr.bf16.mxu0 0
        %1804 = vmatpush1.bf16.msra.mxu0 0
        %1805 = vmatprep.subr.bf16.mxu0 0
        %1806 = vmatpush1.bf16.msra.mxu0 0
        %1807 = vmatprep.subr.bf16.mxu0 %v1742
        %1808 = vmatpush1.bf16.msra.mxu0 %v1739
        %1809 = vmatprep.subr.bf16.mxu0 %v1705
        %1810 = vmatpush1.bf16.msra.mxu0 %v1704
        %1811 = vmatprep.subr.bf16.mxu0 %v1701
        %1812 = vmatpush1.bf16.msra.mxu0 %v1700
        %1813 = vmatprep.subr.bf16.mxu0 0
        %1814 = vmatpush2.bf16.msra.mxu0 0
        %1815 = vmatprep.subr.bf16.mxu0 0
        %1816 = vmatpush2.bf16.msra.mxu0 0
        %1817 = vmatprep.subr.bf16.mxu0 0
        %1818 = vmatpush2.bf16.msra.mxu0 0
        %1819 = vmatprep.subr.bf16.mxu0 0
        %1820 = vmatpush2.bf16.msra.mxu0 0
        %1821 = vmatprep.subr.bf16.mxu0 0
        %1822 = vmatpush2.bf16.msra.mxu0 0
        %1823 = vmatprep.subr.bf16.mxu0 0
        %1824 = vmatpush2.bf16.msra.mxu0 0
        %1825 = vmatprep.subr.bf16.mxu0 0
        %1826 = vmatpush2.bf16.msra.mxu0 0
        %1827 = vmatprep.subr.bf16.mxu0 0
        %1828 = vmatpush2.bf16.msra.mxu0 0
        %1829 = vmatprep.mubr.bf16.mxu0 0
        %1830 = vmatmul.mubr.bf16.gmra.mxu0 %v1724
        %v1831 = vpop.f32.mrf.mxu0
        %v1832 = vpop.f32.mrf.mxu0
        %v1833 = vpop.f32.mrf.mxu0
        %v1834 = vpop.f32.mrf.mxu0
        %1835 = vmatprep.mubr.bf16.mxu0 0
        %1836 = vmatmul.mubr.bf16.gmra.mxu0 %v1727
        %v1837 = vpop.f32.mrf.mxu0
        %v1838 = vadd.f32 0.0, %v1837
        %v1839 = vpop.f32.mrf.mxu0
        %v1840 = vadd.f32 0.0, %v1839
        %v1841 = vpop.f32.mrf.mxu0
        %v1842 = vpop.f32.mrf.mxu0
        %1843 = vmatprep.mubr.bf16.mxu0 0
        %1844 = vmatmul.mubr.bf16.gmra.mxu0 %v1730
        %v1845 = vpop.f32.mrf.mxu0
        %v1846 = vpop.f32.mrf.mxu0
        %v1847 = vpop.f32.mrf.mxu0
        %v1848 = vpop.f32.mrf.mxu0
        %1849 = vdwg.mxu0
        %v1850 = vsub.f32 %v1292, %v1785
        %v1851 = vsub.f32 %v1293, %v1787
        %v1852 = vsub.f32 %v1294, %v1838
        %v1853 = vsub.f32 %v1295, %v1840
        %v1854 = vsub.f32 0.0, %v1850
        %v1855 = vsub.f32 0.0, %v1851
        %v1856 = vsub.f32 0.0, %v1852
        %v1857 = vsub.f32 0.0, %v1853
        %v1862 = vcombine.low %v1854, %v1855
        %v1863 = vcombine.low %v1856, %v1857
        %v1865 = vunpack.c.l.s4 1966171168
        %v1866 = vunpack.c.0.s8 %v1865
        %v1867 = vlaneseq
        %v1868 = vshrl.u32 %v1867, 7
        %v1869 = vsub.s32 %v1866, %v1868
        %v1870 = vrot.slane %v1862, %v1869
        %v1872 = vunpack.c.l.s4 1966171168
        %v1873 = vunpack.c.0.s8 %v1872
        %v1874 = vlaneseq
        %v1875 = vshrl.u32 %v1874, 7
        %v1876 = vsub.s32 %v1873, %v1875
        %v1877 = vrot.slane %v1863, %v1876
        %v1878 = vcombine.low %v1870, %v1877
        %v1880 = vunpack.c.l.s4 1966171168
        %v1881 = vunpack.c.0.s8 %v1880
        %v1882 = vlaneseq
        %v1883 = vshrl.u32 %v1882, 7
        %v1884 = vsub.s32 %v1881, %v1883
        %v1885 = vrot.slane %v1878, %v1884
        %v1887 = vlaneseq
        %vm1888 = vcmp.ge.s32.totalorder %v1887, 0
        %vm1889 = vcmp.lt.s32.totalorder %v1887, 512
        %vm1890 = vmand %vm1888, %vm1889
        %1891 = vst.msk [vmem:[%s199] sm:$0xf] %vm1890, %v1885
        %s1892 = sand.u32 %s71, 1
        %s1893 = scalar_lea.sflag [#allocation4], %s1892
        %s1894 = sand.u32 %s71, 1
        %s1895 = smul.addr %s1894, 4
        %s1896 = scalar_lea.vmem [#allocation3], %s1895
        // Predicated region
        $region52: #{_forward_impl.1} parent=46 // pred_check
          %p1897 = pneg %p81
        $region53: #{_forward_impl.1} parent=46 // pred_check_branch
          %1899 = sbr.rel (%p1897) target = $region55
        $region54: #{_forward_impl.1} parent=46 // pred_region
          %s1900 = smul.u32 4, %s16
          %s1902 = ssub.s32 64, 64
          %1903 = vsyncadd %s1893, %s1902
          %s1904 = smul.addr %s1900, 16
          %s1905 = scalar_lea.hbm %s2, %s1904
          %s1907 = sshll.u32 %s1896, 4
          %s1908 = int_to_ptr.vmem [resolvable:$true] %s1907
          %1910 = dma.vmem_to_hbm [thread:$0]  %s1908, 64, %s1905, %s1893
        $region55: #{_forward_impl.1} parent=46 // pred_fallthru
          _
      $region47: #{_forward_impl.1} parent=5 // pred_fallthru
        _
      %p1911 = scmp.le.s32.totalorder 2, %s11
      // Predicated region
      $region56: #{_forward_impl.1} parent=5 // pred_check
        %p1912 = pneg %p1911
      $region57: #{_forward_impl.1} parent=5 // pred_check_branch
        %1914 = sbr.rel (%p1912) target = $region59
      $region58: #{_forward_impl.1} parent=5 // pred_region
        %s1915 = ssub.s32 %s11, 2
        // Predicated region
        $region60: #{_forward_impl.1} parent=58 // pred_check
          %p1916 = pneg %p87
        $region61: #{_forward_impl.1} parent=58 // pred_check_branch
          %1918 = sbr.rel (%p1916) target = $region63
        $region62: #{_forward_impl.1} parent=58 // pred_region
          %s1919 = sand.u32 %s72, 1
          %s1920 = scalar_lea.sflag [#allocation4], %s1919
          %s1921 = sand.u32 %s72, 1
          %s1922 = smul.addr %s1921, 4
          %s1923 = scalar_lea.vmem [#allocation3], %s1922
          %1924 = dma.done %s1920, 64
        $region63: #{_forward_impl.1} parent=58 // pred_fallthru
          _
      $region59: #{_forward_impl.1} parent=5 // pred_fallthru
        _
    $region6: #{_forward_impl.1} parent=1 // loop_footer
      %s15 = sadd.s32 1, %s11
    $region7: #{_forward_impl.1} parent=1 // loop_footer_branch
      %10 = sbr.rel target = $region3
    $region8: #{_forward_impl.1} parent=1 // loop_exit
      _
    %1925 = vsyncpa [#allocation4], 1
    %s1926 = scalar_lea.sflag [#allocation4], 1
    %1927 = vsyncpa %s1926, 1

// kernel: _forward_impl.1
$region0: #{_forward_impl.1}
  #allocation0 [shape = 'u32[]', space=smem, size = 0x4, offset = 0x4, fixed_abs, tag = 'smem constant byte address 0x4 - core index']
  #allocation1 [shape = 'u32[144,128]{1,0:T(1,128)}', space=vmem, size = 0x12000, scoped, tag = 'internal scratch']
  %s0 = inlined_call_operand.vmem [shape: f32[40,1024], index: 0, kind: input, shape index: {}]
  %s1 = inlined_call_operand.vmem [shape: bf16[3,3,40,40], index: 1, kind: input, shape index: {}]
  %s2 = inlined_call_operand.hbm [shape: f32[1,1024], index: 2, kind: output, shape index: {}]
  %s3 = sld [smem:[#allocation0]]
  $region64: #{_forward_impl.1} parent=0
    _
  %s5 = ssub.s32 1, %s3
  %s6 = scalar_select 0, %s5, %s3
  $region1: #{_forward_impl.1} parent=0
    #allocation2 [shape = 'u8[163840]{0}', space=vmem, size = 0x28000, scoped, tag = 'input window, operand 0']
    #allocation3 [shape = 'u8[4096]{0}', space=vmem, size = 0x1000, scoped, tag = 'output window, operand 0']
    #allocation4 [shape = 's32[2]{0}', space=sflag, size = 0x8, scoped, tag = 'scoped memory for _forward_impl.1']
    %7 = vsyncpa [#allocation4], 0
    %s8 = scalar_lea.sflag [#allocation4], 1
    %9 = vsyncpa %s8, 0
    loop: start=0, step=1, limit=4
    $region2: #{_forward_impl.1} parent=1 // loop_pre_header
      _
    $region3: #{_forward_impl.1} parent=1 // loop_header
      %s11 = sphi 0, %s15
      %p12 = scmp.ge.s32.totalorder %s11, 4
      %s21 = sphi 0, %s23
      %s24 = sphi 0, %s21
      %s25 = sphi 0, %s24
      %s41 = sphi 0, %s25
      %s45 = sphi 0, %s45
      %s47 = sphi 0, %s45
      %s48 = sphi 0, %s47
      %s62 = sphi 0, %s48
      %s68 = sphi 0, %s70
      %s71 = sphi 0, %s68
      %s72 = sphi 0, %s71
      %s88 = sphi 0, %s72
    $region4: #{_forward_impl.1} parent=1 // loop_header_branch
      %14 = sbr.rel (%p12) target = $region8
    $region5: #{_forward_impl.1} parent=1 // loop_body
      %s16 = ssub.s32 %s11, 1
      %s17 = ssub.s32 %s11, 2
      %s18 = sadd.s32 %s11, 1
      %s19 = ssub.s32 %s11, %s18
      %p20 = scmp.eq.s32.totalorder %s19, 0
      %s22 = sadd.s32 %s21, 1
      %s23 = scalar_select %p20, %s21, %s22
      %p26 = pneg %p20
      %p27 = scmp.eq.s32.totalorder %s11, 1
      %p28 = por %p26, %p27
      %p29 = scmp.ne.s32.totalorder %s21, %s24
      %p30 = scmp.eq.s32.totalorder %s11, 0
      %p31 = por %p29, %p30
      %p32 = scmp.ne.s32.totalorder %s21, %s24
      %p33 = scmp.eq.s32.totalorder %s16, 1
      %p34 = por %p32, %p33
      %p35 = scmp.ne.s32.totalorder %s24, %s25
      %p36 = scmp.eq.s32.totalorder %s16, 0
      %p37 = por %p35, %p36
      %p38 = scmp.ne.s32.totalorder %s24, %s25
      %p39 = scmp.eq.s32.totalorder %s17, 1
      %p40 = por %p38, %p39
      %p42 = scmp.ne.s32.totalorder %s25, %s41
      %p43 = scmp.eq.s32.totalorder %s17, 0
      %p44 = por %p42, %p43
      %s46 = sadd.s32 %s45, 1
      %p49 = scmp.eq.s32.totalorder %s11, 1
      %p50 = scmp.ne.s32.totalorder %s45, %s47
      %p51 = scmp.eq.s32.totalorder %s11, 0
      %p52 = por %p50, %p51
      %p53 = scmp.ne.s32.totalorder %s45, %s47
      %p54 = scmp.eq.s32.totalorder %s16, 1
      %p55 = por %p53, %p54
      %p56 = scmp.ne.s32.totalorder %s47, %s48
      %p57 = scmp.eq.s32.totalorder %s16, 0
      %p58 = por %p56, %p57
      %p59 = scmp.ne.s32.totalorder %s47, %s48
      %p60 = scmp.eq.s32.totalorder %s17, 1
      %p61 = por %p59, %p60
      %p63 = scmp.ne.s32.totalorder %s48, %s62
      %p64 = scmp.eq.s32.totalorder %s17, 0
      %p65 = por %p63, %p64
      %s66 = ssub.s32 %s11, %s18
      %p67 = scmp.eq.s32.totalorder %s66, 0
      %s69 = sadd.s32 %s68, 1
      %s70 = scalar_select %p67, %s68, %s69
      %p73 = pneg %p67
      %p74 = scmp.eq.s32.totalorder %s11, 1
      %p75 = por %p73, %p74
      %p76 = scmp.ne.s32.totalorder %s68, %s71
      %p77 = scmp.eq.s32.totalorder %s11, 0
      %p78 = por %p76, %p77
      %p79 = scmp.ne.s32.totalorder %s68, %s71
      %p80 = scmp.eq.s32.totalorder %s16, 1
      %p81 = por %p79, %p80
      %p82 = scmp.ne.s32.totalorder %s71, %s72
      %p83 = scmp.eq.s32.totalorder %s16, 0
      %p84 = por %p82, %p83
      %p85 = scmp.ne.s32.totalorder %s71, %s72
      %p86 = scmp.eq.s32.totalorder %s17, 1
      %p87 = por %p85, %p86
      %p89 = scmp.ne.s32.totalorder %s72, %s88
      %p90 = scmp.eq.s32.totalorder %s17, 0
      %p91 = por %p89, %p90
      %p92 = scmp.le.s32.totalorder 1, %s11
      %p93 = scmp.lt.s32.totalorder %s11, 3
      %p94 = pnand %p92, %p93
      %p95 = pneg %p94
      // Predicated region
      $region9: #{_forward_impl.1} parent=5 // pred_check
        _
      $region10: #{_forward_impl.1} parent=5 // pred_check_branch
        %97 = sbr.rel (%p94) target = $region12
      $region11: #{_forward_impl.1} parent=5 // pred_region
        %s98 = ssub.s32 %s11, 1
        // Predicated region
        $region13: #{_forward_impl.1} parent=11 // pred_check
          %p99 = pneg %p58
        $region14: #{_forward_impl.1} parent=11 // pred_check_branch
          %101 = sbr.rel (%p99) target = $region16
        $region15: #{_forward_impl.1} parent=11 // pred_region
          _
        $region16: #{_forward_impl.1} parent=11 // pred_fallthru
          _
      $region12: #{_forward_impl.1} parent=5 // pred_fallthru
        _
      %p102 = scmp.lt.s32.totalorder %s11, 2
      // Predicated region
      $region17: #{_forward_impl.1} parent=5 // pred_check
        %p103 = pneg %p102
      $region18: #{_forward_impl.1} parent=5 // pred_check_branch
        %105 = sbr.rel (%p103) target = $region20
      $region19: #{_forward_impl.1} parent=5 // pred_region
        // Predicated region
        $region21: #{_forward_impl.1} parent=19 // pred_check
          %p106 = pneg %p31
        $region22: #{_forward_impl.1} parent=19 // pred_check_branch
          %108 = sbr.rel (%p106) target = $region24
        $region23: #{_forward_impl.1} parent=19 // pred_region
          %s109 = sand.u32 %s21, 1
          %s110 = sand.u32 %s21, 1
          %s111 = smul.addr %s110, 160
          %s112 = scalar_lea.vmem [#allocation2], %s111
          %s113 = smul.u32 4, %s11
          %s114 = smul.addr %s113, 8
          %s115 = scalar_lea.vmem %s0, %s114
          // Predicated region
          $region25: #{_forward_impl.1} parent=23 // pred_check
            _
          $region26: #{_forward_impl.1} parent=23 // pred_check_branch
            %117 = sbr.rel (0) target = $region28
          $region27: #{_forward_impl.1} parent=23 // pred_region
            // Predicated region
            $region29: #{_forward_impl.1} parent=27 // pred_check
              _
            $region30: #{_forward_impl.1} parent=27 // pred_check_branch
              %119 = sbr.rel (0) target = $region32
            $region31: #{_forward_impl.1} parent=27 // pred_region
              loop: start=0, step=1, limit=1
              $region33: #{_forward_impl.1} parent=31 // loop_pre_header
                _
              $region34: #{_forward_impl.1} parent=31 // loop_header
                %s121 = sphi 0, %s125
                %p122 = scmp.ge.s32.totalorder %s121, 1
                %s126 = sphi %s115, %s115
                %s127 = sphi %s112, %s112
              $region35: #{_forward_impl.1} parent=31 // loop_header_branch
                %124 = sbr.rel (%p122) target = $region39
              $region36: #{_forward_impl.1} parent=31 // loop_body
                %v128 = vld [vmem:[%s126] sm:$0xff]
                %129 = vst [vmem:[%s127] sm:$0xff] %v128
                %v130 = vld [vmem:[%s126 + $0x8] sm:$0xff]
                %131 = vst [vmem:[%s127 + $0x8] sm:$0xff] %v130
                %v132 = vld [vmem:[%s126 + $0x10] sm:$0xff]
                %133 = vst [vmem:[%s127 + $0x10] sm:$0xff] %v132
                %v134 = vld [vmem:[%s126 + $0x18] sm:$0xff]
                %135 = vst [vmem:[%s127 + $0x18] sm:$0xff] %v134
                %v136 = vld [vmem:[%s126 + $0x40] sm:$0xff]
                %137 = vst [vmem:[%s127 + $0x20] sm:$0xff] %v136
                %v138 = vld [vmem:[%s126 + $0x48] sm:$0xff]
                %139 = vst [vmem:[%s127 + $0x28] sm:$0xff] %v138
                %v140 = vld [vmem:[%s126 + $0x50] sm:$0xff]
                %141 = vst [vmem:[%s127 + $0x30] sm:$0xff] %v140
                %v142 = vld [vmem:[%s126 + $0x58] sm:$0xff]
                %143 = vst [vmem:[%s127 + $0x38] sm:$0xff] %v142
                %v144 = vld [vmem:[%s126 + $0x80] sm:$0xff]
                %145 = vst [vmem:[%s127 + $0x40] sm:$0xff] %v144
                %v146 = vld [vmem:[%s126 + $0x88] sm:$0xff]
                %147 = vst [vmem:[%s127 + $0x48] sm:$0xff] %v146
                %v148 = vld [vmem:[%s126 + $0x90] sm:$0xff]
                %149 = vst [vmem:[%s127 + $0x50] sm:$0xff] %v148
                %v150 = vld [vmem:[%s126 + $0x98] sm:$0xff]
                %151 = vst [vmem:[%s127 + $0x58] sm:$0xff] %v150
                %v152 = vld [vmem:[%s126 + $0xc0] sm:$0xff]
                %153 = vst [vmem:[%s127 + $0x60] sm:$0xff] %v152
                %v154 = vld [vmem:[%s126 + $0xc8] sm:$0xff]
                %155 = vst [vmem:[%s127 + $0x68] sm:$0xff] %v154
                %v156 = vld [vmem:[%s126 + $0xd0] sm:$0xff]
                %157 = vst [vmem:[%s127 + $0x70] sm:$0xff] %v156
                %v158 = vld [vmem:[%s126 + $0xd8] sm:$0xff]
                %159 = vst [vmem:[%s127 + $0x78] sm:$0xff] %v158
                %v160 = vld [vmem:[%s126 + $0x100] sm:$0xff]
                %161 = vst [vmem:[%s127 + $0x80] sm:$0xff] %v160
                %v162 = vld [vmem:[%s126 + $0x108] sm:$0xff]
                %163 = vst [vmem:[%s127 + $0x88] sm:$0xff] %v162
                %v164 = vld [vmem:[%s126 + $0x110] sm:$0xff]
                %165 = vst [vmem:[%s127 + $0x90] sm:$0xff] %v164
                %v166 = vld [vmem:[%s126 + $0x118] sm:$0xff]
                %167 = vst [vmem:[%s127 + $0x98] sm:$0xff] %v166
              $region37: #{_forward_impl.1} parent=31 // loop_footer
                %s125 = sadd.s32 1, %s121
              $region38: #{_forward_impl.1} parent=31 // loop_footer_branch
                %120 = sbr.rel target = $region34
              $region39: #{_forward_impl.1} parent=31 // loop_exit
                _
            $region32: #{_forward_impl.1} parent=27 // pred_fallthru
              _
            // Predicated region
            $region40: #{_forward_impl.1} parent=27 // pred_check
              _
            $region41: #{_forward_impl.1} parent=27 // pred_check_branch
              %169 = sbr.rel target = $region43
            $region42: #{_forward_impl.1} parent=27 // pred_region
              _
            $region43: #{_forward_impl.1} parent=27 // pred_fallthru
              _
          $region28: #{_forward_impl.1} parent=23 // pred_fallthru
            _
          %170 = vnop
        $region24: #{_forward_impl.1} parent=19 // pred_fallthru
          _
      $region20: #{_forward_impl.1} parent=5 // pred_fallthru
        _
      %p171 = scmp.le.s32.totalorder 1, %s11
      %p172 = scmp.lt.s32.totalorder %s11, 3
      %p173 = pnand %p171, %p172
      %p174 = pneg %p173
      // Predicated region
      $region44: #{_forward_impl.1} parent=5 // pred_check
        _
      $region45: #{_forward_impl.1} parent=5 // pred_check_branch
        %176 = sbr.rel (%p173) target = $region47
      $region46: #{_forward_impl.1} parent=5 // pred_region
        %s177 = ssub.s32 %s11, 1
        %s178 = sand.u32 %s24, 1
        %s179 = sand.u32 %s24, 1
        %s180 = smul.addr %s179, 160
        %s181 = scalar_lea.vmem [#allocation2], %s180
        // Predicated region
        $region48: #{_forward_impl.1} parent=46 // pred_check
          %p182 = pneg %p37
        $region49: #{_forward_impl.1} parent=46 // pred_check_branch
          %184 = sbr.rel (%p182) target = $region51
        $region50: #{_forward_impl.1} parent=46 // pred_region
          _
        $region51: #{_forward_impl.1} parent=46 // pred_fallthru
          _
        %s185 = sand.u32 %s24, 1
        %s186 = sand.u32 %s24, 1
        %s187 = smul.addr %s186, 160
        %s188 = scalar_lea.vmem [#allocation2], %s187
        %p189 = pneg %p37
        %p190 = pneg %p34
        %p191 = pneg %p58
        %p192 = pneg %p55
        %p193 = pneg %p84
        %p194 = pneg %p81
        %s195 = sand.u32 %s71, 1
        %s196 = scalar_lea.sflag [#allocation4], %s195
        %s197 = sand.u32 %s71, 1
        %s198 = smul.addr %s197, 4
        %s199 = scalar_lea.vmem [#allocation3], %s198
        %s200 = smul.u32 4, %s16
        %s201 = smul.u32 4, %s16
        %v203 = vld [vmem:[%s181] sm:$0xff]
        %v204 = vld [vmem:[%s181 + $0x8] sm:$0xff]
        %v205 = vld [vmem:[%s181 + $0x10] sm:$0xff]
        %v206 = vld [vmem:[%s181 + $0x18] sm:$0xff]
        %v207 = vld [vmem:[%s181 + $0x20] sm:$0xff]
        %v208 = vld [vmem:[%s181 + $0x28] sm:$0xff]
        %v209 = vld [vmem:[%s181 + $0x30] sm:$0xff]
        %v210 = vld [vmem:[%s181 + $0x38] sm:$0xff]
        %v211 = vld [vmem:[%s181 + $0x40] sm:$0xff]
        %v212 = vld [vmem:[%s181 + $0x48] sm:$0xff]
        %v213 = vld [vmem:[%s181 + $0x50] sm:$0xff]
        %v214 = vld [vmem:[%s181 + $0x58] sm:$0xff]
        %v215 = vld [vmem:[%s181 + $0x60] sm:$0xff]
        %v216 = vld [vmem:[%s181 + $0x68] sm:$0xff]
        %v217 = vld [vmem:[%s181 + $0x70] sm:$0xff]
        %v218 = vld [vmem:[%s181 + $0x78] sm:$0xff]
        %v219 = vld [vmem:[%s181 + $0x80] sm:$0xff]
        %v220 = vld [vmem:[%s181 + $0x88] sm:$0xff]
        %v221 = vld [vmem:[%s181 + $0x90] sm:$0xff]
        %v222 = vld [vmem:[%s181 + $0x98] sm:$0xff]
        %v223 = vld [vmem:[%s1] sm:$0xf]
        %v224 = vld [vmem:[%s1 + $0x4] sm:$0xf]
        %v225 = vld [vmem:[%s1 + $0x8] sm:$0xf]
        %v226 = vld [vmem:[%s1 + $0xc] sm:$0xf]
        %v227 = vld [vmem:[%s1 + $0x10] sm:$0xf]
        %v228 = vpack.c.bf16 %v207, %v203
        %v229 = vpack.c.bf16 %v208, %v204
        %v230 = vpack.c.bf16 %v209, %v205
        %v231 = vpack.c.bf16 %v210, %v206
        %v232 = vpack.c.bf16 %v215, %v211
        %v233 = vpack.c.bf16 %v216, %v212
        %v234 = vpack.c.bf16 %v217, %v213
        %v235 = vpack.c.bf16 %v218, %v214
        %v236 = vpack.c.bf16 %v219, %v219
        %v237 = vpack.c.bf16 %v220, %v220
        %v238 = vpack.c.bf16 %v221, %v221
        %v239 = vpack.c.bf16 %v222, %v222
        %v245 = vunpack.c.l.b16 %v223
        %v246 = vunpack.c.l.b16 %v224
        %v247 = vunpack.c.l.b16 %v225
        %v248 = vunpack.c.l.b16 %v226
        %v249 = vunpack.c.l.b16 %v227
        %v250 = vpack.c.b16 %v246, %v245
        %v251 = vpack.c.b16 %v248, %v247
        %v252 = vpack.c.b16 %v249, %v249
        %vm253 = vcmask 326656
        %v255 = vsel %vm253, %v250, 0
        %v258 = vsel %vm253, %v251, 0
        %v261 = vsel %vm253, %v252, 0
        %vm263 = vcmask 1043456
        %v265 = vsel %vm263, %v236, 0
        %v268 = vsel %vm263, %v237, 0
        %v271 = vsel %vm263, %v238, 0
        %v274 = vsel %vm263, %v239, 0
        %276 = vmatprep.subr.bf16.mxu0 0
        %277 = vmatpush1.bf16.msra.mxu0 0
        %278 = vmatprep.subr.bf16.mxu0 0
        %279 = vmatpush1.bf16.msra.mxu0 0
        %280 = vmatprep.subr.bf16.mxu0 0
        %281 = vmatpush1.bf16.msra.mxu0 0
        %282 = vmatprep.subr.bf16.mxu0 0
        %283 = vmatpush1.bf16.msra.mxu0 0
        %284 = vmatprep.subr.bf16.mxu0 0
        %285 = vmatpush1.bf16.msra.mxu0 0
        %286 = vmatprep.subr.bf16.mxu0 %v268
        %287 = vmatpush1.bf16.msra.mxu0 %v265
        %288 = vmatprep.subr.bf16.mxu0 %v233
        %289 = vmatpush1.bf16.msra.mxu0 %v232
        %290 = vmatprep.subr.bf16.mxu0 %v229
        %291 = vmatpush1.bf16.msra.mxu0 %v228
        %292 = vmatprep.subr.bf16.mxu0 0
        %293 = vmatpush2.bf16.msra.mxu0 0
        %294 = vmatprep.subr.bf16.mxu0 0
        %295 = vmatpush2.bf16.msra.mxu0 0
        %296 = vmatprep.subr.bf16.mxu0 0
        %297 = vmatpush2.bf16.msra.mxu0 0
        %298 = vmatprep.subr.bf16.mxu0 0
        %299 = vmatpush2.bf16.msra.mxu0 0
        %300 = vmatprep.subr.bf16.mxu0 0
        %301 = vmatpush2.bf16.msra.mxu0 0
        %302 = vmatprep.subr.bf16.mxu0 0
        %303 = vmatpush2.bf16.msra.mxu0 0
        %304 = vmatprep.subr.bf16.mxu0 0
        %305 = vmatpush2.bf16.msra.mxu0 0
        %306 = vmatprep.subr.bf16.mxu0 0
        %307 = vmatpush2.bf16.msra.mxu0 0
        %308 = vmatprep.mubr.bf16.mxu0 0
        %309 = vmatmul.mubr.bf16.gmra.mxu0 %v255
        %v310 = vpop.f32.mrf.mxu0
        %v311 = vadd.f32 0.0, %v310
        %v312 = vpop.f32.mrf.mxu0
        %v313 = vadd.f32 0.0, %v312
        %v314 = vpop.f32.mrf.mxu0
        %v315 = vadd.f32 0.0, %v314
        %v316 = vpop.f32.mrf.mxu0
        %v317 = vadd.f32 0.0, %v316
        %318 = vmatprep.mubr.bf16.mxu0 0
        %319 = vmatmul.mubr.bf16.gmra.mxu0 %v258
        %v320 = vpop.f32.mrf.mxu0
        %v321 = vadd.f32 0.0, %v320
        %v322 = vpop.f32.mrf.mxu0
        %v323 = vadd.f32 0.0, %v322
        %v324 = vpop.f32.mrf.mxu0
        %v325 = vadd.f32 0.0, %v324
        %v326 = vpop.f32.mrf.mxu0
        %v327 = vadd.f32 0.0, %v326
        %328 = vmatprep.mubr.bf16.mxu0 0
        %329 = vmatmul.mubr.bf16.gmra.mxu0 %v261
        %v330 = vpop.f32.mrf.mxu0
        %v331 = vadd.f32 0.0, %v330
        %v332 = vpop.f32.mrf.mxu0
        %v333 = vadd.f32 0.0, %v332
        %v334 = vpop.f32.mrf.mxu0
        %v335 = vpop.f32.mrf.mxu0
        %336 = vdwg.mxu0
        %337 = vmatprep.subr.bf16.mxu0 0
        %338 = vmatpush1.bf16.msra.mxu0 0
        %339 = vmatprep.subr.bf16.mxu0 0
        %340 = vmatpush1.bf16.msra.mxu0 0
        %341 = vmatprep.subr.bf16.mxu0 0
        %342 = vmatpush1.bf16.msra.mxu0 0
        %343 = vmatprep.subr.bf16.mxu0 0
        %344 = vmatpush1.bf16.msra.mxu0 0
        %345 = vmatprep.subr.bf16.mxu0 0
        %346 = vmatpush1.bf16.msra.mxu0 0
        %347 = vmatprep.subr.bf16.mxu0 %v274
        %348 = vmatpush1.bf16.msra.mxu0 %v271
        %349 = vmatprep.subr.bf16.mxu0 %v235
        %350 = vmatpush1.bf16.msra.mxu0 %v234
        %351 = vmatprep.subr.bf16.mxu0 %v231
        %352 = vmatpush1.bf16.msra.mxu0 %v230
        %353 = vmatprep.subr.bf16.mxu0 0
        %354 = vmatpush2.bf16.msra.mxu0 0
        %355 = vmatprep.subr.bf16.mxu0 0
        %356 = vmatpush2.bf16.msra.mxu0 0
        %357 = vmatprep.subr.bf16.mxu0 0
        %358 = vmatpush2.bf16.msra.mxu0 0
        %359 = vmatprep.subr.bf16.mxu0 0
        %360 = vmatpush2.bf16.msra.mxu0 0
        %361 = vmatprep.subr.bf16.mxu0 0
        %362 = vmatpush2.bf16.msra.mxu0 0
        %363 = vmatprep.subr.bf16.mxu0 0
        %364 = vmatpush2.bf16.msra.mxu0 0
        %365 = vmatprep.subr.bf16.mxu0 0
        %366 = vmatpush2.bf16.msra.mxu0 0
        %367 = vmatprep.subr.bf16.mxu0 0
        %368 = vmatpush2.bf16.msra.mxu0 0
        %369 = vmatprep.mubr.bf16.mxu0 0
        %370 = vmatmul.mubr.bf16.gmra.mxu0 %v255
        %v371 = vpop.f32.mrf.mxu0
        %v372 = vadd.f32 0.0, %v371
        %v373 = vpop.f32.mrf.mxu0
        %v374 = vadd.f32 0.0, %v373
        %v375 = vpop.f32.mrf.mxu0
        %v376 = vadd.f32 0.0, %v375
        %v377 = vpop.f32.mrf.mxu0
        %v378 = vadd.f32 0.0, %v377
        %379 = vmatprep.mubr.bf16.mxu0 0
        %380 = vmatmul.mubr.bf16.gmra.mxu0 %v258
        %v381 = vpop.f32.mrf.mxu0
        %v382 = vadd.f32 0.0, %v381
        %v383 = vpop.f32.mrf.mxu0
        %v384 = vadd.f32 0.0, %v383
        %v385 = vpop.f32.mrf.mxu0
        %v386 = vadd.f32 0.0, %v385
        %v387 = vpop.f32.mrf.mxu0
        %v388 = vadd.f32 0.0, %v387
        %389 = vmatprep.mubr.bf16.mxu0 0
        %390 = vmatmul.mubr.bf16.gmra.mxu0 %v261
        %v391 = vpop.f32.mrf.mxu0
        %v392 = vadd.f32 0.0, %v391
        %v393 = vpop.f32.mrf.mxu0
        %v394 = vadd.f32 0.0, %v393
        %v395 = vpop.f32.mrf.mxu0
        %v396 = vpop.f32.mrf.mxu0
        %397 = vdwg.mxu0
        %v398 = vmax.f32 %v311, 0.0
        %v399 = vmax.f32 %v313, 0.0
        %v400 = vmax.f32 %v372, 0.0
        %v401 = vmax.f32 %v374, 0.0
        %v402 = vmax.f32 %v315, 0.0
        %v403 = vmax.f32 %v317, 0.0
        %v404 = vmax.f32 %v376, 0.0
        %v405 = vmax.f32 %v378, 0.0
        %v406 = vmax.f32 %v321, 0.0
        %v407 = vmax.f32 %v323, 0.0
        %v408 = vmax.f32 %v382, 0.0
        %v409 = vmax.f32 %v384, 0.0
        %v410 = vmax.f32 %v325, 0.0
        %v411 = vmax.f32 %v327, 0.0
        %v412 = vmax.f32 %v386, 0.0
        %v413 = vmax.f32 %v388, 0.0
        %v414 = vmax.f32 %v331, 0.0
        %v415 = vmax.f32 %v333, 0.0
        %v416 = vmax.f32 %v392, 0.0
        %v417 = vmax.f32 %v394, 0.0
        %s418 = scalar_lea.vmem %s1, 20
        %v419 = vld [vmem:[%s418] sm:$0xf]
        %v420 = vld [vmem:[%s418 + $0x4] sm:$0xf]
        %v421 = vld [vmem:[%s418 + $0x8] sm:$0xf]
        %v422 = vld [vmem:[%s418 + $0xc] sm:$0xf]
        %v423 = vld [vmem:[%s418 + $0x10] sm:$0xf]
        %v424 = vpack.c.bf16 %v402, %v398
        %v425 = vpack.c.bf16 %v403, %v399
        %v426 = vpack.c.bf16 %v404, %v400
        %v427 = vpack.c.bf16 %v405, %v401
        %v428 = vpack.c.bf16 %v410, %v406
        %v429 = vpack.c.bf16 %v411, %v407
        %v430 = vpack.c.bf16 %v412, %v408
        %v431 = vpack.c.bf16 %v413, %v409
        %v432 = vpack.c.bf16 %v414, %v414
        %v433 = vpack.c.bf16 %v415, %v415
        %v434 = vpack.c.bf16 %v416, %v416
        %v435 = vpack.c.bf16 %v417, %v417
        %v441 = vunpack.c.l.b16 %v419
        %v442 = vunpack.c.l.b16 %v420
        %v443 = vunpack.c.l.b16 %v421
        %v444 = vunpack.c.l.b16 %v422
        %v445 = vunpack.c.l.b16 %v423
        %v446 = vpack.c.b16 %v442, %v441
        %v447 = vpack.c.b16 %v444, %v443
        %v448 = vpack.c.b16 %v445, %v445
        %v450 = vsel %vm253, %v446, 0
        %v453 = vsel %vm253, %v447, 0
        %v456 = vsel %vm253, %v448, 0
        %v459 = vsel %vm263, %v432, 0
        %v462 = vsel %vm263, %v433, 0
        %v465 = vsel %vm263, %v434, 0
        %v468 = vsel %vm263, %v435, 0
        %470 = vmatprep.subr.bf16.mxu0 0
        %471 = vmatpush1.bf16.msra.mxu0 0
        %472 = vmatprep.subr.bf16.mxu0 0
        %473 = vmatpush1.bf16.msra.mxu0 0
        %474 = vmatprep.subr.bf16.mxu0 0
        %475 = vmatpush1.bf16.msra.mxu0 0
        %476 = vmatprep.subr.bf16.mxu0 0
        %477 = vmatpush1.bf16.msra.mxu0 0
        %478 = vmatprep.subr.bf16.mxu0 0
        %479 = vmatpush1.bf16.msra.mxu0 0
        %480 = vmatprep.subr.bf16.mxu0 %v462
        %481 = vmatpush1.bf16.msra.mxu0 %v459
        %482 = vmatprep.subr.bf16.mxu0 %v429
        %483 = vmatpush1.bf16.msra.mxu0 %v428
        %484 = vmatprep.subr.bf16.mxu0 %v425
        %485 = vmatpush1.bf16.msra.mxu0 %v424
        %486 = vmatprep.subr.bf16.mxu0 0
        %487 = vmatpush2.bf16.msra.mxu0 0
        %488 = vmatprep.subr.bf16.mxu0 0
        %489 = vmatpush2.bf16.msra.mxu0 0
        %490 = vmatprep.subr.bf16.mxu0 0
        %491 = vmatpush2.bf16.msra.mxu0 0
        %492 = vmatprep.subr.bf16.mxu0 0
        %493 = vmatpush2.bf16.msra.mxu0 0
        %494 = vmatprep.subr.bf16.mxu0 0
        %495 = vmatpush2.bf16.msra.mxu0 0
        %496 = vmatprep.subr.bf16.mxu0 0
        %497 = vmatpush2.bf16.msra.mxu0 0
        %498 = vmatprep.subr.bf16.mxu0 0
        %499 = vmatpush2.bf16.msra.mxu0 0
        %500 = vmatprep.subr.bf16.mxu0 0
        %501 = vmatpush2.bf16.msra.mxu0 0
        %502 = vmatprep.mubr.bf16.mxu0 0
        %503 = vmatmul.mubr.bf16.gmra.mxu0 %v450
        %v504 = vpop.f32.mrf.mxu0
        %v505 = vadd.f32 0.0, %v504
        %v506 = vpop.f32.mrf.mxu0
        %v507 = vadd.f32 0.0, %v506
        %v508 = vpop.f32.mrf.mxu0
        %v509 = vadd.f32 0.0, %v508
        %v510 = vpop.f32.mrf.mxu0
        %v511 = vadd.f32 0.0, %v510
        %512 = vmatprep.mubr.bf16.mxu0 0
        %513 = vmatmul.mubr.bf16.gmra.mxu0 %v453
        %v514 = vpop.f32.mrf.mxu0
        %v515 = vadd.f32 0.0, %v514
        %v516 = vpop.f32.mrf.mxu0
        %v517 = vadd.f32 0.0, %v516
        %v518 = vpop.f32.mrf.mxu0
        %v519 = vadd.f32 0.0, %v518
        %v520 = vpop.f32.mrf.mxu0
        %v521 = vadd.f32 0.0, %v520
        %522 = vmatprep.mubr.bf16.mxu0 0
        %523 = vmatmul.mubr.bf16.gmra.mxu0 %v456
        %v524 = vpop.f32.mrf.mxu0
        %v525 = vadd.f32 0.0, %v524
        %v526 = vpop.f32.mrf.mxu0
        %v527 = vadd.f32 0.0, %v526
        %v528 = vpop.f32.mrf.mxu0
        %v529 = vpop.f32.mrf.mxu0
        %530 = vdwg.mxu0
        %531 = vmatprep.subr.bf16.mxu0 0
        %532 = vmatpush1.bf16.msra.mxu0 0
        %533 = vmatprep.subr.bf16.mxu0 0
        %534 = vmatpush1.bf16.msra.mxu0 0
        %535 = vmatprep.subr.bf16.mxu0 0
        %536 = vmatpush1.bf16.msra.mxu0 0
        %537 = vmatprep.subr.bf16.mxu0 0
        %538 = vmatpush1.bf16.msra.mxu0 0
        %539 = vmatprep.subr.bf16.mxu0 0
        %540 = vmatpush1.bf16.msra.mxu0 0
        %541 = vmatprep.subr.bf16.mxu0 %v468
        %542 = vmatpush1.bf16.msra.mxu0 %v465
        %543 = vmatprep.subr.bf16.mxu0 %v431
        %544 = vmatpush1.bf16.msra.mxu0 %v430
        %545 = vmatprep.subr.bf16.mxu0 %v427
        %546 = vmatpush1.bf16.msra.mxu0 %v426
        %547 = vmatprep.subr.bf16.mxu0 0
        %548 = vmatpush2.bf16.msra.mxu0 0
        %549 = vmatprep.subr.bf16.mxu0 0
        %550 = vmatpush2.bf16.msra.mxu0 0
        %551 = vmatprep.subr.bf16.mxu0 0
        %552 = vmatpush2.bf16.msra.mxu0 0
        %553 = vmatprep.subr.bf16.mxu0 0
        %554 = vmatpush2.bf16.msra.mxu0 0
        %555 = vmatprep.subr.bf16.mxu0 0
        %556 = vmatpush2.bf16.msra.mxu0 0
        %557 = vmatprep.subr.bf16.mxu0 0
        %558 = vmatpush2.bf16.msra.mxu0 0
        %559 = vmatprep.subr.bf16.mxu0 0
        %560 = vmatpush2.bf16.msra.mxu0 0
        %561 = vmatprep.subr.bf16.mxu0 0
        %562 = vmatpush2.bf16.msra.mxu0 0
        %563 = vmatprep.mubr.bf16.mxu0 0
        %564 = vmatmul.mubr.bf16.gmra.mxu0 %v450
        %v565 = vpop.f32.mrf.mxu0
        %v566 = vadd.f32 0.0, %v565
        %v567 = vpop.f32.mrf.mxu0
        %v568 = vadd.f32 0.0, %v567
        %v569 = vpop.f32.mrf.mxu0
        %v570 = vadd.f32 0.0, %v569
        %v571 = vpop.f32.mrf.mxu0
        %v572 = vadd.f32 0.0, %v571
        %573 = vmatprep.mubr.bf16.mxu0 0
        %574 = vmatmul.mubr.bf16.gmra.mxu0 %v453
        %v575 = vpop.f32.mrf.mxu0
        %v576 = vadd.f32 0.0, %v575
        %v577 = vpop.f32.mrf.mxu0
        %v578 = vadd.f32 0.0, %v577
        %v579 = vpop.f32.mrf.mxu0
        %v580 = vadd.f32 0.0, %v579
        %v581 = vpop.f32.mrf.mxu0
        %v582 = vadd.f32 0.0, %v581
        %583 = vmatprep.mubr.bf16.mxu0 0
        %584 = vmatmul.mubr.bf16.gmra.mxu0 %v456
        %v585 = vpop.f32.mrf.mxu0
        %v586 = vadd.f32 0.0, %v585
        %v587 = vpop.f32.mrf.mxu0
        %v588 = vadd.f32 0.0, %v587
        %v589 = vpop.f32.mrf.mxu0
        %v590 = vpop.f32.mrf.mxu0
        %591 = vdwg.mxu0
        %v592 = vmax.f32 %v505, 0.0
        %v593 = vmax.f32 %v507, 0.0
        %v594 = vmax.f32 %v566, 0.0
        %v595 = vmax.f32 %v568, 0.0
        %v596 = vmax.f32 %v509, 0.0
        %v597 = vmax.f32 %v511, 0.0
        %v598 = vmax.f32 %v570, 0.0
        %v599 = vmax.f32 %v572, 0.0
        %v600 = vmax.f32 %v515, 0.0
        %v601 = vmax.f32 %v517, 0.0
        %v602 = vmax.f32 %v576, 0.0
        %v603 = vmax.f32 %v578, 0.0
        %v604 = vmax.f32 %v519, 0.0
        %v605 = vmax.f32 %v521, 0.0
        %v606 = vmax.f32 %v580, 0.0
        %v607 = vmax.f32 %v582, 0.0
        %v608 = vmax.f32 %v525, 0.0
        %v609 = vmax.f32 %v527, 0.0
        %v610 = vmax.f32 %v586, 0.0
        %v611 = vmax.f32 %v588, 0.0
        %s612 = scalar_lea.vmem %s1, 40
        %v613 = vld [vmem:[%s612] sm:$0xf]
        %v614 = vld [vmem:[%s612 + $0x4] sm:$0xf]
        %v615 = vld [vmem:[%s612 + $0x8] sm:$0xf]
        %v616 = vld [vmem:[%s612 + $0xc] sm:$0xf]
        %v617 = vld [vmem:[%s612 + $0x10] sm:$0xf]
        %v618 = vpack.c.bf16 %v596, %v592
        %v619 = vpack.c.bf16 %v597, %v593
        %v620 = vpack.c.bf16 %v598, %v594
        %v621 = vpack.c.bf16 %v599, %v595
        %v622 = vpack.c.bf16 %v604, %v600
        %v623 = vpack.c.bf16 %v605, %v601
        %v624 = vpack.c.bf16 %v606, %v602
        %v625 = vpack.c.bf16 %v607, %v603
        %v626 = vpack.c.bf16 %v608, %v608
        %v627 = vpack.c.bf16 %v609, %v609
        %v628 = vpack.c.bf16 %v610, %v610
        %v629 = vpack.c.bf16 %v611, %v611
        %v635 = vunpack.c.l.b16 %v613
        %v636 = vunpack.c.l.b16 %v614
        %v637 = vunpack.c.l.b16 %v615
        %v638 = vunpack.c.l.b16 %v616
        %v639 = vunpack.c.l.b16 %v617
        %v640 = vpack.c.b16 %v636, %v635
        %v641 = vpack.c.b16 %v638, %v637
        %v642 = vpack.c.b16 %v639, %v639
        %v644 = vsel %vm253, %v640, 0
        %v647 = vsel %vm253, %v641, 0
        %v650 = vsel %vm253, %v642, 0
        %v653 = vsel %vm263, %v626, 0
        %v656 = vsel %vm263, %v627, 0
        %v659 = vsel %vm263, %v628, 0
        %v662 = vsel %vm263, %v629, 0
        %664 = vmatprep.subr.bf16.mxu0 0
        %665 = vmatpush1.bf16.msra.mxu0 0
        %666 = vmatprep.subr.bf16.mxu0 0
        %667 = vmatpush1.bf16.msra.mxu0 0
        %668 = vmatprep.subr.bf16.mxu0 0
        %669 = vmatpush1.bf16.msra.mxu0 0
        %670 = vmatprep.subr.bf16.mxu0 0
        %671 = vmatpush1.bf16.msra.mxu0 0
        %672 = vmatprep.subr.bf16.mxu0 0
        %673 = vmatpush1.bf16.msra.mxu0 0
        %674 = vmatprep.subr.bf16.mxu0 %v656
        %675 = vmatpush1.bf16.msra.mxu0 %v653
        %676 = vmatprep.subr.bf16.mxu0 %v623
        %677 = vmatpush1.bf16.msra.mxu0 %v622
        %678 = vmatprep.subr.bf16.mxu0 %v619
        %679 = vmatpush1.bf16.msra.mxu0 %v618
        %680 = vmatprep.subr.bf16.mxu0 0
        %681 = vmatpush2.bf16.msra.mxu0 0
        %682 = vmatprep.subr.bf16.mxu0 0
        %683 = vmatpush2.bf16.msra.mxu0 0
        %684 = vmatprep.subr.bf16.mxu0 0
        %685 = vmatpush2.bf16.msra.mxu0 0
        %686 = vmatprep.subr.bf16.mxu0 0
        %687 = vmatpush2.bf16.msra.mxu0 0
        %688 = vmatprep.subr.bf16.mxu0 0
        %689 = vmatpush2.bf16.msra.mxu0 0
        %690 = vmatprep.subr.bf16.mxu0 0
        %691 = vmatpush2.bf16.msra.mxu0 0
        %692 = vmatprep.subr.bf16.mxu0 0
        %693 = vmatpush2.bf16.msra.mxu0 0
        %694 = vmatprep.subr.bf16.mxu0 0
        %695 = vmatpush2.bf16.msra.mxu0 0
        %696 = vmatprep.mubr.bf16.mxu0 0
        %697 = vmatmul.mubr.bf16.gmra.mxu0 %v644
        %v698 = vpop.f32.mrf.mxu0
        %v699 = vadd.f32 0.0, %v698
        %v700 = vpop.f32.mrf.mxu0
        %v701 = vadd.f32 0.0, %v700
        %v702 = vpop.f32.mrf.mxu0
        %v703 = vadd.f32 0.0, %v702
        %v704 = vpop.f32.mrf.mxu0
        %v705 = vadd.f32 0.0, %v704
        %706 = vmatprep.mubr.bf16.mxu0 0
        %707 = vmatmul.mubr.bf16.gmra.mxu0 %v647
        %v708 = vpop.f32.mrf.mxu0
        %v709 = vadd.f32 0.0, %v708
        %v710 = vpop.f32.mrf.mxu0
        %v711 = vadd.f32 0.0, %v710
        %v712 = vpop.f32.mrf.mxu0
        %v713 = vadd.f32 0.0, %v712
        %v714 = vpop.f32.mrf.mxu0
        %v715 = vadd.f32 0.0, %v714
        %716 = vmatprep.mubr.bf16.mxu0 0
        %717 = vmatmul.mubr.bf16.gmra.mxu0 %v650
        %v718 = vpop.f32.mrf.mxu0
        %v719 = vadd.f32 0.0, %v718
        %v720 = vpop.f32.mrf.mxu0
        %v721 = vadd.f32 0.0, %v720
        %v722 = vpop.f32.mrf.mxu0
        %v723 = vpop.f32.mrf.mxu0
        %724 = vdwg.mxu0
        %725 = vmatprep.subr.bf16.mxu0 0
        %726 = vmatpush1.bf16.msra.mxu0 0
        %727 = vmatprep.subr.bf16.mxu0 0
        %728 = vmatpush1.bf16.msra.mxu0 0
        %729 = vmatprep.subr.bf16.mxu0 0
        %730 = vmatpush1.bf16.msra.mxu0 0
        %731 = vmatprep.subr.bf16.mxu0 0
        %732 = vmatpush1.bf16.msra.mxu0 0
        %733 = vmatprep.subr.bf16.mxu0 0
        %734 = vmatpush1.bf16.msra.mxu0 0
        %735 = vmatprep.subr.bf16.mxu0 %v662
        %736 = vmatpush1.bf16.msra.mxu0 %v659
        %737 = vmatprep.subr.bf16.mxu0 %v625
        %738 = vmatpush1.bf16.msra.mxu0 %v624
        %739 = vmatprep.subr.bf16.mxu0 %v621
        %740 = vmatpush1.bf16.msra.mxu0 %v620
        %741 = vmatprep.subr.bf16.mxu0 0
        %742 = vmatpush2.bf16.msra.mxu0 0
        %743 = vmatprep.subr.bf16.mxu0 0
        %744 = vmatpush2.bf16.msra.mxu0 0
        %745 = vmatprep.subr.bf16.mxu0 0
        %746 = vmatpush2.bf16.msra.mxu0 0
        %747 = vmatprep.subr.bf16.mxu0 0
        %748 = vmatpush2.bf16.msra.mxu0 0
        %749 = vmatprep.subr.bf16.mxu0 0
        %750 = vmatpush2.bf16.msra.mxu0 0
        %751 = vmatprep.subr.bf16.mxu0 0
        %752 = vmatpush2.bf16.msra.mxu0 0
        %753 = vmatprep.subr.bf16.mxu0 0
        %754 = vmatpush2.bf16.msra.mxu0 0
        %755 = vmatprep.subr.bf16.mxu0 0
        %756 = vmatpush2.bf16.msra.mxu0 0
        %757 = vmatprep.mubr.bf16.mxu0 0
        %758 = vmatmul.mubr.bf16.gmra.mxu0 %v644
        %v759 = vpop.f32.mrf.mxu0
        %v760 = vadd.f32 0.0, %v759
        %v761 = vpop.f32.mrf.mxu0
        %v762 = vadd.f32 0.0, %v761
        %v763 = vpop.f32.mrf.mxu0
        %v764 = vadd.f32 0.0, %v763
        %v765 = vpop.f32.mrf.mxu0
        %v766 = vadd.f32 0.0, %v765
        %767 = vmatprep.mubr.bf16.mxu0 0
        %768 = vmatmul.mubr.bf16.gmra.mxu0 %v647
        %v769 = vpop.f32.mrf.mxu0
        %v770 = vadd.f32 0.0, %v769
        %v771 = vpop.f32.mrf.mxu0
        %v772 = vadd.f32 0.0, %v771
        %v773 = vpop.f32.mrf.mxu0
        %v774 = vadd.f32 0.0, %v773
        %v775 = vpop.f32.mrf.mxu0
        %v776 = vadd.f32 0.0, %v775
        %777 = vmatprep.mubr.bf16.mxu0 0
        %778 = vmatmul.mubr.bf16.gmra.mxu0 %v650
        %v779 = vpop.f32.mrf.mxu0
        %v780 = vadd.f32 0.0, %v779
        %v781 = vpop.f32.mrf.mxu0
        %v782 = vadd.f32 0.0, %v781
        %v783 = vpop.f32.mrf.mxu0
        %v784 = vpop.f32.mrf.mxu0
        %785 = vdwg.mxu0
        %v786 = vsub.f32 %v203, %v699
        %v787 = vsub.f32 %v204, %v701
        %v788 = vsub.f32 %v205, %v760
        %v789 = vsub.f32 %v206, %v762
        %v790 = vsub.f32 %v207, %v703
        %v791 = vsub.f32 %v208, %v705
        %v792 = vsub.f32 %v209, %v764
        %v793 = vsub.f32 %v210, %v766
        %v794 = vsub.f32 %v211, %v709
        %v795 = vsub.f32 %v212, %v711
        %v796 = vsub.f32 %v213, %v770
        %v797 = vsub.f32 %v214, %v772
        %v798 = vsub.f32 %v215, %v713
        %v799 = vsub.f32 %v216, %v715
        %v800 = vsub.f32 %v217, %v774
        %v801 = vsub.f32 %v218, %v776
        %v802 = vsub.f32 %v219, %v719
        %v803 = vsub.f32 %v220, %v721
        %v804 = vsub.f32 %v221, %v780
        %v805 = vsub.f32 %v222, %v782
        %v806 = vpack.c.bf16 %v790, %v786
        %v807 = vpack.c.bf16 %v791, %v787
        %v808 = vpack.c.bf16 %v792, %v788
        %v809 = vpack.c.bf16 %v793, %v789
        %v810 = vpack.c.bf16 %v798, %v794
        %v811 = vpack.c.bf16 %v799, %v795
        %v812 = vpack.c.bf16 %v800, %v796
        %v813 = vpack.c.bf16 %v801, %v797
        %v814 = vpack.c.bf16 %v802, %v802
        %v815 = vpack.c.bf16 %v803, %v803
        %v816 = vpack.c.bf16 %v804, %v804
        %v817 = vpack.c.bf16 %v805, %v805
        %v819 = vsel %vm263, %v814, 0
        %v822 = vsel %vm263, %v815, 0
        %v825 = vsel %vm263, %v816, 0
        %v828 = vsel %vm263, %v817, 0
        %830 = vmatprep.subr.bf16.mxu0 0
        %831 = vmatpush1.bf16.msra.mxu0 0
        %832 = vmatprep.subr.bf16.mxu0 0
        %833 = vmatpush1.bf16.msra.mxu0 0
        %834 = vmatprep.subr.bf16.mxu0 0
        %835 = vmatpush1.bf16.msra.mxu0 0
        %836 = vmatprep.subr.bf16.mxu0 0
        %837 = vmatpush1.bf16.msra.mxu0 0
        %838 = vmatprep.subr.bf16.mxu0 0
        %839 = vmatpush1.bf16.msra.mxu0 0
        %840 = vmatprep.subr.bf16.mxu0 %v822
        %841 = vmatpush1.bf16.msra.mxu0 %v819
        %842 = vmatprep.subr.bf16.mxu0 %v811
        %843 = vmatpush1.bf16.msra.mxu0 %v810
        %844 = vmatprep.subr.bf16.mxu0 %v807
        %845 = vmatpush1.bf16.msra.mxu0 %v806
        %846 = vmatprep.subr.bf16.mxu0 0
        %847 = vmatpush2.bf16.msra.mxu0 0
        %848 = vmatprep.subr.bf16.mxu0 0
        %849 = vmatpush2.bf16.msra.mxu0 0
        %850 = vmatprep.subr.bf16.mxu0 0
        %851 = vmatpush2.bf16.msra.mxu0 0
        %852 = vmatprep.subr.bf16.mxu0 0
        %853 = vmatpush2.bf16.msra.mxu0 0
        %854 = vmatprep.subr.bf16.mxu0 0
        %855 = vmatpush2.bf16.msra.mxu0 0
        %856 = vmatprep.subr.bf16.mxu0 0
        %857 = vmatpush2.bf16.msra.mxu0 0
        %858 = vmatprep.subr.bf16.mxu0 0
        %859 = vmatpush2.bf16.msra.mxu0 0
        %860 = vmatprep.subr.bf16.mxu0 0
        %861 = vmatpush2.bf16.msra.mxu0 0
        %862 = vmatprep.mubr.bf16.mxu0 0
        %863 = vmatmul.mubr.bf16.gmra.mxu0 %v255
        %v864 = vpop.f32.mrf.mxu0
        %v865 = vadd.f32 0.0, %v864
        %v866 = vpop.f32.mrf.mxu0
        %v867 = vadd.f32 0.0, %v866
        %v868 = vpop.f32.mrf.mxu0
        %v869 = vadd.f32 0.0, %v868
        %v870 = vpop.f32.mrf.mxu0
        %v871 = vadd.f32 0.0, %v870
        %872 = vmatprep.mubr.bf16.mxu0 0
        %873 = vmatmul.mubr.bf16.gmra.mxu0 %v258
        %v874 = vpop.f32.mrf.mxu0
        %v875 = vadd.f32 0.0, %v874
        %v876 = vpop.f32.mrf.mxu0
        %v877 = vadd.f32 0.0, %v876
        %v878 = vpop.f32.mrf.mxu0
        %v879 = vadd.f32 0.0, %v878
        %v880 = vpop.f32.mrf.mxu0
        %v881 = vadd.f32 0.0, %v880
        %882 = vmatprep.mubr.bf16.mxu0 0
        %883 = vmatmul.mubr.bf16.gmra.mxu0 %v261
        %v884 = vpop.f32.mrf.mxu0
        %v885 = vadd.f32 0.0, %v884
        %v886 = vpop.f32.mrf.mxu0
        %v887 = vadd.f32 0.0, %v886
        %v888 = vpop.f32.mrf.mxu0
        %v889 = vpop.f32.mrf.mxu0
        %890 = vdwg.mxu0
        %891 = vmatprep.subr.bf16.mxu0 0
        %892 = vmatpush1.bf16.msra.mxu0 0
        %893 = vmatprep.subr.bf16.mxu0 0
        %894 = vmatpush1.bf16.msra.mxu0 0
        %895 = vmatprep.subr.bf16.mxu0 0
        %896 = vmatpush1.bf16.msra.mxu0 0
        %897 = vmatprep.subr.bf16.mxu0 0
        %898 = vmatpush1.bf16.msra.mxu0 0
        %899 = vmatprep.subr.bf16.mxu0 0
        %900 = vmatpush1.bf16.msra.mxu0 0
        %901 = vmatprep.subr.bf16.mxu0 %v828
        %902 = vmatpush1.bf16.msra.mxu0 %v825
        %903 = vmatprep.subr.bf16.mxu0 %v813
        %904 = vmatpush1.bf16.msra.mxu0 %v812
        %905 = vmatprep.subr.bf16.mxu0 %v809
        %906 = vmatpush1.bf16.msra.mxu0 %v808
        %907 = vmatprep.subr.bf16.mxu0 0
        %908 = vmatpush2.bf16.msra.mxu0 0
        %909 = vmatprep.subr.bf16.mxu0 0
        %910 = vmatpush2.bf16.msra.mxu0 0
        %911 = vmatprep.subr.bf16.mxu0 0
        %912 = vmatpush2.bf16.msra.mxu0 0
        %913 = vmatprep.subr.bf16.mxu0 0
        %914 = vmatpush2.bf16.msra.mxu0 0
        %915 = vmatprep.subr.bf16.mxu0 0
        %916 = vmatpush2.bf16.msra.mxu0 0
        %917 = vmatprep.subr.bf16.mxu0 0
        %918 = vmatpush2.bf16.msra.mxu0 0
        %919 = vmatprep.subr.bf16.mxu0 0
        %920 = vmatpush2.bf16.msra.mxu0 0
        %921 = vmatprep.subr.bf16.mxu0 0
        %922 = vmatpush2.bf16.msra.mxu0 0
        %923 = vmatprep.mubr.bf16.mxu0 0
        %924 = vmatmul.mubr.bf16.gmra.mxu0 %v255
        %v925 = vpop.f32.mrf.mxu0
        %v926 = vadd.f32 0.0, %v925
        %v927 = vpop.f32.mrf.mxu0
        %v928 = vadd.f32 0.0, %v927
        %v929 = vpop.f32.mrf.mxu0
        %v930 = vadd.f32 0.0, %v929
        %v931 = vpop.f32.mrf.mxu0
        %v932 = vadd.f32 0.0, %v931
        %933 = vmatprep.mubr.bf16.mxu0 0
        %934 = vmatmul.mubr.bf16.gmra.mxu0 %v258
        %v935 = vpop.f32.mrf.mxu0
        %v936 = vadd.f32 0.0, %v935
        %v937 = vpop.f32.mrf.mxu0
        %v938 = vadd.f32 0.0, %v937
        %v939 = vpop.f32.mrf.mxu0
        %v940 = vadd.f32 0.0, %v939
        %v941 = vpop.f32.mrf.mxu0
        %v942 = vadd.f32 0.0, %v941
        %943 = vmatprep.mubr.bf16.mxu0 0
        %944 = vmatmul.mubr.bf16.gmra.mxu0 %v261
        %v945 = vpop.f32.mrf.mxu0
        %v946 = vadd.f32 0.0, %v945
        %v947 = vpop.f32.mrf.mxu0
        %v948 = vadd.f32 0.0, %v947
        %v949 = vpop.f32.mrf.mxu0
        %v950 = vpop.f32.mrf.mxu0
        %951 = vdwg.mxu0
        %v952 = vmax.f32 %v865, 0.0
        %v953 = vmax.f32 %v867, 0.0
        %v954 = vmax.f32 %v926, 0.0
        %v955 = vmax.f32 %v928, 0.0
        %v956 = vmax.f32 %v869, 0.0
        %v957 = vmax.f32 %v871, 0.0
        %v958 = vmax.f32 %v930, 0.0
        %v959 = vmax.f32 %v932, 0.0
        %v960 = vmax.f32 %v875, 0.0
        %v961 = vmax.f32 %v877, 0.0
        %v962 = vmax.f32 %v936, 0.0
        %v963 = vmax.f32 %v938, 0.0
        %v964 = vmax.f32 %v879, 0.0
        %v965 = vmax.f32 %v881, 0.0
        %v966 = vmax.f32 %v940, 0.0
        %v967 = vmax.f32 %v942, 0.0
        %v968 = vmax.f32 %v885, 0.0
        %v969 = vmax.f32 %v887, 0.0
        %v970 = vmax.f32 %v946, 0.0
        %v971 = vmax.f32 %v948, 0.0
        %v972 = vpack.c.bf16 %v956, %v952
        %v973 = vpack.c.bf16 %v957, %v953
        %v974 = vpack.c.bf16 %v958, %v954
        %v975 = vpack.c.bf16 %v959, %v955
        %v976 = vpack.c.bf16 %v964, %v960
        %v977 = vpack.c.bf16 %v965, %v961
        %v978 = vpack.c.bf16 %v966, %v962
        %v979 = vpack.c.bf16 %v967, %v963
        %v980 = vpack.c.bf16 %v968, %v968
        %v981 = vpack.c.bf16 %v969, %v969
        %v982 = vpack.c.bf16 %v970, %v970
        %v983 = vpack.c.bf16 %v971, %v971
        %v985 = vsel %vm263, %v980, 0
        %v988 = vsel %vm263, %v981, 0
        %v991 = vsel %vm263, %v982, 0
        %v994 = vsel %vm263, %v983, 0
        %996 = vmatprep.subr.bf16.mxu0 0
        %997 = vmatpush1.bf16.msra.mxu0 0
        %998 = vmatprep.subr.bf16.mxu0 0
        %999 = vmatpush1.bf16.msra.mxu0 0
        %1000 = vmatprep.subr.bf16.mxu0 0
        %1001 = vmatpush1.bf16.msra.mxu0 0
        %1002 = vmatprep.subr.bf16.mxu0 0
        %1003 = vmatpush1.bf16.msra.mxu0 0
        %1004 = vmatprep.subr.bf16.mxu0 0
        %1005 = vmatpush1.bf16.msra.mxu0 0
        %1006 = vmatprep.subr.bf16.mxu0 %v988
        %1007 = vmatpush1.bf16.msra.mxu0 %v985
        %1008 = vmatprep.subr.bf16.mxu0 %v977
        %1009 = vmatpush1.bf16.msra.mxu0 %v976
        %1010 = vmatprep.subr.bf16.mxu0 %v973
        %1011 = vmatpush1.bf16.msra.mxu0 %v972
        %1012 = vmatprep.subr.bf16.mxu0 0
        %1013 = vmatpush2.bf16.msra.mxu0 0
        %1014 = vmatprep.subr.bf16.mxu0 0
        %1015 = vmatpush2.bf16.msra.mxu0 0
        %1016 = vmatprep.subr.bf16.mxu0 0
        %1017 = vmatpush2.bf16.msra.mxu0 0
        %1018 = vmatprep.subr.bf16.mxu0 0
        %1019 = vmatpush2.bf16.msra.mxu0 0
        %1020 = vmatprep.subr.bf16.mxu0 0
        %1021 = vmatpush2.bf16.msra.mxu0 0
        %1022 = vmatprep.subr.bf16.mxu0 0
        %1023 = vmatpush2.bf16.msra.mxu0 0
        %1024 = vmatprep.subr.bf16.mxu0 0
        %1025 = vmatpush2.bf16.msra.mxu0 0
        %1026 = vmatprep.subr.bf16.mxu0 0
        %1027 = vmatpush2.bf16.msra.mxu0 0
        %1028 = vmatprep.mubr.bf16.mxu0 0
        %1029 = vmatmul.mubr.bf16.gmra.mxu0 %v450
        %v1030 = vpop.f32.mrf.mxu0
        %v1031 = vadd.f32 0.0, %v1030
        %v1032 = vpop.f32.mrf.mxu0
        %v1033 = vadd.f32 0.0, %v1032
        %v1034 = vpop.f32.mrf.mxu0
        %v1035 = vadd.f32 0.0, %v1034
        %v1036 = vpop.f32.mrf.mxu0
        %v1037 = vadd.f32 0.0, %v1036
        %1038 = vmatprep.mubr.bf16.mxu0 0
        %1039 = vmatmul.mubr.bf16.gmra.mxu0 %v453
        %v1040 = vpop.f32.mrf.mxu0
        %v1041 = vadd.f32 0.0, %v1040
        %v1042 = vpop.f32.mrf.mxu0
        %v1043 = vadd.f32 0.0, %v1042
        %v1044 = vpop.f32.mrf.mxu0
        %v1045 = vadd.f32 0.0, %v1044
        %v1046 = vpop.f32.mrf.mxu0
        %v1047 = vadd.f32 0.0, %v1046
        %1048 = vmatprep.mubr.bf16.mxu0 0
        %1049 = vmatmul.mubr.bf16.gmra.mxu0 %v456
        %v1050 = vpop.f32.mrf.mxu0
        %v1051 = vadd.f32 0.0, %v1050
        %v1052 = vpop.f32.mrf.mxu0
        %v1053 = vadd.f32 0.0, %v1052
        %v1054 = vpop.f32.mrf.mxu0
        %v1055 = vpop.f32.mrf.mxu0
        %1056 = vdwg.mxu0
        %1057 = vmatprep.subr.bf16.mxu0 0
        %1058 = vmatpush1.bf16.msra.mxu0 0
        %1059 = vmatprep.subr.bf16.mxu0 0
        %1060 = vmatpush1.bf16.msra.mxu0 0
        %1061 = vmatprep.subr.bf16.mxu0 0
        %1062 = vmatpush1.bf16.msra.mxu0 0
        %1063 = vmatprep.subr.bf16.mxu0 0
        %1064 = vmatpush1.bf16.msra.mxu0 0
        %1065 = vmatprep.subr.bf16.mxu0 0
        %1066 = vmatpush1.bf16.msra.mxu0 0
        %1067 = vmatprep.subr.bf16.mxu0 %v994
        %1068 = vmatpush1.bf16.msra.mxu0 %v991
        %1069 = vmatprep.subr.bf16.mxu0 %v979
        %1070 = vmatpush1.bf16.msra.mxu0 %v978
        %1071 = vmatprep.subr.bf16.mxu0 %v975
        %1072 = vmatpush1.bf16.msra.mxu0 %v974
        %1073 = vmatprep.subr.bf16.mxu0 0
        %1074 = vmatpush2.bf16.msra.mxu0 0
        %1075 = vmatprep.subr.bf16.mxu0 0
        %1076 = vmatpush2.bf16.msra.mxu0 0
        %1077 = vmatprep.subr.bf16.mxu0 0
        %1078 = vmatpush2.bf16.msra.mxu0 0
        %1079 = vmatprep.subr.bf16.mxu0 0
        %1080 = vmatpush2.bf16.msra.mxu0 0
        %1081 = vmatprep.subr.bf16.mxu0 0
        %1082 = vmatpush2.bf16.msra.mxu0 0
        %1083 = vmatprep.subr.bf16.mxu0 0
        %1084 = vmatpush2.bf16.msra.mxu0 0
        %1085 = vmatprep.subr.bf16.mxu0 0
        %1086 = vmatpush2.bf16.msra.mxu0 0
        %1087 = vmatprep.subr.bf16.mxu0 0
        %1088 = vmatpush2.bf16.msra.mxu0 0
        %1089 = vmatprep.mubr.bf16.mxu0 0
        %1090 = vmatmul.mubr.bf16.gmra.mxu0 %v450
        %v1091 = vpop.f32.mrf.mxu0
        %v1092 = vadd.f32 0.0, %v1091
        %v1093 = vpop.f32.mrf.mxu0
        %v1094 = vadd.f32 0.0, %v1093
        %v1095 = vpop.f32.mrf.mxu0
        %v1096 = vadd.f32 0.0, %v1095
        %v1097 = vpop.f32.mrf.mxu0
        %v1098 = vadd.f32 0.0, %v1097
        %1099 = vmatprep.mubr.bf16.mxu0 0
        %1100 = vmatmul.mubr.bf16.gmra.mxu0 %v453
        %v1101 = vpop.f32.mrf.mxu0
        %v1102 = vadd.f32 0.0, %v1101
        %v1103 = vpop.f32.mrf.mxu0
        %v1104 = vadd.f32 0.0, %v1103
        %v1105 = vpop.f32.mrf.mxu0
        %v1106 = vadd.f32 0.0, %v1105
        %v1107 = vpop.f32.mrf.mxu0
        %v1108 = vadd.f32 0.0, %v1107
        %1109 = vmatprep.mubr.bf16.mxu0 0
        %1110 = vmatmul.mubr.bf16.gmra.mxu0 %v456
        %v1111 = vpop.f32.mrf.mxu0
        %v1112 = vadd.f32 0.0, %v1111
        %v1113 = vpop.f32.mrf.mxu0
        %v1114 = vadd.f32 0.0, %v1113
        %v1115 = vpop.f32.mrf.mxu0
        %v1116 = vpop.f32.mrf.mxu0
        %1117 = vdwg.mxu0
        %v1118 = vmax.f32 %v1031, 0.0
        %v1119 = vmax.f32 %v1033, 0.0
        %v1120 = vmax.f32 %v1092, 0.0
        %v1121 = vmax.f32 %v1094, 0.0
        %v1122 = vmax.f32 %v1035, 0.0
        %v1123 = vmax.f32 %v1037, 0.0
        %v1124 = vmax.f32 %v1096, 0.0
        %v1125 = vmax.f32 %v1098, 0.0
        %v1126 = vmax.f32 %v1041, 0.0
        %v1127 = vmax.f32 %v1043, 0.0
        %v1128 = vmax.f32 %v1102, 0.0
        %v1129 = vmax.f32 %v1104, 0.0
        %v1130 = vmax.f32 %v1045, 0.0
        %v1131 = vmax.f32 %v1047, 0.0
        %v1132 = vmax.f32 %v1106, 0.0
        %v1133 = vmax.f32 %v1108, 0.0
        %v1134 = vmax.f32 %v1051, 0.0
        %v1135 = vmax.f32 %v1053, 0.0
        %v1136 = vmax.f32 %v1112, 0.0
        %v1137 = vmax.f32 %v1114, 0.0
        %v1138 = vpack.c.bf16 %v1122, %v1118
        %v1139 = vpack.c.bf16 %v1123, %v1119
        %v1140 = vpack.c.bf16 %v1124, %v1120
        %v1141 = vpack.c.bf16 %v1125, %v1121
        %v1142 = vpack.c.bf16 %v1130, %v1126
        %v1143 = vpack.c.bf16 %v1131, %v1127
        %v1144 = vpack.c.bf16 %v1132, %v1128
        %v1145 = vpack.c.bf16 %v1133, %v1129
        %v1146 = vpack.c.bf16 %v1134, %v1134
        %v1147 = vpack.c.bf16 %v1135, %v1135
        %v1148 = vpack.c.bf16 %v1136, %v1136
        %v1149 = vpack.c.bf16 %v1137, %v1137
        %v1151 = vsel %vm263, %v1146, 0
        %v1154 = vsel %vm263, %v1147, 0
        %v1157 = vsel %vm263, %v1148, 0
        %v1160 = vsel %vm263, %v1149, 0
        %1162 = vmatprep.subr.bf16.mxu0 0
        %1163 = vmatpush1.bf16.msra.mxu0 0
        %1164 = vmatprep.subr.bf16.mxu0 0
        %1165 = vmatpush1.bf16.msra.mxu0 0
        %1166 = vmatprep.subr.bf16.mxu0 0
        %1167 = vmatpush1.bf16.msra.mxu0 0
        %1168 = vmatprep.subr.bf16.mxu0 0
        %1169 = vmatpush1.bf16.msra.mxu0 0
        %1170 = vmatprep.subr.bf16.mxu0 0
        %1171 = vmatpush1.bf16.msra.mxu0 0
        %1172 = vmatprep.subr.bf16.mxu0 %v1154
        %1173 = vmatpush1.bf16.msra.mxu0 %v1151
        %1174 = vmatprep.subr.bf16.mxu0 %v1143
        %1175 = vmatpush1.bf16.msra.mxu0 %v1142
        %1176 = vmatprep.subr.bf16.mxu0 %v1139
        %1177 = vmatpush1.bf16.msra.mxu0 %v1138
        %1178 = vmatprep.subr.bf16.mxu0 0
        %1179 = vmatpush2.bf16.msra.mxu0 0
        %1180 = vmatprep.subr.bf16.mxu0 0
        %1181 = vmatpush2.bf16.msra.mxu0 0
        %1182 = vmatprep.subr.bf16.mxu0 0
        %1183 = vmatpush2.bf16.msra.mxu0 0
        %1184 = vmatprep.subr.bf16.mxu0 0
        %1185 = vmatpush2.bf16.msra.mxu0 0
        %1186 = vmatprep.subr.bf16.mxu0 0
        %1187 = vmatpush2.bf16.msra.mxu0 0
        %1188 = vmatprep.subr.bf16.mxu0 0
        %1189 = vmatpush2.bf16.msra.mxu0 0
        %1190 = vmatprep.subr.bf16.mxu0 0
        %1191 = vmatpush2.bf16.msra.mxu0 0
        %1192 = vmatprep.subr.bf16.mxu0 0
        %1193 = vmatpush2.bf16.msra.mxu0 0
        %1194 = vmatprep.mubr.bf16.mxu0 0
        %1195 = vmatmul.mubr.bf16.gmra.mxu0 %v644
        %v1196 = vpop.f32.mrf.mxu0
        %v1197 = vadd.f32 0.0, %v1196
        %v1198 = vpop.f32.mrf.mxu0
        %v1199 = vadd.f32 0.0, %v1198
        %v1200 = vpop.f32.mrf.mxu0
        %v1201 = vadd.f32 0.0, %v1200
        %v1202 = vpop.f32.mrf.mxu0
        %v1203 = vadd.f32 0.0, %v1202
        %1204 = vmatprep.mubr.bf16.mxu0 0
        %1205 = vmatmul.mubr.bf16.gmra.mxu0 %v647
        %v1206 = vpop.f32.mrf.mxu0
        %v1207 = vadd.f32 0.0, %v1206
        %v1208 = vpop.f32.mrf.mxu0
        %v1209 = vadd.f32 0.0, %v1208
        %v1210 = vpop.f32.mrf.mxu0
        %v1211 = vadd.f32 0.0, %v1210
        %v1212 = vpop.f32.mrf.mxu0
        %v1213 = vadd.f32 0.0, %v1212
        %1214 = vmatprep.mubr.bf16.mxu0 0
        %1215 = vmatmul.mubr.bf16.gmra.mxu0 %v650
        %v1216 = vpop.f32.mrf.mxu0
        %v1217 = vadd.f32 0.0, %v1216
        %v1218 = vpop.f32.mrf.mxu0
        %v1219 = vadd.f32 0.0, %v1218
        %v1220 = vpop.f32.mrf.mxu0
        %v1221 = vpop.f32.mrf.mxu0
        %1222 = vdwg.mxu0
        %1223 = vmatprep.subr.bf16.mxu0 0
        %1224 = vmatpush1.bf16.msra.mxu0 0
        %1225 = vmatprep.subr.bf16.mxu0 0
        %1226 = vmatpush1.bf16.msra.mxu0 0
        %1227 = vmatprep.subr.bf16.mxu0 0
        %1228 = vmatpush1.bf16.msra.mxu0 0
        %1229 = vmatprep.subr.bf16.mxu0 0
        %1230 = vmatpush1.bf16.msra.mxu0 0
        %1231 = vmatprep.subr.bf16.mxu0 0
        %1232 = vmatpush1.bf16.msra.mxu0 0
        %1233 = vmatprep.subr.bf16.mxu0 %v1160
        %1234 = vmatpush1.bf16.msra.mxu0 %v1157
        %1235 = vmatprep.subr.bf16.mxu0 %v1145
        %1236 = vmatpush1.bf16.msra.mxu0 %v1144
        %1237 = vmatprep.subr.bf16.mxu0 %v1141
        %1238 = vmatpush1.bf16.msra.mxu0 %v1140
        %1239 = vmatprep.subr.bf16.mxu0 0
        %1240 = vmatpush2.bf16.msra.mxu0 0
        %1241 = vmatprep.subr.bf16.mxu0 0
        %1242 = vmatpush2.bf16.msra.mxu0 0
        %1243 = vmatprep.subr.bf16.mxu0 0
        %1244 = vmatpush2.bf16.msra.mxu0 0
        %1245 = vmatprep.subr.bf16.mxu0 0
        %1246 = vmatpush2.bf16.msra.mxu0 0
        %1247 = vmatprep.subr.bf16.mxu0 0
        %1248 = vmatpush2.bf16.msra.mxu0 0
        %1249 = vmatprep.subr.bf16.mxu0 0
        %1250 = vmatpush2.bf16.msra.mxu0 0
        %1251 = vmatprep.subr.bf16.mxu0 0
        %1252 = vmatpush2.bf16.msra.mxu0 0
        %1253 = vmatprep.subr.bf16.mxu0 0
        %1254 = vmatpush2.bf16.msra.mxu0 0
        %1255 = vmatprep.mubr.bf16.mxu0 0
        %1256 = vmatmul.mubr.bf16.gmra.mxu0 %v644
        %v1257 = vpop.f32.mrf.mxu0
        %v1258 = vadd.f32 0.0, %v1257
        %v1259 = vpop.f32.mrf.mxu0
        %v1260 = vadd.f32 0.0, %v1259
        %v1261 = vpop.f32.mrf.mxu0
        %v1262 = vadd.f32 0.0, %v1261
        %v1263 = vpop.f32.mrf.mxu0
        %v1264 = vadd.f32 0.0, %v1263
        %1265 = vmatprep.mubr.bf16.mxu0 0
        %1266 = vmatmul.mubr.bf16.gmra.mxu0 %v647
        %v1267 = vpop.f32.mrf.mxu0
        %v1268 = vadd.f32 0.0, %v1267
        %v1269 = vpop.f32.mrf.mxu0
        %v1270 = vadd.f32 0.0, %v1269
        %v1271 = vpop.f32.mrf.mxu0
        %v1272 = vadd.f32 0.0, %v1271
        %v1273 = vpop.f32.mrf.mxu0
        %v1274 = vadd.f32 0.0, %v1273
        %1275 = vmatprep.mubr.bf16.mxu0 0
        %1276 = vmatmul.mubr.bf16.gmra.mxu0 %v650
        %v1277 = vpop.f32.mrf.mxu0
        %v1278 = vadd.f32 0.0, %v1277
        %v1279 = vpop.f32.mrf.mxu0
        %v1280 = vadd.f32 0.0, %v1279
        %v1281 = vpop.f32.mrf.mxu0
        %v1282 = vpop.f32.mrf.mxu0
        %1283 = vdwg.mxu0
        %v1284 = vsub.f32 %v786, %v1197
        %v1285 = vsub.f32 %v787, %v1199
        %v1286 = vsub.f32 %v788, %v1258
        %v1287 = vsub.f32 %v789, %v1260
        %v1288 = vsub.f32 %v790, %v1201
        %v1289 = vsub.f32 %v791, %v1203
        %v1290 = vsub.f32 %v792, %v1262
        %v1291 = vsub.f32 %v793, %v1264
        %v1292 = vsub.f32 %v794, %v1207
        %v1293 = vsub.f32 %v795, %v1209
        %v1294 = vsub.f32 %v796, %v1268
        %v1295 = vsub.f32 %v797, %v1270
        %v1296 = vsub.f32 %v798, %v1211
        %v1297 = vsub.f32 %v799, %v1213
        %v1298 = vsub.f32 %v800, %v1272
        %v1299 = vsub.f32 %v801, %v1274
        %v1300 = vsub.f32 %v802, %v1217
        %v1301 = vsub.f32 %v803, %v1219
        %v1302 = vsub.f32 %v804, %v1278
        %v1303 = vsub.f32 %v805, %v1280
        %s1304 = scalar_lea.vmem %s1, 60
        %v1305 = vld [vmem:[%s1304] sm:$0xf]
        %v1306 = vld [vmem:[%s1304 + $0x4] sm:$0xf]
        %v1307 = vld [vmem:[%s1304 + $0x8] sm:$0xf]
        %v1308 = vld [vmem:[%s1304 + $0xc] sm:$0xf]
        %v1309 = vld [vmem:[%s1304 + $0x10] sm:$0xf]
        %v1310 = vpack.c.bf16 %v1288, %v1284
        %v1311 = vpack.c.bf16 %v1289, %v1285
        %v1312 = vpack.c.bf16 %v1290, %v1286
        %v1313 = vpack.c.bf16 %v1291, %v1287
        %v1314 = vpack.c.bf16 %v1296, %v1292
        %v1315 = vpack.c.bf16 %v1297, %v1293
        %v1316 = vpack.c.bf16 %v1298, %v1294
        %v1317 = vpack.c.bf16 %v1299, %v1295
        %v1318 = vpack.c.bf16 %v1300, %v1300
        %v1319 = vpack.c.bf16 %v1301, %v1301
        %v1320 = vpack.c.bf16 %v1302, %v1302
        %v1321 = vpack.c.bf16 %v1303, %v1303
        %v1327 = vunpack.c.l.b16 %v1305
        %v1328 = vunpack.c.l.b16 %v1306
        %v1329 = vunpack.c.l.b16 %v1307
        %v1330 = vunpack.c.l.b16 %v1308
        %v1331 = vunpack.c.l.b16 %v1309
        %v1332 = vpack.c.b16 %v1328, %v1327
        %v1333 = vpack.c.b16 %v1330, %v1329
        %v1334 = vpack.c.b16 %v1331, %v1331
        %v1336 = vsel %vm253, %v1332, 0
        %v1339 = vsel %vm253, %v1333, 0
        %v1342 = vsel %vm253, %v1334, 0
        %v1345 = vsel %vm263, %v1318, 0
        %v1348 = vsel %vm263, %v1319, 0
        %v1351 = vsel %vm263, %v1320, 0
        %v1354 = vsel %vm263, %v1321, 0
        %1356 = vmatprep.subr.bf16.mxu0 0
        %1357 = vmatpush1.bf16.msra.mxu0 0
        %1358 = vmatprep.subr.bf16.mxu0 0
        %1359 = vmatpush1.bf16.msra.mxu0 0
        %1360 = vmatprep.subr.bf16.mxu0 0
        %1361 = vmatpush1.bf16.msra.mxu0 0
        %1362 = vmatprep.subr.bf16.mxu0 0
        %1363 = vmatpush1.bf16.msra.mxu0 0
        %1364 = vmatprep.subr.bf16.mxu0 0
        %1365 = vmatpush1.bf16.msra.mxu0 0
        %1366 = vmatprep.subr.bf16.mxu0 %v1348
        %1367 = vmatpush1.bf16.msra.mxu0 %v1345
        %1368 = vmatprep.subr.bf16.mxu0 %v1315
        %1369 = vmatpush1.bf16.msra.mxu0 %v1314
        %1370 = vmatprep.subr.bf16.mxu0 %v1311
        %1371 = vmatpush1.bf16.msra.mxu0 %v1310
        %1372 = vmatprep.subr.bf16.mxu0 0
        %1373 = vmatpush2.bf16.msra.mxu0 0
        %1374 = vmatprep.subr.bf16.mxu0 0
        %1375 = vmatpush2.bf16.msra.mxu0 0
        %1376 = vmatprep.subr.bf16.mxu0 0
        %1377 = vmatpush2.bf16.msra.mxu0 0
        %1378 = vmatprep.subr.bf16.mxu0 0
        %1379 = vmatpush2.bf16.msra.mxu0 0
        %1380 = vmatprep.subr.bf16.mxu0 0
        %1381 = vmatpush2.bf16.msra.mxu0 0
        %1382 = vmatprep.subr.bf16.mxu0 0
        %1383 = vmatpush2.bf16.msra.mxu0 0
        %1384 = vmatprep.subr.bf16.mxu0 0
        %1385 = vmatpush2.bf16.msra.mxu0 0
        %1386 = vmatprep.subr.bf16.mxu0 0
        %1387 = vmatpush2.bf16.msra.mxu0 0
        %1388 = vmatprep.mubr.bf16.mxu0 0
        %1389 = vmatmul.mubr.bf16.gmra.mxu0 %v1336
        %v1390 = vpop.f32.mrf.mxu0
        %v1391 = vadd.f32 0.0, %v1390
        %v1392 = vpop.f32.mrf.mxu0
        %v1393 = vadd.f32 0.0, %v1392
        %v1394 = vpop.f32.mrf.mxu0
        %v1395 = vadd.f32 0.0, %v1394
        %v1396 = vpop.f32.mrf.mxu0
        %v1397 = vadd.f32 0.0, %v1396
        %1398 = vmatprep.mubr.bf16.mxu0 0
        %1399 = vmatmul.mubr.bf16.gmra.mxu0 %v1339
        %v1400 = vpop.f32.mrf.mxu0
        %v1401 = vadd.f32 0.0, %v1400
        %v1402 = vpop.f32.mrf.mxu0
        %v1403 = vadd.f32 0.0, %v1402
        %v1404 = vpop.f32.mrf.mxu0
        %v1405 = vadd.f32 0.0, %v1404
        %v1406 = vpop.f32.mrf.mxu0
        %v1407 = vadd.f32 0.0, %v1406
        %1408 = vmatprep.mubr.bf16.mxu0 0
        %1409 = vmatmul.mubr.bf16.gmra.mxu0 %v1342
        %v1410 = vpop.f32.mrf.mxu0
        %v1411 = vadd.f32 0.0, %v1410
        %v1412 = vpop.f32.mrf.mxu0
        %v1413 = vadd.f32 0.0, %v1412
        %v1414 = vpop.f32.mrf.mxu0
        %v1415 = vpop.f32.mrf.mxu0
        %1416 = vdwg.mxu0
        %1417 = vmatprep.subr.bf16.mxu0 0
        %1418 = vmatpush1.bf16.msra.mxu0 0
        %1419 = vmatprep.subr.bf16.mxu0 0
        %1420 = vmatpush1.bf16.msra.mxu0 0
        %1421 = vmatprep.subr.bf16.mxu0 0
        %1422 = vmatpush1.bf16.msra.mxu0 0
        %1423 = vmatprep.subr.bf16.mxu0 0
        %1424 = vmatpush1.bf16.msra.mxu0 0
        %1425 = vmatprep.subr.bf16.mxu0 0
        %1426 = vmatpush1.bf16.msra.mxu0 0
        %1427 = vmatprep.subr.bf16.mxu0 %v1354
        %1428 = vmatpush1.bf16.msra.mxu0 %v1351
        %1429 = vmatprep.subr.bf16.mxu0 %v1317
        %1430 = vmatpush1.bf16.msra.mxu0 %v1316
        %1431 = vmatprep.subr.bf16.mxu0 %v1313
        %1432 = vmatpush1.bf16.msra.mxu0 %v1312
        %1433 = vmatprep.subr.bf16.mxu0 0
        %1434 = vmatpush2.bf16.msra.mxu0 0
        %1435 = vmatprep.subr.bf16.mxu0 0
        %1436 = vmatpush2.bf16.msra.mxu0 0
        %1437 = vmatprep.subr.bf16.mxu0 0
        %1438 = vmatpush2.bf16.msra.mxu0 0
        %1439 = vmatprep.subr.bf16.mxu0 0
        %1440 = vmatpush2.bf16.msra.mxu0 0
        %1441 = vmatprep.subr.bf16.mxu0 0
        %1442 = vmatpush2.bf16.msra.mxu0 0
        %1443 = vmatprep.subr.bf16.mxu0 0
        %1444 = vmatpush2.bf16.msra.mxu0 0
        %1445 = vmatprep.subr.bf16.mxu0 0
        %1446 = vmatpush2.bf16.msra.mxu0 0
        %1447 = vmatprep.subr.bf16.mxu0 0
        %1448 = vmatpush2.bf16.msra.mxu0 0
        %1449 = vmatprep.mubr.bf16.mxu0 0
        %1450 = vmatmul.mubr.bf16.gmra.mxu0 %v1336
        %v1451 = vpop.f32.mrf.mxu0
        %v1452 = vadd.f32 0.0, %v1451
        %v1453 = vpop.f32.mrf.mxu0
        %v1454 = vadd.f32 0.0, %v1453
        %v1455 = vpop.f32.mrf.mxu0
        %v1456 = vadd.f32 0.0, %v1455
        %v1457 = vpop.f32.mrf.mxu0
        %v1458 = vadd.f32 0.0, %v1457
        %1459 = vmatprep.mubr.bf16.mxu0 0
        %1460 = vmatmul.mubr.bf16.gmra.mxu0 %v1339
        %v1461 = vpop.f32.mrf.mxu0
        %v1462 = vadd.f32 0.0, %v1461
        %v1463 = vpop.f32.mrf.mxu0
        %v1464 = vadd.f32 0.0, %v1463
        %v1465 = vpop.f32.mrf.mxu0
        %v1466 = vadd.f32 0.0, %v1465
        %v1467 = vpop.f32.mrf.mxu0
        %v1468 = vadd.f32 0.0, %v1467
        %1469 = vmatprep.mubr.bf16.mxu0 0
        %1470 = vmatmul.mubr.bf16.gmra.mxu0 %v1342
        %v1471 = vpop.f32.mrf.mxu0
        %v1472 = vadd.f32 0.0, %v1471
        %v1473 = vpop.f32.mrf.mxu0
        %v1474 = vadd.f32 0.0, %v1473
        %v1475 = vpop.f32.mrf.mxu0
        %v1476 = vpop.f32.mrf.mxu0
        %1477 = vdwg.mxu0
        %v1478 = vmax.f32 %v1391, 0.0
        %v1479 = vmax.f32 %v1393, 0.0
        %v1480 = vmax.f32 %v1452, 0.0
        %v1481 = vmax.f32 %v1454, 0.0
        %v1482 = vmax.f32 %v1395, 0.0
        %v1483 = vmax.f32 %v1397, 0.0
        %v1484 = vmax.f32 %v1456, 0.0
        %v1485 = vmax.f32 %v1458, 0.0
        %v1486 = vmax.f32 %v1401, 0.0
        %v1487 = vmax.f32 %v1403, 0.0
        %v1488 = vmax.f32 %v1462, 0.0
        %v1489 = vmax.f32 %v1464, 0.0
        %v1490 = vmax.f32 %v1405, 0.0
        %v1491 = vmax.f32 %v1407, 0.0
        %v1492 = vmax.f32 %v1466, 0.0
        %v1493 = vmax.f32 %v1468, 0.0
        %v1494 = vmax.f32 %v1411, 0.0
        %v1495 = vmax.f32 %v1413, 0.0
        %v1496 = vmax.f32 %v1472, 0.0
        %v1497 = vmax.f32 %v1474, 0.0
        %s1498 = scalar_lea.vmem %s1, 80
        %v1499 = vld [vmem:[%s1498] sm:$0xf]
        %v1500 = vld [vmem:[%s1498 + $0x4] sm:$0xf]
        %v1501 = vld [vmem:[%s1498 + $0x8] sm:$0xf]
        %v1502 = vld [vmem:[%s1498 + $0xc] sm:$0xf]
        %v1503 = vld [vmem:[%s1498 + $0x10] sm:$0xf]
        %v1504 = vpack.c.bf16 %v1482, %v1478
        %v1505 = vpack.c.bf16 %v1483, %v1479
        %v1506 = vpack.c.bf16 %v1484, %v1480
        %v1507 = vpack.c.bf16 %v1485, %v1481
        %v1508 = vpack.c.bf16 %v1490, %v1486
        %v1509 = vpack.c.bf16 %v1491, %v1487
        %v1510 = vpack.c.bf16 %v1492, %v1488
        %v1511 = vpack.c.bf16 %v1493, %v1489
        %v1512 = vpack.c.bf16 %v1494, %v1494
        %v1513 = vpack.c.bf16 %v1495, %v1495
        %v1514 = vpack.c.bf16 %v1496, %v1496
        %v1515 = vpack.c.bf16 %v1497, %v1497
        %v1521 = vunpack.c.l.b16 %v1499
        %v1522 = vunpack.c.l.b16 %v1500
        %v1523 = vunpack.c.l.b16 %v1501
        %v1524 = vunpack.c.l.b16 %v1502
        %v1525 = vunpack.c.l.b16 %v1503
        %v1526 = vpack.c.b16 %v1522, %v1521
        %v1527 = vpack.c.b16 %v1524, %v1523
        %v1528 = vpack.c.b16 %v1525, %v1525
        %v1530 = vsel %vm253, %v1526, 0
        %v1533 = vsel %vm253, %v1527, 0
        %v1536 = vsel %vm253, %v1528, 0
        %v1539 = vsel %vm263, %v1512, 0
        %v1542 = vsel %vm263, %v1513, 0
        %v1545 = vsel %vm263, %v1514, 0
        %v1548 = vsel %vm263, %v1515, 0
        %1550 = vmatprep.subr.bf16.mxu0 0
        %1551 = vmatpush1.bf16.msra.mxu0 0
        %1552 = vmatprep.subr.bf16.mxu0 0
        %1553 = vmatpush1.bf16.msra.mxu0 0
        %1554 = vmatprep.subr.bf16.mxu0 0
        %1555 = vmatpush1.bf16.msra.mxu0 0
        %1556 = vmatprep.subr.bf16.mxu0 0
        %1557 = vmatpush1.bf16.msra.mxu0 0
        %1558 = vmatprep.subr.bf16.mxu0 0
        %1559 = vmatpush1.bf16.msra.mxu0 0
        %1560 = vmatprep.subr.bf16.mxu0 %v1542
        %1561 = vmatpush1.bf16.msra.mxu0 %v1539
        %1562 = vmatprep.subr.bf16.mxu0 %v1509
        %1563 = vmatpush1.bf16.msra.mxu0 %v1508
        %1564 = vmatprep.subr.bf16.mxu0 %v1505
        %1565 = vmatpush1.bf16.msra.mxu0 %v1504
        %1566 = vmatprep.subr.bf16.mxu0 0
        %1567 = vmatpush2.bf16.msra.mxu0 0
        %1568 = vmatprep.subr.bf16.mxu0 0
        %1569 = vmatpush2.bf16.msra.mxu0 0
        %1570 = vmatprep.subr.bf16.mxu0 0
        %1571 = vmatpush2.bf16.msra.mxu0 0
        %1572 = vmatprep.subr.bf16.mxu0 0
        %1573 = vmatpush2.bf16.msra.mxu0 0
        %1574 = vmatprep.subr.bf16.mxu0 0
        %1575 = vmatpush2.bf16.msra.mxu0 0
        %1576 = vmatprep.subr.bf16.mxu0 0
        %1577 = vmatpush2.bf16.msra.mxu0 0
        %1578 = vmatprep.subr.bf16.mxu0 0
        %1579 = vmatpush2.bf16.msra.mxu0 0
        %1580 = vmatprep.subr.bf16.mxu0 0
        %1581 = vmatpush2.bf16.msra.mxu0 0
        %1582 = vmatprep.mubr.bf16.mxu0 0
        %1583 = vmatmul.mubr.bf16.gmra.mxu0 %v1530
        %v1584 = vpop.f32.mrf.mxu0
        %v1585 = vadd.f32 0.0, %v1584
        %v1586 = vpop.f32.mrf.mxu0
        %v1587 = vadd.f32 0.0, %v1586
        %v1588 = vpop.f32.mrf.mxu0
        %v1589 = vadd.f32 0.0, %v1588
        %v1590 = vpop.f32.mrf.mxu0
        %v1591 = vadd.f32 0.0, %v1590
        %1592 = vmatprep.mubr.bf16.mxu0 0
        %1593 = vmatmul.mubr.bf16.gmra.mxu0 %v1533
        %v1594 = vpop.f32.mrf.mxu0
        %v1595 = vadd.f32 0.0, %v1594
        %v1596 = vpop.f32.mrf.mxu0
        %v1597 = vadd.f32 0.0, %v1596
        %v1598 = vpop.f32.mrf.mxu0
        %v1599 = vadd.f32 0.0, %v1598
        %v1600 = vpop.f32.mrf.mxu0
        %v1601 = vadd.f32 0.0, %v1600
        %1602 = vmatprep.mubr.bf16.mxu0 0
        %1603 = vmatmul.mubr.bf16.gmra.mxu0 %v1536
        %v1604 = vpop.f32.mrf.mxu0
        %v1605 = vadd.f32 0.0, %v1604
        %v1606 = vpop.f32.mrf.mxu0
        %v1607 = vadd.f32 0.0, %v1606
        %v1608 = vpop.f32.mrf.mxu0
        %v1609 = vpop.f32.mrf.mxu0
        %1610 = vdwg.mxu0
        %1611 = vmatprep.subr.bf16.mxu0 0
        %1612 = vmatpush1.bf16.msra.mxu0 0
        %1613 = vmatprep.subr.bf16.mxu0 0
        %1614 = vmatpush1.bf16.msra.mxu0 0
        %1615 = vmatprep.subr.bf16.mxu0 0
        %1616 = vmatpush1.bf16.msra.mxu0 0
        %1617 = vmatprep.subr.bf16.mxu0 0
        %1618 = vmatpush1.bf16.msra.mxu0 0
        %1619 = vmatprep.subr.bf16.mxu0 0
        %1620 = vmatpush1.bf16.msra.mxu0 0
        %1621 = vmatprep.subr.bf16.mxu0 %v1548
        %1622 = vmatpush1.bf16.msra.mxu0 %v1545
        %1623 = vmatprep.subr.bf16.mxu0 %v1511
        %1624 = vmatpush1.bf16.msra.mxu0 %v1510
        %1625 = vmatprep.subr.bf16.mxu0 %v1507
        %1626 = vmatpush1.bf16.msra.mxu0 %v1506
        %1627 = vmatprep.subr.bf16.mxu0 0
        %1628 = vmatpush2.bf16.msra.mxu0 0
        %1629 = vmatprep.subr.bf16.mxu0 0
        %1630 = vmatpush2.bf16.msra.mxu0 0
        %1631 = vmatprep.subr.bf16.mxu0 0
        %1632 = vmatpush2.bf16.msra.mxu0 0
        %1633 = vmatprep.subr.bf16.mxu0 0
        %1634 = vmatpush2.bf16.msra.mxu0 0
        %1635 = vmatprep.subr.bf16.mxu0 0
        %1636 = vmatpush2.bf16.msra.mxu0 0
        %1637 = vmatprep.subr.bf16.mxu0 0
        %1638 = vmatpush2.bf16.msra.mxu0 0
        %1639 = vmatprep.subr.bf16.mxu0 0
        %1640 = vmatpush2.bf16.msra.mxu0 0
        %1641 = vmatprep.subr.bf16.mxu0 0
        %1642 = vmatpush2.bf16.msra.mxu0 0
        %1643 = vmatprep.mubr.bf16.mxu0 0
        %1644 = vmatmul.mubr.bf16.gmra.mxu0 %v1530
        %v1645 = vpop.f32.mrf.mxu0
        %v1646 = vadd.f32 0.0, %v1645
        %v1647 = vpop.f32.mrf.mxu0
        %v1648 = vadd.f32 0.0, %v1647
        %v1649 = vpop.f32.mrf.mxu0
        %v1650 = vadd.f32 0.0, %v1649
        %v1651 = vpop.f32.mrf.mxu0
        %v1652 = vadd.f32 0.0, %v1651
        %1653 = vmatprep.mubr.bf16.mxu0 0
        %1654 = vmatmul.mubr.bf16.gmra.mxu0 %v1533
        %v1655 = vpop.f32.mrf.mxu0
        %v1656 = vadd.f32 0.0, %v1655
        %v1657 = vpop.f32.mrf.mxu0
        %v1658 = vadd.f32 0.0, %v1657
        %v1659 = vpop.f32.mrf.mxu0
        %v1660 = vadd.f32 0.0, %v1659
        %v1661 = vpop.f32.mrf.mxu0
        %v1662 = vadd.f32 0.0, %v1661
        %1663 = vmatprep.mubr.bf16.mxu0 0
        %1664 = vmatmul.mubr.bf16.gmra.mxu0 %v1536
        %v1665 = vpop.f32.mrf.mxu0
        %v1666 = vadd.f32 0.0, %v1665
        %v1667 = vpop.f32.mrf.mxu0
        %v1668 = vadd.f32 0.0, %v1667
        %v1669 = vpop.f32.mrf.mxu0
        %v1670 = vpop.f32.mrf.mxu0
        %1671 = vdwg.mxu0
        %v1672 = vmax.f32 %v1585, 0.0
        %v1673 = vmax.f32 %v1587, 0.0
        %v1674 = vmax.f32 %v1646, 0.0
        %v1675 = vmax.f32 %v1648, 0.0
        %v1676 = vmax.f32 %v1589, 0.0
        %v1677 = vmax.f32 %v1591, 0.0
        %v1678 = vmax.f32 %v1650, 0.0
        %v1679 = vmax.f32 %v1652, 0.0
        %v1680 = vmax.f32 %v1595, 0.0
        %v1681 = vmax.f32 %v1597, 0.0
        %v1682 = vmax.f32 %v1656, 0.0
        %v1683 = vmax.f32 %v1658, 0.0
        %v1684 = vmax.f32 %v1599, 0.0
        %v1685 = vmax.f32 %v1601, 0.0
        %v1686 = vmax.f32 %v1660, 0.0
        %v1687 = vmax.f32 %v1662, 0.0
        %v1688 = vmax.f32 %v1605, 0.0
        %v1689 = vmax.f32 %v1607, 0.0
        %v1690 = vmax.f32 %v1666, 0.0
        %v1691 = vmax.f32 %v1668, 0.0
        %s1692 = scalar_lea.vmem %s1, 100
        %v1693 = vld [vmem:[%s1692] sm:$0xf]
        %v1694 = vld [vmem:[%s1692 + $0x4] sm:$0xf]
        %v1695 = vld [vmem:[%s1692 + $0x8] sm:$0xf]
        %v1696 = vld [vmem:[%s1692 + $0xc] sm:$0xf]
        %v1697 = vld [vmem:[%s1692 + $0x10] sm:$0xf]
        %v1698 = vpack.c.bf16 %v1676, %v1672
        %v1699 = vpack.c.bf16 %v1677, %v1673
        %v1700 = vpack.c.bf16 %v1678, %v1674
        %v1701 = vpack.c.bf16 %v1679, %v1675
        %v1702 = vpack.c.bf16 %v1684, %v1680
        %v1703 = vpack.c.bf16 %v1685, %v1681
        %v1704 = vpack.c.bf16 %v1686, %v1682
        %v1705 = vpack.c.bf16 %v1687, %v1683
        %v1706 = vpack.c.bf16 %v1688, %v1688
        %v1707 = vpack.c.bf16 %v1689, %v1689
        %v1708 = vpack.c.bf16 %v1690, %v1690
        %v1709 = vpack.c.bf16 %v1691, %v1691
        %v1715 = vunpack.c.l.b16 %v1693
        %v1716 = vunpack.c.l.b16 %v1694
        %v1717 = vunpack.c.l.b16 %v1695
        %v1718 = vunpack.c.l.b16 %v1696
        %v1719 = vunpack.c.l.b16 %v1697
        %v1720 = vpack.c.b16 %v1716, %v1715
        %v1721 = vpack.c.b16 %v1718, %v1717
        %v1722 = vpack.c.b16 %v1719, %v1719
        %v1724 = vsel %vm253, %v1720, 0
        %v1727 = vsel %vm253, %v1721, 0
        %v1730 = vsel %vm253, %v1722, 0
        %v1733 = vsel %vm263, %v1706, 0
        %v1736 = vsel %vm263, %v1707, 0
        %v1739 = vsel %vm263, %v1708, 0
        %v1742 = vsel %vm263, %v1709, 0
        %1744 = vmatprep.subr.bf16.mxu0 0
        %1745 = vmatpush1.bf16.msra.mxu0 0
        %1746 = vmatprep.subr.bf16.mxu0 0
        %1747 = vmatpush1.bf16.msra.mxu0 0
        %1748 = vmatprep.subr.bf16.mxu0 0
        %1749 = vmatpush1.bf16.msra.mxu0 0
        %1750 = vmatprep.subr.bf16.mxu0 0
        %1751 = vmatpush1.bf16.msra.mxu0 0
        %1752 = vmatprep.subr.bf16.mxu0 0
        %1753 = vmatpush1.bf16.msra.mxu0 0
        %1754 = vmatprep.subr.bf16.mxu0 %v1736
        %1755 = vmatpush1.bf16.msra.mxu0 %v1733
        %1756 = vmatprep.subr.bf16.mxu0 %v1703
        %1757 = vmatpush1.bf16.msra.mxu0 %v1702
        %1758 = vmatprep.subr.bf16.mxu0 %v1699
        %1759 = vmatpush1.bf16.msra.mxu0 %v1698
        %1760 = vmatprep.subr.bf16.mxu0 0
        %1761 = vmatpush2.bf16.msra.mxu0 0
        %1762 = vmatprep.subr.bf16.mxu0 0
        %1763 = vmatpush2.bf16.msra.mxu0 0
        %1764 = vmatprep.subr.bf16.mxu0 0
        %1765 = vmatpush2.bf16.msra.mxu0 0
        %1766 = vmatprep.subr.bf16.mxu0 0
        %1767 = vmatpush2.bf16.msra.mxu0 0
        %1768 = vmatprep.subr.bf16.mxu0 0
        %1769 = vmatpush2.bf16.msra.mxu0 0
        %1770 = vmatprep.subr.bf16.mxu0 0
        %1771 = vmatpush2.bf16.msra.mxu0 0
        %1772 = vmatprep.subr.bf16.mxu0 0
        %1773 = vmatpush2.bf16.msra.mxu0 0
        %1774 = vmatprep.subr.bf16.mxu0 0
        %1775 = vmatpush2.bf16.msra.mxu0 0
        %1776 = vmatprep.mubr.bf16.mxu0 0
        %1777 = vmatmul.mubr.bf16.gmra.mxu0 %v1724
        %v1778 = vpop.f32.mrf.mxu0
        %v1779 = vpop.f32.mrf.mxu0
        %v1780 = vpop.f32.mrf.mxu0
        %v1781 = vpop.f32.mrf.mxu0
        %1782 = vmatprep.mubr.bf16.mxu0 0
        %1783 = vmatmul.mubr.bf16.gmra.mxu0 %v1727
        %v1784 = vpop.f32.mrf.mxu0
        %v1785 = vadd.f32 0.0, %v1784
        %v1786 = vpop.f32.mrf.mxu0
        %v1787 = vadd.f32 0.0, %v1786
        %v1788 = vpop.f32.mrf.mxu0
        %v1789 = vpop.f32.mrf.mxu0
        %1790 = vmatprep.mubr.bf16.mxu0 0
        %1791 = vmatmul.mubr.bf16.gmra.mxu0 %v1730
        %v1792 = vpop.f32.mrf.mxu0
        %v1793 = vpop.f32.mrf.mxu0
        %v1794 = vpop.f32.mrf.mxu0
        %v1795 = vpop.f32.mrf.mxu0
        %1796 = vdwg.mxu0
        %1797 = vmatprep.subr.bf16.mxu0 0
        %1798 = vmatpush1.bf16.msra.mxu0 0
        %1799 = vmatprep.subr.bf16.mxu0 0
        %1800 = vmatpush1.bf16.msra.mxu0 0
        %1801 = vmatprep.subr.bf16.mxu0 0
        %1802 = vmatpush1.bf16.msra.mxu0 0
        %1803 = vmatprep.subr.bf16.mxu0 0
        %1804 = vmatpush1.bf16.msra.mxu0 0
        %1805 = vmatprep.subr.bf16.mxu0 0
        %1806 = vmatpush1.bf16.msra.mxu0 0
        %1807 = vmatprep.subr.bf16.mxu0 %v1742
        %1808 = vmatpush1.bf16.msra.mxu0 %v1739
        %1809 = vmatprep.subr.bf16.mxu0 %v1705
        %1810 = vmatpush1.bf16.msra.mxu0 %v1704
        %1811 = vmatprep.subr.bf16.mxu0 %v1701
        %1812 = vmatpush1.bf16.msra.mxu0 %v1700
        %1813 = vmatprep.subr.bf16.mxu0 0
        %1814 = vmatpush2.bf16.msra.mxu0 0
        %1815 = vmatprep.subr.bf16.mxu0 0
        %1816 = vmatpush2.bf16.msra.mxu0 0
        %1817 = vmatprep.subr.bf16.mxu0 0
        %1818 = vmatpush2.bf16.msra.mxu0 0
        %1819 = vmatprep.subr.bf16.mxu0 0
        %1820 = vmatpush2.bf16.msra.mxu0 0
        %1821 = vmatprep.subr.bf16.mxu0 0
        %1822 = vmatpush2.bf16.msra.mxu0 0
        %1823 = vmatprep.subr.bf16.mxu0 0
        %1824 = vmatpush2.bf16.msra.mxu0 0
        %1825 = vmatprep.subr.bf16.mxu0 0
        %1826 = vmatpush2.bf16.msra.mxu0 0
        %1827 = vmatprep.subr.bf16.mxu0 0
        %1828 = vmatpush2.bf16.msra.mxu0 0
        %1829 = vmatprep.mubr.bf16.mxu0 0
        %1830 = vmatmul.mubr.bf16.gmra.mxu0 %v1724
        %v1831 = vpop.f32.mrf.mxu0
        %v1832 = vpop.f32.mrf.mxu0
        %v1833 = vpop.f32.mrf.mxu0
        %v1834 = vpop.f32.mrf.mxu0
        %1835 = vmatprep.mubr.bf16.mxu0 0
        %1836 = vmatmul.mubr.bf16.gmra.mxu0 %v1727
        %v1837 = vpop.f32.mrf.mxu0
        %v1838 = vadd.f32 0.0, %v1837
        %v1839 = vpop.f32.mrf.mxu0
        %v1840 = vadd.f32 0.0, %v1839
        %v1841 = vpop.f32.mrf.mxu0
        %v1842 = vpop.f32.mrf.mxu0
        %1843 = vmatprep.mubr.bf16.mxu0 0
        %1844 = vmatmul.mubr.bf16.gmra.mxu0 %v1730
        %v1845 = vpop.f32.mrf.mxu0
        %v1846 = vpop.f32.mrf.mxu0
        %v1847 = vpop.f32.mrf.mxu0
        %v1848 = vpop.f32.mrf.mxu0
        %1849 = vdwg.mxu0
        %v1850 = vsub.f32 %v1292, %v1785
        %v1851 = vsub.f32 %v1293, %v1787
        %v1852 = vsub.f32 %v1294, %v1838
        %v1853 = vsub.f32 %v1295, %v1840
        %v1854 = vsub.f32 0.0, %v1850
        %v1855 = vsub.f32 0.0, %v1851
        %v1856 = vsub.f32 0.0, %v1852
        %v1857 = vsub.f32 0.0, %v1853
        %v1862 = vcombine.low %v1854, %v1855
        %v1863 = vcombine.low %v1856, %v1857
        %v1865 = vunpack.c.l.s4 1966171168
        %v1866 = vunpack.c.0.s8 %v1865
        %v1867 = vlaneseq
        %v1868 = vshrl.u32 %v1867, 7
        %v1869 = vsub.s32 %v1866, %v1868
        %v1870 = vrot.slane %v1862, %v1869
        %v1872 = vunpack.c.l.s4 1966171168
        %v1873 = vunpack.c.0.s8 %v1872
        %v1874 = vlaneseq
        %v1875 = vshrl.u32 %v1874, 7
        %v1876 = vsub.s32 %v1873, %v1875
        %v1877 = vrot.slane %v1863, %v1876
        %v1878 = vcombine.low %v1870, %v1877
        %v1880 = vunpack.c.l.s4 1966171168
        %v1881 = vunpack.c.0.s8 %v1880
        %v1882 = vlaneseq
        %v1883 = vshrl.u32 %v1882, 7
        %v1884 = vsub.s32 %v1881, %v1883
        %v1885 = vrot.slane %v1878, %v1884
        %v1887 = vlaneseq
        %vm1888 = vcmp.ge.s32.totalorder %v1887, 0
        %vm1889 = vcmp.lt.s32.totalorder %v1887, 512
        %vm1890 = vmand %vm1888, %vm1889
        %1891 = vst.msk [vmem:[%s199] sm:$0xf] %vm1890, %v1885
        %s1892 = sand.u32 %s71, 1
        %s1893 = scalar_lea.sflag [#allocation4], %s1892
        %s1894 = sand.u32 %s71, 1
        %s1895 = smul.addr %s1894, 4
        %s1896 = scalar_lea.vmem [#allocation3], %s1895
        // Predicated region
        $region52: #{_forward_impl.1} parent=46 // pred_check
          %p1897 = pneg %p81
        $region53: #{_forward_impl.1} parent=46 // pred_check_branch
          %1899 = sbr.rel (%p1897) target = $region55
        $region54: #{_forward_impl.1} parent=46 // pred_region
          %s1900 = smul.u32 4, %s16
          %s1902 = ssub.s32 64, 64
          %1903 = vsyncadd %s1893, %s1902
          %s1904 = smul.addr %s1900, 16
          %s1905 = scalar_lea.hbm %s2, %s1904
          %s1907 = sshll.u32 %s1896, 4
          %s1908 = int_to_ptr.vmem [resolvable:$true] %s1907
          %1910 = dma.vmem_to_hbm [thread:$0]  %s1908, 64, %s1905, %s1893
        $region55: #{_forward_impl.1} parent=46 // pred_fallthru
          _
      $region47: #{_forward_impl.1} parent=5 // pred_fallthru
        _
      %p1911 = scmp.le.s32.totalorder 2, %s11
      // Predicated region
      $region56: #{_forward_impl.1} parent=5 // pred_check
        %p1912 = pneg %p1911
      $region57: #{_forward_impl.1} parent=5 // pred_check_branch
        %1914 = sbr.rel (%p1912) target = $region59
      $region58: #{_forward_impl.1} parent=5 // pred_region
        %s1915 = ssub.s32 %s11, 2
        // Predicated region
        $region60: #{_forward_impl.1} parent=58 // pred_check
          %p1916 = pneg %p87
        $region61: #{_forward_impl.1} parent=58 // pred_check_branch
          %1918 = sbr.rel (%p1916) target = $region63
        $region62: #{_forward_impl.1} parent=58 // pred_region
          %s1919 = sand.u32 %s72, 1
          %s1920 = scalar_lea.sflag [#allocation4], %s1919
          %s1921 = sand.u32 %s72, 1
          %s1922 = smul.addr %s1921, 4
          %s1923 = scalar_lea.vmem [#allocation3], %s1922
          %1924 = dma.done %s1920, 64
        $region63: #{_forward_impl.1} parent=58 // pred_fallthru
          _
      $region59: #{_forward_impl.1} parent=5 // pred_fallthru
        _
    $region6: #{_forward_impl.1} parent=1 // loop_footer
      %s15 = sadd.s32 1, %s11
    $region7: #{_forward_impl.1} parent=1 // loop_footer_branch
      %10 = sbr.rel target = $region3
    $region8: #{_forward_impl.1} parent=1 // loop_exit
      _
    %1925 = vsyncpa [#allocation4], 1
    %s1926 = scalar_lea.sflag [#allocation4], 1
    %1927 = vsyncpa %s1926, 1

</llo_original>
